<compile_context>
chip_gen: v7x
topology: tpu7x:2x2x1
jax: 0.10.0
libtpu: 0.0.40
codegen_flags: <defaults>
</compile_context>

<pallas_src>
import jax
import jax.numpy as jnp
from jax.experimental import pallas as pl
from jax.experimental.pallas import tpu as pltpu


# ---------------------------------------------------------------------------
# Kernel
# ---------------------------------------------------------------------------
def _sortnet_kernel(q_ref, k_ref, pool_ref, pq_ref, pk_ref, out_ref):
    # q_ref / k_ref : (BH_TILE, seq, dim)     -- per-step tile (input dtype)
    # pool_ref      : (buckets, seq)          -- grid-resident 0/1 bucket mask
    # pq_ref/pk_ref : (heads, buckets, dim)   -- grid-resident, f32
    # out_ref       : (BH_TILE, buckets, buckets)
    bh_tile, seq, dim = q_ref.shape
    heads, buckets, _ = pq_ref.shape
    reps = bh_tile // heads
    inv_blen = jnp.float32(1.0 / (seq // buckets))

    # Bucket sums as one batched MXU matmul per side against the 0/1 bucket-
    # membership matrix (input-dtype operands, f32 accumulation).  This avoids
    # materializing a full-tile f32 upcast of bf16 inputs in VMEM and moves the
    # reduction onto the otherwise-idle MXU.  The 1/bucket_len mean scale is
    # folded into a single multiply on the (much smaller) bucket sums.
    poolb = jnp.broadcast_to(pool_ref[...], (bh_tile, buckets, seq))
    sq = jnp.einsum("bgt,btd->bgd", poolb, q_ref[...],
                    preferred_element_type=jnp.float32) * inv_blen
    sk = jnp.einsum("bgt,btd->bgd", poolb, k_ref[...],
                    preferred_element_type=jnp.float32) * inv_blen

    # Positional embeddings: the batch-heads axis is (batch, heads)-flattened
    # (head = row % heads) and the tile start is a multiple of heads, so the
    # (heads, buckets, dim) block broadcasts over the repeat axis.
    pq = pq_ref[...].astype(jnp.float32)
    pk = pk_ref[...].astype(jnp.float32)
    if reps == 1:
        sq = sq + pq
        sk = sk + pk
    else:
        sq = (sq.reshape(reps, heads, buckets, dim) + pq[None]).reshape(
            bh_tile, buckets, dim)
        sk = (sk.reshape(reps, heads, buckets, dim) + pk[None]).reshape(
            bh_tile, buckets, dim)

    # Batched scores on the MXU: R[b] = sq[b] @ sk[b]^T.  Operands stay f32:
    # the kernel is mem/overhead bound so the MXU format is off the critical
    # path, and f32 preserves reference accuracy for f32 callers.
    r = jnp.einsum("bie,bje->bij", sq, sk, preferred_element_type=jnp.float32)

    # Softmax over the last dim (non_permutative branch); exact normalization
    # (the precise divide is hidden behind the DMAs, rows sum to 1).
    r = r - jnp.max(r, axis=-1, keepdims=True)
    e = jnp.exp(r)
    out_ref[...] = (e / jnp.sum(e, axis=-1, keepdims=True)).astype(out_ref.dtype)


# ---------------------------------------------------------------------------
# VMEM footprint model & tile selection
# ---------------------------------------------------------------------------
def _round_up(x, m):
    return ((x + m - 1) // m) * m


def _tiled_vmem_bytes(shape, itemsize):
    """Bytes one buffer of `shape` occupies in VMEM under Mosaic's tiled
    layout: last dim lane-padded to 128, second-to-last sublane-padded to
    8 * (4 // itemsize) (8 for f32, 16 for bf16, 32 for int8)."""
    shape = tuple(int(s) for s in shape)
    if len(shape) < 2:
        shape = (1,) * (2 - len(shape)) + shape
    sub_tile = 8 * max(1, 4 // itemsize)
    lane = _round_up(shape[-1], 128)
    sub = _round_up(shape[-2], sub_tile)
    lead = 1
    for s in shape[:-2]:
        lead *= s
    return lead * sub * lane * itemsize


def _pick_bh_tile(bh, heads, step_bytes, budget, prefer_two_steps):
    """Largest bh-tile (multiple of heads, divisor of bh) within the budget.

    prefer_two_steps=True (v7x) keeps >=2 grid steps so the CORE_PARALLEL bh
    axis can be sharded across both TensorCores."""
    cands = [t for t in range(heads, bh + 1, heads)
             if bh % t == 0 and step_bytes(t) <= budget]
    if not cands:
        return heads
    if prefer_two_steps:
        multi = [t for t in cands if bh // t >= 2]
        if multi:
            return max(multi)
    return max(cands)


def _tpu_generation():
    """Best-effort TPU generation (4/5/6/7) from device_kind, else None."""
    try:
        kind = jax.devices()[0].device_kind.lower()
    except Exception:
        return None
    if "tpu" not in kind:
        return None
    for gen in (7, 6, 5, 4):
        if f"v{gen}" in kind or f"tpu{gen}" in kind:
            return gen
    return None


# ---------------------------------------------------------------------------
# Wrapper
# ---------------------------------------------------------------------------
def attention_sort_net(q, k, q_pos_emb, k_pos_emb, *, heads, buckets,
                       bh_tile=None, vmem_budget_bytes=None):
    """Pallas AttentionSortNet.forward (non_permutative=True, n_sortcut=0).

    q, k: (bh, seq, dim) with bh = batch*heads flattened so that row r belongs
    to head r % heads (this matches the PyTorch expand_batch_and_merge_head).
    q_pos_emb / k_pos_emb: (1, heads, buckets, dim) parameters.
    """
    bh, seq, dim = q.shape
    assert k.shape == q.shape
    assert bh % heads == 0, "batch-heads axis must be a multiple of heads"
    assert seq % buckets == 0, "sequence length must divide into buckets"
    blen = seq // buckets
    itemsize = q.dtype.itemsize

    # --- Per-generation VMEM budget / grid policy ---------------------------
    gen = _tpu_generation()
    if gen is not None and gen >= 7:
        # v7x: 64 MiB physical VMEM, 2 TensorCores -> keep >=2 steps and shard
        # the bh axis across cores with CORE_PARALLEL.
        default_budget, vmem_limit = 40 << 20, 48 << 20
        prefer_two_steps, want_core_parallel = True, True
    elif gen is not None:
        # v4/v5e/v6e: single TensorCore, 128 MiB VMEM -> one maximal tile; an
        # extra grid step is pure ~0.35us overhead with no parallelism payoff.
        default_budget, vmem_limit = 80 << 20, 100 << 20
        prefer_two_steps, want_core_parallel = False, False
    else:
        # Unknown backend: conservative (v7x-sized) budget, generic semantics.
        default_budget, vmem_limit = 32 << 20, 48 << 20
        prefer_two_steps, want_core_parallel = False, False
    if vmem_budget_bytes is None:
        vmem_budget_bytes = default_budget

    # --- VMEM footprint model (accounts for (8,128) lane/sublane padding) ---
    def step_bytes(tile):
        b = 0
        # q, k input blocks, double-buffered by the pipeline.
        b += 2 * 2 * _tiled_vmem_bytes((tile, seq, dim), itemsize)
        # output block, double-buffered.
        b += 2 * _tiled_vmem_bytes((tile, buckets, buckets), itemsize)
        # grid-resident blocks (constant index map); count both buffers.
        b += 2 * _tiled_vmem_bytes((buckets, seq), itemsize)
        b += 2 * 2 * _tiled_vmem_bytes((heads, buckets, dim), 4)
        # in-kernel temporaries: broadcast pool operand, f32 sq/sk,
        # f32 scores + exp + normalized result.
        b += _tiled_vmem_bytes((tile, buckets, seq), itemsize)
        b += 2 * _tiled_vmem_bytes((tile, buckets, dim), 4)
        b += 3 * _tiled_vmem_bytes((tile, buckets, buckets), 4)
        return b

    if bh_tile is None:
        bh_tile = _pick_bh_tile(bh, heads, step_bytes, vmem_budget_bytes,
                                prefer_two_steps)
    assert bh % bh_tile == 0 and bh_tile % heads == 0
    grid_steps = bh // bh_tile

    # --- Operands ------------------------------------------------------------
    # 0/1 bucket-membership matrix (ones are exact in any dtype); the mean
    # scale is applied in f32 inside the kernel.
    pool = jnp.repeat(jnp.eye(buckets, dtype=q.dtype), blen, axis=1)
    # Pos-embs stay at (heads, buckets, dim), f32, grid-resident; no (bh, ...)
    # broadcast in HBM.
    pq = q_pos_emb.reshape(heads, buckets, dim).astype(jnp.float32)
    pk = k_pos_emb.reshape(heads, buckets, dim).astype(jnp.float32)

    in_specs = [
        pl.BlockSpec((bh_tile, seq, dim), lambda i: (i, 0, 0)),
        pl.BlockSpec((bh_tile, seq, dim), lambda i: (i, 0, 0)),
        pl.BlockSpec((buckets, seq), lambda i: (0, 0)),
        pl.BlockSpec((heads, buckets, dim), lambda i: (0, 0, 0)),
        pl.BlockSpec((heads, buckets, dim), lambda i: (0, 0, 0)),
    ]
    # Output last dim = buckets (<128) -> masked partial stores, but this
    # output is <2% of the kernel's HBM traffic; lane-dense relayout skipped.
    out_spec = pl.BlockSpec((bh_tile, buckets, buckets), lambda i: (i, 0, 0))

    def launch(dim_semantics):
        return pl.pallas_call(
            _sortnet_kernel,
            out_shape=jax.ShapeDtypeStruct((bh, buckets, buckets), q.dtype),
            grid_spec=pltpu.PrefetchScalarGridSpec(
                num_scalar_prefetch=0,
                grid=(grid_steps,),
                in_specs=in_specs,
                out_specs=out_spec,
            ),
            compiler_params=pltpu.CompilerParams(
                dimension_semantics=dim_semantics,
                vmem_limit_bytes=vmem_limit,
            ),
        )(q, k, pool, pq, pk)

    if want_core_parallel and grid_steps >= 2:
        try:
            return launch((pltpu.CORE_PARALLEL,))
        except Exception:
            # Fallback if this Mosaic build rejects CORE_PARALLEL semantics.
            return launch(("arbitrary",))
    return launch(("arbitrary",))


# ---------------------------------------------------------------------------
# Pure-JAX reference (mirrors the PyTorch forward, f32 math)
# ---------------------------------------------------------------------------
def attention_sort_net_reference(q, k, q_pos_emb, k_pos_emb, *, heads, buckets):
    bh, t, dim = q.shape
    b = bh // heads
    bq = q.reshape(bh, buckets, -1, dim).astype(jnp.float32)
    bk = k.reshape(bh, buckets, -1, dim).astype(jnp.float32)
    pq = jnp.broadcast_to(q_pos_emb, (b,) + q_pos_emb.shape[1:]
                          ).reshape(bh, buckets, dim).astype(jnp.float32)
    pk = jnp.broadcast_to(k_pos_emb, (b,) + k_pos_emb.shape[1:]
                          ).reshape(bh, buckets, dim).astype(jnp.float32)
    sq = bq.mean(axis=2) + pq
    sk = bk.mean(axis=2) + pk
    R = jnp.einsum("bie,bje->bij", sq, sk)
    return jax.nn.softmax(R, axis=-1).astype(q.dtype)


if __name__ == "__main__":
    # Module hyper-params (n_sortcut=0, non_permutative=True).
    heads = 4
    buckets = 8
    dim = 32
    batch = 4
    seq = 64                       # bucket_len = 8
    bh = batch * heads             # 16

    key = jax.random.PRNGKey(0)
    kq, kk, kpq, kpk = jax.random.split(key, 4)

    q = jax.random.normal(kq, (bh, seq, dim), dtype=jnp.float32)
    k = jax.random.normal(kk, (bh, seq, dim), dtype=jnp.float32)
    # Deterministic "torch.randn" parameter init (shapes from __init__).
    q_pos_emb = jax.random.normal(kpq, (1, heads, buckets, dim), dtype=jnp.float32)
    k_pos_emb = jax.random.normal(kpk, (1, heads, buckets, dim), dtype=jnp.float32)

    # f32 inputs.
    out = attention_sort_net(q, k, q_pos_emb, k_pos_emb,
                             heads=heads, buckets=buckets)
    out = jax.block_until_ready(out)
    ref = attention_sort_net_reference(q, k, q_pos_emb, k_pos_emb,
                                       heads=heads, buckets=buckets)
    assert out.shape == (bh, buckets, buckets)
    # Tolerance covers the TPU MXU's default matmul accumulation behaviour.
    assert jnp.allclose(out, ref, atol=5e-3, rtol=5e-3), \
        float(jnp.max(jnp.abs(out - ref)))

    # bf16 inputs: halves HBM->VMEM DMA bytes; f32 accumulation inside.
    q16, k16 = q.astype(jnp.bfloat16), k.astype(jnp.bfloat16)
    out16 = attention_sort_net(q16, k16, q_pos_emb, k_pos_emb,
                               heads=heads, buckets=buckets)
    out16 = jax.block_until_ready(out16)
    ref16 = attention_sort_net_reference(q16, k16, q_pos_emb, k_pos_emb,
                                         heads=heads, buckets=buckets)
    assert out16.dtype == jnp.bfloat16
    assert jnp.allclose(out16.astype(jnp.float32), ref16.astype(jnp.float32),
                        atol=1e-2, rtol=1e-2)

    print("KERNEL_OK")
</pallas_src>

<mosaic_0001>
module attributes {stable_mosaic.version = 11 : i64} {
  func.func @_sortnet_kernel(%arg0: i32, %arg1: memref<16x64x32xf32, #tpu.memory_space<vmem>>, %arg2: memref<16x64x32xf32, #tpu.memory_space<vmem>>, %arg3: memref<8x64xf32, #tpu.memory_space<vmem>>, %arg4: memref<4x8x32xf32, #tpu.memory_space<vmem>>, %arg5: memref<4x8x32xf32, #tpu.memory_space<vmem>>, %arg6: memref<16x8x8xf32, #tpu.memory_space<vmem>>) attributes {dimension_semantics = [#tpu.dimension_semantics<arbitrary>], iteration_bounds = array<i64: 1>, scalar_prefetch = 0 : i64, scratch_operands = 0 : i64, tpu.core_type = #tpu.core_type<tc>, window_params = [{transform_indices = @transform_0, window_bounds = array<i64: 16, 64, 32>}, {transform_indices = @transform_1, window_bounds = array<i64: 16, 64, 32>}, {pipeline_mode = #tpu.pipeline_mode<synchronous>, transform_indices = @transform_2, window_bounds = array<i64: 8, 64>}, {pipeline_mode = #tpu.pipeline_mode<synchronous>, transform_indices = @transform_3, window_bounds = array<i64: 4, 8, 32>}, {pipeline_mode = #tpu.pipeline_mode<synchronous>, transform_indices = @transform_4, window_bounds = array<i64: 4, 8, 32>}, {transform_indices = @transform_5, window_bounds = array<i64: 16, 8, 8>}]} {
    %c0 = arith.constant 0 : index
    %c0_0 = arith.constant 0 : index
    %0 = vector.load %arg3[%c0, %c0_0] : memref<8x64xf32, #tpu.memory_space<vmem>>, vector<8x64xf32>
    %1 = vector.shape_cast %0 : vector<8x64xf32> to vector<1x8x64xf32>
    %2 = vector.broadcast %1 : vector<1x8x64xf32> to vector<16x8x64xf32>
    %c0_1 = arith.constant 0 : index
    %c0_2 = arith.constant 0 : index
    %c0_3 = arith.constant 0 : index
    %3 = vector.load %arg1[%c0_1, %c0_2, %c0_3] : memref<16x64x32xf32, #tpu.memory_space<vmem>>, vector<16x64x32xf32>
    "tpu.trace_start"() <{level = 10 : i32, message = "bgt,btd->bgd"}> : () -> ()
    %cst = arith.constant dense<0.000000e+00> : vector<16x8x32xf32>
    %4 = tpu.matmul %2, %3, %cst {dimension_numbers = #tpu.dot_dimension_numbers<[2], [1], [1], [2], [0, 0, 0, 1, 1, 2], [0], [0]>} : vector<16x8x64xf32>, vector<16x64x32xf32>, vector<16x8x32xf32> -> vector<16x8x32xf32>
    "tpu.trace_stop"() : () -> ()
    %cst_4 = arith.constant 1.250000e-01 : f32
    %5 = vector.broadcast %cst_4 : f32 to vector<16x8x32xf32>
    %6 = arith.mulf %4, %5 : vector<16x8x32xf32>
    %c0_5 = arith.constant 0 : index
    %c0_6 = arith.constant 0 : index
    %c0_7 = arith.constant 0 : index
    %7 = vector.load %arg2[%c0_5, %c0_6, %c0_7] : memref<16x64x32xf32, #tpu.memory_space<vmem>>, vector<16x64x32xf32>
    "tpu.trace_start"() <{level = 10 : i32, message = "bgt,btd->bgd"}> : () -> ()
    %cst_8 = arith.constant dense<0.000000e+00> : vector<16x8x32xf32>
    %8 = tpu.matmul %2, %7, %cst_8 {dimension_numbers = #tpu.dot_dimension_numbers<[2], [1], [1], [2], [0, 0, 0, 1, 1, 2], [0], [0]>} : vector<16x8x64xf32>, vector<16x64x32xf32>, vector<16x8x32xf32> -> vector<16x8x32xf32>
    "tpu.trace_stop"() : () -> ()
    %cst_9 = arith.constant 1.250000e-01 : f32
    %9 = vector.broadcast %cst_9 : f32 to vector<16x8x32xf32>
    %10 = arith.mulf %8, %9 : vector<16x8x32xf32>
    %c0_10 = arith.constant 0 : index
    %c0_11 = arith.constant 0 : index
    %c0_12 = arith.constant 0 : index
    %11 = vector.load %arg4[%c0_10, %c0_11, %c0_12] : memref<4x8x32xf32, #tpu.memory_space<vmem>>, vector<4x8x32xf32>
    %c0_13 = arith.constant 0 : index
    %c0_14 = arith.constant 0 : index
    %c0_15 = arith.constant 0 : index
    %12 = vector.load %arg5[%c0_13, %c0_14, %c0_15] : memref<4x8x32xf32, #tpu.memory_space<vmem>>, vector<4x8x32xf32>
    %13 = vector.shape_cast %6 : vector<16x8x32xf32> to vector<4x4x8x32xf32>
    %14 = vector.shape_cast %11 : vector<4x8x32xf32> to vector<1x4x8x32xf32>
    %15 = vector.broadcast %14 : vector<1x4x8x32xf32> to vector<4x4x8x32xf32>
    %16 = arith.addf %13, %15 : vector<4x4x8x32xf32>
    %17 = vector.shape_cast %16 : vector<4x4x8x32xf32> to vector<16x8x32xf32>
    %18 = vector.shape_cast %10 : vector<16x8x32xf32> to vector<4x4x8x32xf32>
    %19 = vector.shape_cast %12 : vector<4x8x32xf32> to vector<1x4x8x32xf32>
    %20 = vector.broadcast %19 : vector<1x4x8x32xf32> to vector<4x4x8x32xf32>
    %21 = arith.addf %18, %20 : vector<4x4x8x32xf32>
    %22 = vector.shape_cast %21 : vector<4x4x8x32xf32> to vector<16x8x32xf32>
    "tpu.trace_start"() <{level = 10 : i32, message = "bie,bje->bij"}> : () -> ()
    %cst_16 = arith.constant dense<0.000000e+00> : vector<16x8x8xf32>
    %23 = tpu.matmul %17, %22, %cst_16 {dimension_numbers = #tpu.dot_dimension_numbers<[2], [2], [1], [1], [0, 0, 0, 1, 1, 1], [0], [0]>} : vector<16x8x32xf32>, vector<16x8x32xf32>, vector<16x8x8xf32> -> vector<16x8x8xf32>
    "tpu.trace_stop"() : () -> ()
    %cst_17 = arith.constant dense<0xFF800000> : vector<16x8xf32>
    %24 = vector.multi_reduction <maximumf>, %23, %cst_17 [2] : vector<16x8x8xf32> to vector<16x8xf32>
    %25 = vector.shape_cast %24 : vector<16x8xf32> to vector<16x8x1xf32>
    %26 = vector.broadcast %25 : vector<16x8x1xf32> to vector<16x8x8xf32>
    %27 = arith.subf %23, %26 : vector<16x8x8xf32>
    %28 = math.exp %27 : vector<16x8x8xf32>
    %cst_18 = arith.constant dense<0.000000e+00> : vector<16x8xf32>
    %29 = vector.multi_reduction <add>, %28, %cst_18 [2] : vector<16x8x8xf32> to vector<16x8xf32>
    %30 = vector.shape_cast %29 : vector<16x8xf32> to vector<16x8x1xf32>
    %31 = vector.broadcast %30 : vector<16x8x1xf32> to vector<16x8x8xf32>
    %32 = arith.divf %28, %31 : vector<16x8x8xf32>
    %c0_19 = arith.constant 0 : index
    %c0_20 = arith.constant 0 : index
    %c0_21 = arith.constant 0 : index
    %33 = vector.load %arg6[%c0_19, %c0_20, %c0_21] : memref<16x8x8xf32, #tpu.memory_space<vmem>>, vector<16x8x8xf32>
    tpu.vector_store %arg6[%c0_19, %c0_20, %c0_21], %32 {strides = array<i32>} : memref<16x8x8xf32, #tpu.memory_space<vmem>>, vector<16x8x8xf32>,
    return
  }
  func.func @transform_0(%arg0: i32) -> (i32, i32, i32) {
    %c0_i32 = arith.constant 0 : i32
    %c0_i32_0 = arith.constant 0 : i32
    %c0_i32_1 = arith.constant 0 : i32
    return %arg0, %c0_i32, %c0_i32_0 : i32, i32, i32
  }
  func.func @transform_1(%arg0: i32) -> (i32, i32, i32) {
    %c0_i32 = arith.constant 0 : i32
    %c0_i32_0 = arith.constant 0 : i32
    %c0_i32_1 = arith.constant 0 : i32
    return %arg0, %c0_i32, %c0_i32_0 : i32, i32, i32
  }
  func.func @transform_2(%arg0: i32) -> (i32, i32) {
    %c0_i32 = arith.constant 0 : i32
    %c0_i32_0 = arith.constant 0 : i32
    %c0_i32_1 = arith.constant 0 : i32
    return %c0_i32, %c0_i32_0 : i32, i32
  }
  func.func @transform_3(%arg0: i32) -> (i32, i32, i32) {
    %c0_i32 = arith.constant 0 : i32
    %c0_i32_0 = arith.constant 0 : i32
    %c0_i32_1 = arith.constant 0 : i32
    %c0_i32_2 = arith.constant 0 : i32
    return %c0_i32, %c0_i32_0, %c0_i32_1 : i32, i32, i32
  }
  func.func @transform_4(%arg0: i32) -> (i32, i32, i32) {
    %c0_i32 = arith.constant 0 : i32
    %c0_i32_0 = arith.constant 0 : i32
    %c0_i32_1 = arith.constant 0 : i32
    %c0_i32_2 = arith.constant 0 : i32
    return %c0_i32, %c0_i32_0, %c0_i32_1 : i32, i32, i32
  }
  func.func @transform_5(%arg0: i32) -> (i32, i32, i32) {
    %c0_i32 = arith.constant 0 : i32
    %c0_i32_0 = arith.constant 0 : i32
    %c0_i32_1 = arith.constant 0 : i32
    return %arg0, %c0_i32, %c0_i32_0 : i32, i32, i32
  }
}

</mosaic_0001>

<llo_original>
// kernel: tpu_custom_call.1
$region0: #{tpu_custom_call.1}
  #allocation0 [shape = 'u32[]', space=smem, size = 0x4, offset = 0x4, fixed_abs, tag = 'smem constant byte address 0x4 - core index']
  #allocation1 [shape = 'u32[144,128]{1,0:T(1,128)}', space=vmem, size = 0x12000, scoped, tag = 'internal scratch']
  %s0 = inlined_call_operand.vmem [shape: f32[16,64,32], index: 0, kind: input, shape index: {}]
  %s1 = inlined_call_operand.vmem [shape: f32[16,64,32], index: 1, kind: input, shape index: {}]
  %s2 = inlined_call_operand.vmem [shape: f32[8,64], index: 2, kind: input, shape index: {}]
  %s3 = inlined_call_operand.vmem [shape: f32[4,8,32], index: 3, kind: input, shape index: {}]
  %s4 = inlined_call_operand.vmem [shape: f32[4,8,32], index: 4, kind: input, shape index: {}]
  %s5 = inlined_call_operand.vmem [shape: f32[16,8,8], index: 5, kind: output, shape index: {}]
  %s6 = sld [smem:[#allocation0]]
  $region30: #{tpu_custom_call.1} parent=0
    _
  %s8 = ssub.s32 1, %s6
  %s9 = scalar_select 0, %s8, %s6
  // Predicated region
  $region2: #{tpu_custom_call.1} parent=0 // pred_check
    _
  $region3: #{tpu_custom_call.1} parent=0 // pred_check_branch
    %11 = sbr.rel (0) target = $region5
  $region4: #{tpu_custom_call.1} parent=0 // pred_region
    _
  $region5: #{tpu_custom_call.1} parent=0 // pred_fallthru
    _
  // Predicated region
  $region6: #{tpu_custom_call.1} parent=0 // pred_check
    _
  $region7: #{tpu_custom_call.1} parent=0 // pred_check_branch
    %13 = sbr.rel (0) target = $region9
  $region8: #{tpu_custom_call.1} parent=0 // pred_region
    _
  $region9: #{tpu_custom_call.1} parent=0 // pred_fallthru
    _
  // Predicated region
  $region10: #{tpu_custom_call.1} parent=0 // pred_check
    _
  $region11: #{tpu_custom_call.1} parent=0 // pred_check_branch
    %15 = sbr.rel (0) target = $region13
  $region12: #{tpu_custom_call.1} parent=0 // pred_region
    _
  $region13: #{tpu_custom_call.1} parent=0 // pred_fallthru
    _
  // Predicated region
  $region14: #{tpu_custom_call.1} parent=0 // pred_check
    _
  $region15: #{tpu_custom_call.1} parent=0 // pred_check_branch
    %17 = sbr.rel (0) target = $region17
  $region16: #{tpu_custom_call.1} parent=0 // pred_region
    _
  $region17: #{tpu_custom_call.1} parent=0 // pred_fallthru
    _
  // Predicated region
  $region18: #{tpu_custom_call.1} parent=0 // pred_check
    _
  $region19: #{tpu_custom_call.1} parent=0 // pred_check_branch
    %19 = sbr.rel (0) target = $region21
  $region20: #{tpu_custom_call.1} parent=0 // pred_region
    _
  $region21: #{tpu_custom_call.1} parent=0 // pred_fallthru
    _
  %v20 = vld [vmem:[%s2] sm:$0xff]
  %v21 = vld [vmem:[%s0] sm:$0xff]
  %v22 = vld [vmem:[%s0 + $0x8] sm:$0xff]
  %v23 = vld [vmem:[%s0 + $0x10] sm:$0xff]
  %v24 = vld [vmem:[%s0 + $0x18] sm:$0xff]
  %v25 = vld [vmem:[%s0 + $0x20] sm:$0xff]
  %v26 = vld [vmem:[%s0 + $0x28] sm:$0xff]
  %v27 = vld [vmem:[%s0 + $0x30] sm:$0xff]
  %v28 = vld [vmem:[%s0 + $0x38] sm:$0xff]
  %v29 = vld [vmem:[%s0 + $0x40] sm:$0xff]
  %v30 = vld [vmem:[%s0 + $0x48] sm:$0xff]
  %v31 = vld [vmem:[%s0 + $0x50] sm:$0xff]
  %v32 = vld [vmem:[%s0 + $0x58] sm:$0xff]
  %v33 = vld [vmem:[%s0 + $0x60] sm:$0xff]
  %v34 = vld [vmem:[%s0 + $0x68] sm:$0xff]
  %v35 = vld [vmem:[%s0 + $0x70] sm:$0xff]
  %v36 = vld [vmem:[%s0 + $0x78] sm:$0xff]
  %v37 = vld [vmem:[%s0 + $0x80] sm:$0xff]
  %v38 = vld [vmem:[%s0 + $0x88] sm:$0xff]
  %v39 = vld [vmem:[%s0 + $0x90] sm:$0xff]
  %v40 = vld [vmem:[%s0 + $0x98] sm:$0xff]
  %v41 = vld [vmem:[%s0 + $0xa0] sm:$0xff]
  %v42 = vld [vmem:[%s0 + $0xa8] sm:$0xff]
  %v43 = vld [vmem:[%s0 + $0xb0] sm:$0xff]
  %v44 = vld [vmem:[%s0 + $0xb8] sm:$0xff]
  %v45 = vld [vmem:[%s0 + $0xc0] sm:$0xff]
  %v46 = vld [vmem:[%s0 + $0xc8] sm:$0xff]
  %v47 = vld [vmem:[%s0 + $0xd0] sm:$0xff]
  %v48 = vld [vmem:[%s0 + $0xd8] sm:$0xff]
  %v49 = vld [vmem:[%s0 + $0xe0] sm:$0xff]
  %v50 = vld [vmem:[%s0 + $0xe8] sm:$0xff]
  %v51 = vld [vmem:[%s0 + $0xf0] sm:$0xff]
  %v52 = vld [vmem:[%s0 + $0xf8] sm:$0xff]
  %v53 = vld [vmem:[%s0 + $0x100] sm:$0xff]
  %v54 = vld [vmem:[%s0 + $0x108] sm:$0xff]
  %v55 = vld [vmem:[%s0 + $0x110] sm:$0xff]
  %v56 = vld [vmem:[%s0 + $0x118] sm:$0xff]
  %v57 = vld [vmem:[%s0 + $0x120] sm:$0xff]
  %v58 = vld [vmem:[%s0 + $0x128] sm:$0xff]
  %v59 = vld [vmem:[%s0 + $0x130] sm:$0xff]
  %v60 = vld [vmem:[%s0 + $0x138] sm:$0xff]
  %v61 = vld [vmem:[%s0 + $0x140] sm:$0xff]
  %v62 = vld [vmem:[%s0 + $0x148] sm:$0xff]
  %v63 = vld [vmem:[%s0 + $0x150] sm:$0xff]
  %v64 = vld [vmem:[%s0 + $0x158] sm:$0xff]
  %v65 = vld [vmem:[%s0 + $0x160] sm:$0xff]
  %v66 = vld [vmem:[%s0 + $0x168] sm:$0xff]
  %v67 = vld [vmem:[%s0 + $0x170] sm:$0xff]
  %v68 = vld [vmem:[%s0 + $0x178] sm:$0xff]
  %v69 = vld [vmem:[%s0 + $0x180] sm:$0xff]
  %v70 = vld [vmem:[%s0 + $0x188] sm:$0xff]
  %v71 = vld [vmem:[%s0 + $0x190] sm:$0xff]
  %v72 = vld [vmem:[%s0 + $0x198] sm:$0xff]
  %v73 = vld [vmem:[%s0 + $0x1a0] sm:$0xff]
  %v74 = vld [vmem:[%s0 + $0x1a8] sm:$0xff]
  %v75 = vld [vmem:[%s0 + $0x1b0] sm:$0xff]
  %v76 = vld [vmem:[%s0 + $0x1b8] sm:$0xff]
  %v77 = vld [vmem:[%s0 + $0x1c0] sm:$0xff]
  %v78 = vld [vmem:[%s0 + $0x1c8] sm:$0xff]
  %v79 = vld [vmem:[%s0 + $0x1d0] sm:$0xff]
  %v80 = vld [vmem:[%s0 + $0x1d8] sm:$0xff]
  %v81 = vld [vmem:[%s0 + $0x1e0] sm:$0xff]
  %v82 = vld [vmem:[%s0 + $0x1e8] sm:$0xff]
  %v83 = vld [vmem:[%s0 + $0x1f0] sm:$0xff]
  %v84 = vld [vmem:[%s0 + $0x1f8] sm:$0xff]
  %v85 = vld [vmem:[%s0 + $0x200] sm:$0xff]
  %v86 = vld [vmem:[%s0 + $0x208] sm:$0xff]
  %v87 = vld [vmem:[%s0 + $0x210] sm:$0xff]
  %v88 = vld [vmem:[%s0 + $0x218] sm:$0xff]
  %v89 = vld [vmem:[%s0 + $0x220] sm:$0xff]
  %v90 = vld [vmem:[%s0 + $0x228] sm:$0xff]
  %v91 = vld [vmem:[%s0 + $0x230] sm:$0xff]
  %v92 = vld [vmem:[%s0 + $0x238] sm:$0xff]
  %v93 = vld [vmem:[%s0 + $0x240] sm:$0xff]
  %v94 = vld [vmem:[%s0 + $0x248] sm:$0xff]
  %v95 = vld [vmem:[%s0 + $0x250] sm:$0xff]
  %v96 = vld [vmem:[%s0 + $0x258] sm:$0xff]
  %v97 = vld [vmem:[%s0 + $0x260] sm:$0xff]
  %v98 = vld [vmem:[%s0 + $0x268] sm:$0xff]
  %v99 = vld [vmem:[%s0 + $0x270] sm:$0xff]
  %v100 = vld [vmem:[%s0 + $0x278] sm:$0xff]
  %v101 = vld [vmem:[%s0 + $0x280] sm:$0xff]
  %v102 = vld [vmem:[%s0 + $0x288] sm:$0xff]
  %v103 = vld [vmem:[%s0 + $0x290] sm:$0xff]
  %v104 = vld [vmem:[%s0 + $0x298] sm:$0xff]
  %v105 = vld [vmem:[%s0 + $0x2a0] sm:$0xff]
  %v106 = vld [vmem:[%s0 + $0x2a8] sm:$0xff]
  %v107 = vld [vmem:[%s0 + $0x2b0] sm:$0xff]
  %v108 = vld [vmem:[%s0 + $0x2b8] sm:$0xff]
  %v109 = vld [vmem:[%s0 + $0x2c0] sm:$0xff]
  %v110 = vld [vmem:[%s0 + $0x2c8] sm:$0xff]
  %v111 = vld [vmem:[%s0 + $0x2d0] sm:$0xff]
  %v112 = vld [vmem:[%s0 + $0x2d8] sm:$0xff]
  %v113 = vld [vmem:[%s0 + $0x2e0] sm:$0xff]
  %v114 = vld [vmem:[%s0 + $0x2e8] sm:$0xff]
  %v115 = vld [vmem:[%s0 + $0x2f0] sm:$0xff]
  %v116 = vld [vmem:[%s0 + $0x2f8] sm:$0xff]
  %v117 = vld [vmem:[%s0 + $0x300] sm:$0xff]
  %v118 = vld [vmem:[%s0 + $0x308] sm:$0xff]
  %v119 = vld [vmem:[%s0 + $0x310] sm:$0xff]
  %v120 = vld [vmem:[%s0 + $0x318] sm:$0xff]
  %v121 = vld [vmem:[%s0 + $0x320] sm:$0xff]
  %v122 = vld [vmem:[%s0 + $0x328] sm:$0xff]
  %v123 = vld [vmem:[%s0 + $0x330] sm:$0xff]
  %v124 = vld [vmem:[%s0 + $0x338] sm:$0xff]
  %v125 = vld [vmem:[%s0 + $0x340] sm:$0xff]
  %v126 = vld [vmem:[%s0 + $0x348] sm:$0xff]
  %v127 = vld [vmem:[%s0 + $0x350] sm:$0xff]
  %v128 = vld [vmem:[%s0 + $0x358] sm:$0xff]
  %v129 = vld [vmem:[%s0 + $0x360] sm:$0xff]
  %v130 = vld [vmem:[%s0 + $0x368] sm:$0xff]
  %v131 = vld [vmem:[%s0 + $0x370] sm:$0xff]
  %v132 = vld [vmem:[%s0 + $0x378] sm:$0xff]
  %v133 = vld [vmem:[%s0 + $0x380] sm:$0xff]
  %v134 = vld [vmem:[%s0 + $0x388] sm:$0xff]
  %v135 = vld [vmem:[%s0 + $0x390] sm:$0xff]
  %v136 = vld [vmem:[%s0 + $0x398] sm:$0xff]
  %v137 = vld [vmem:[%s0 + $0x3a0] sm:$0xff]
  %v138 = vld [vmem:[%s0 + $0x3a8] sm:$0xff]
  %v139 = vld [vmem:[%s0 + $0x3b0] sm:$0xff]
  %v140 = vld [vmem:[%s0 + $0x3b8] sm:$0xff]
  %v141 = vld [vmem:[%s0 + $0x3c0] sm:$0xff]
  %v142 = vld [vmem:[%s0 + $0x3c8] sm:$0xff]
  %v143 = vld [vmem:[%s0 + $0x3d0] sm:$0xff]
  %v144 = vld [vmem:[%s0 + $0x3d8] sm:$0xff]
  %v145 = vld [vmem:[%s0 + $0x3e0] sm:$0xff]
  %v146 = vld [vmem:[%s0 + $0x3e8] sm:$0xff]
  %v147 = vld [vmem:[%s0 + $0x3f0] sm:$0xff]
  %v148 = vld [vmem:[%s0 + $0x3f8] sm:$0xff]
  %vm149 = vcmask 523264
  %v151 = vsel %vm149, %v20, 0
  %153 = vmatprep.subr.mxu0 0.0
  %154 = vmatpush1.msra.mxu0 %v21
  %155 = vmatprep.subr.mxu0 0.0
  %156 = vmatpush1.msra.mxu0 %v22
  %157 = vmatprep.subr.mxu0 0.0
  %158 = vmatpush1.msra.mxu0 %v23
  %159 = vmatprep.subr.mxu0 0.0
  %160 = vmatpush1.msra.mxu0 %v24
  %161 = vmatprep.subr.mxu0 0.0
  %162 = vmatpush1.msra.mxu0 %v25
  %163 = vmatprep.subr.mxu0 0.0
  %164 = vmatpush1.msra.mxu0 %v26
  %165 = vmatprep.subr.mxu0 0.0
  %166 = vmatpush1.msra.mxu0 %v27
  %167 = vmatprep.subr.mxu0 0.0
  %168 = vmatpush1.msra.mxu0 %v28
  %169 = vmatprep.subr.mxu0 0.0
  %170 = vmatpush1.msra.mxu0 0.0
  %171 = vmatprep.subr.mxu0 0.0
  %172 = vmatpush1.msra.mxu0 0.0
  %173 = vmatprep.subr.mxu0 0.0
  %174 = vmatpush1.msra.mxu0 0.0
  %175 = vmatprep.subr.mxu0 0.0
  %176 = vmatpush1.msra.mxu0 0.0
  %177 = vmatprep.subr.mxu0 0.0
  %178 = vmatpush1.msra.mxu0 0.0
  %179 = vmatprep.subr.mxu0 0.0
  %180 = vmatpush1.msra.mxu0 0.0
  %181 = vmatprep.subr.mxu0 0.0
  %182 = vmatpush1.msra.mxu0 0.0
  %183 = vmatprep.subr.mxu0 0.0
  %184 = vmatpush1.msra.mxu0 0.0
  %185 = vmatprep.subr.mxu0 0.0
  %186 = vmatpush1.msra.mxu0 0.0
  %187 = vmatprep.subr.mxu0 0.0
  %188 = vmatpush1.msra.mxu0 0.0
  %189 = vmatprep.subr.mxu0 0.0
  %190 = vmatpush1.msra.mxu0 0.0
  %191 = vmatprep.subr.mxu0 0.0
  %192 = vmatpush1.msra.mxu0 0.0
  %193 = vmatprep.subr.mxu0 0.0
  %194 = vmatpush1.msra.mxu0 0.0
  %195 = vmatprep.subr.mxu0 0.0
  %196 = vmatpush1.msra.mxu0 0.0
  %197 = vmatprep.subr.mxu0 0.0
  %198 = vmatpush1.msra.mxu0 0.0
  %199 = vmatprep.subr.mxu0 0.0
  %200 = vmatpush1.msra.mxu0 0.0
  %201 = vmatprep.subr.mxu0 0.0
  %202 = vmatpush1.msra.mxu0 0.0
  %203 = vmatprep.subr.mxu0 0.0
  %204 = vmatpush1.msra.mxu0 0.0
  %205 = vmatprep.subr.mxu0 0.0
  %206 = vmatpush1.msra.mxu0 0.0
  %207 = vmatprep.subr.mxu0 0.0
  %208 = vmatpush1.msra.mxu0 0.0
  %209 = vmatprep.subr.mxu0 0.0
  %210 = vmatpush1.msra.mxu0 0.0
  %211 = vmatprep.subr.mxu0 0.0
  %212 = vmatpush1.msra.mxu0 0.0
  %213 = vmatprep.subr.mxu0 0.0
  %214 = vmatpush1.msra.mxu0 0.0
  %215 = vmatprep.subr.mxu0 0.0
  %216 = vmatpush1.msra.mxu0 0.0
  %217 = vmatprep.mubr.f32.mxu0 0.0
  %218 = vmatmul.mubr.f32.gmra.mrb[0].mxu0 %v151
  %v219 = vpop.f32.mrb[0].mxu0
  %v220 = vadd.f32 0.0, %v219
  %v221 = vpop.f32.mrb[0].mxu0
  %222 = vdwg.mxu0
  %223 = vmatprep.subr.mxu0 0.0
  %224 = vmatpush1.msra.mxu0 %v29
  %225 = vmatprep.subr.mxu0 0.0
  %226 = vmatpush1.msra.mxu0 %v30
  %227 = vmatprep.subr.mxu0 0.0
  %228 = vmatpush1.msra.mxu0 %v31
  %229 = vmatprep.subr.mxu0 0.0
  %230 = vmatpush1.msra.mxu0 %v32
  %231 = vmatprep.subr.mxu0 0.0
  %232 = vmatpush1.msra.mxu0 %v33
  %233 = vmatprep.subr.mxu0 0.0
  %234 = vmatpush1.msra.mxu0 %v34
  %235 = vmatprep.subr.mxu0 0.0
  %236 = vmatpush1.msra.mxu0 %v35
  %237 = vmatprep.subr.mxu0 0.0
  %238 = vmatpush1.msra.mxu0 %v36
  %239 = vmatprep.subr.mxu0 0.0
  %240 = vmatpush1.msra.mxu0 0.0
  %241 = vmatprep.subr.mxu0 0.0
  %242 = vmatpush1.msra.mxu0 0.0
  %243 = vmatprep.subr.mxu0 0.0
  %244 = vmatpush1.msra.mxu0 0.0
  %245 = vmatprep.subr.mxu0 0.0
  %246 = vmatpush1.msra.mxu0 0.0
  %247 = vmatprep.subr.mxu0 0.0
  %248 = vmatpush1.msra.mxu0 0.0
  %249 = vmatprep.subr.mxu0 0.0
  %250 = vmatpush1.msra.mxu0 0.0
  %251 = vmatprep.subr.mxu0 0.0
  %252 = vmatpush1.msra.mxu0 0.0
  %253 = vmatprep.subr.mxu0 0.0
  %254 = vmatpush1.msra.mxu0 0.0
  %255 = vmatprep.subr.mxu0 0.0
  %256 = vmatpush1.msra.mxu0 0.0
  %257 = vmatprep.subr.mxu0 0.0
  %258 = vmatpush1.msra.mxu0 0.0
  %259 = vmatprep.subr.mxu0 0.0
  %260 = vmatpush1.msra.mxu0 0.0
  %261 = vmatprep.subr.mxu0 0.0
  %262 = vmatpush1.msra.mxu0 0.0
  %263 = vmatprep.subr.mxu0 0.0
  %264 = vmatpush1.msra.mxu0 0.0
  %265 = vmatprep.subr.mxu0 0.0
  %266 = vmatpush1.msra.mxu0 0.0
  %267 = vmatprep.subr.mxu0 0.0
  %268 = vmatpush1.msra.mxu0 0.0
  %269 = vmatprep.subr.mxu0 0.0
  %270 = vmatpush1.msra.mxu0 0.0
  %271 = vmatprep.subr.mxu0 0.0
  %272 = vmatpush1.msra.mxu0 0.0
  %273 = vmatprep.subr.mxu0 0.0
  %274 = vmatpush1.msra.mxu0 0.0
  %275 = vmatprep.subr.mxu0 0.0
  %276 = vmatpush1.msra.mxu0 0.0
  %277 = vmatprep.subr.mxu0 0.0
  %278 = vmatpush1.msra.mxu0 0.0
  %279 = vmatprep.subr.mxu0 0.0
  %280 = vmatpush1.msra.mxu0 0.0
  %281 = vmatprep.subr.mxu0 0.0
  %282 = vmatpush1.msra.mxu0 0.0
  %283 = vmatprep.subr.mxu0 0.0
  %284 = vmatpush1.msra.mxu0 0.0
  %285 = vmatprep.subr.mxu0 0.0
  %286 = vmatpush1.msra.mxu0 0.0
  %287 = vmatprep.mubr.f32.mxu0 0.0
  %288 = vmatmul.mubr.f32.gmra.mrb[0].mxu0 %v151
  %v289 = vpop.f32.mrb[0].mxu0
  %v290 = vadd.f32 0.0, %v289
  %v291 = vpop.f32.mrb[0].mxu0
  %292 = vdwg.mxu0
  %293 = vmatprep.subr.mxu0 0.0
  %294 = vmatpush1.msra.mxu0 %v37
  %295 = vmatprep.subr.mxu0 0.0
  %296 = vmatpush1.msra.mxu0 %v38
  %297 = vmatprep.subr.mxu0 0.0
  %298 = vmatpush1.msra.mxu0 %v39
  %299 = vmatprep.subr.mxu0 0.0
  %300 = vmatpush1.msra.mxu0 %v40
  %301 = vmatprep.subr.mxu0 0.0
  %302 = vmatpush1.msra.mxu0 %v41
  %303 = vmatprep.subr.mxu0 0.0
  %304 = vmatpush1.msra.mxu0 %v42
  %305 = vmatprep.subr.mxu0 0.0
  %306 = vmatpush1.msra.mxu0 %v43
  %307 = vmatprep.subr.mxu0 0.0
  %308 = vmatpush1.msra.mxu0 %v44
  %309 = vmatprep.subr.mxu0 0.0
  %310 = vmatpush1.msra.mxu0 0.0
  %311 = vmatprep.subr.mxu0 0.0
  %312 = vmatpush1.msra.mxu0 0.0
  %313 = vmatprep.subr.mxu0 0.0
  %314 = vmatpush1.msra.mxu0 0.0
  %315 = vmatprep.subr.mxu0 0.0
  %316 = vmatpush1.msra.mxu0 0.0
  %317 = vmatprep.subr.mxu0 0.0
  %318 = vmatpush1.msra.mxu0 0.0
  %319 = vmatprep.subr.mxu0 0.0
  %320 = vmatpush1.msra.mxu0 0.0
  %321 = vmatprep.subr.mxu0 0.0
  %322 = vmatpush1.msra.mxu0 0.0
  %323 = vmatprep.subr.mxu0 0.0
  %324 = vmatpush1.msra.mxu0 0.0
  %325 = vmatprep.subr.mxu0 0.0
  %326 = vmatpush1.msra.mxu0 0.0
  %327 = vmatprep.subr.mxu0 0.0
  %328 = vmatpush1.msra.mxu0 0.0
  %329 = vmatprep.subr.mxu0 0.0
  %330 = vmatpush1.msra.mxu0 0.0
  %331 = vmatprep.subr.mxu0 0.0
  %332 = vmatpush1.msra.mxu0 0.0
  %333 = vmatprep.subr.mxu0 0.0
  %334 = vmatpush1.msra.mxu0 0.0
  %335 = vmatprep.subr.mxu0 0.0
  %336 = vmatpush1.msra.mxu0 0.0
  %337 = vmatprep.subr.mxu0 0.0
  %338 = vmatpush1.msra.mxu0 0.0
  %339 = vmatprep.subr.mxu0 0.0
  %340 = vmatpush1.msra.mxu0 0.0
  %341 = vmatprep.subr.mxu0 0.0
  %342 = vmatpush1.msra.mxu0 0.0
  %343 = vmatprep.subr.mxu0 0.0
  %344 = vmatpush1.msra.mxu0 0.0
  %345 = vmatprep.subr.mxu0 0.0
  %346 = vmatpush1.msra.mxu0 0.0
  %347 = vmatprep.subr.mxu0 0.0
  %348 = vmatpush1.msra.mxu0 0.0
  %349 = vmatprep.subr.mxu0 0.0
  %350 = vmatpush1.msra.mxu0 0.0
  %351 = vmatprep.subr.mxu0 0.0
  %352 = vmatpush1.msra.mxu0 0.0
  %353 = vmatprep.subr.mxu0 0.0
  %354 = vmatpush1.msra.mxu0 0.0
  %355 = vmatprep.subr.mxu0 0.0
  %356 = vmatpush1.msra.mxu0 0.0
  %357 = vmatprep.mubr.f32.mxu0 0.0
  %358 = vmatmul.mubr.f32.gmra.mrb[0].mxu0 %v151
  %v359 = vpop.f32.mrb[0].mxu0
  %v360 = vadd.f32 0.0, %v359
  %v361 = vpop.f32.mrb[0].mxu0
  %362 = vdwg.mxu0
  %363 = vmatprep.subr.mxu0 0.0
  %364 = vmatpush1.msra.mxu0 %v45
  %365 = vmatprep.subr.mxu0 0.0
  %366 = vmatpush1.msra.mxu0 %v46
  %367 = vmatprep.subr.mxu0 0.0
  %368 = vmatpush1.msra.mxu0 %v47
  %369 = vmatprep.subr.mxu0 0.0
  %370 = vmatpush1.msra.mxu0 %v48
  %371 = vmatprep.subr.mxu0 0.0
  %372 = vmatpush1.msra.mxu0 %v49
  %373 = vmatprep.subr.mxu0 0.0
  %374 = vmatpush1.msra.mxu0 %v50
  %375 = vmatprep.subr.mxu0 0.0
  %376 = vmatpush1.msra.mxu0 %v51
  %377 = vmatprep.subr.mxu0 0.0
  %378 = vmatpush1.msra.mxu0 %v52
  %379 = vmatprep.subr.mxu0 0.0
  %380 = vmatpush1.msra.mxu0 0.0
  %381 = vmatprep.subr.mxu0 0.0
  %382 = vmatpush1.msra.mxu0 0.0
  %383 = vmatprep.subr.mxu0 0.0
  %384 = vmatpush1.msra.mxu0 0.0
  %385 = vmatprep.subr.mxu0 0.0
  %386 = vmatpush1.msra.mxu0 0.0
  %387 = vmatprep.subr.mxu0 0.0
  %388 = vmatpush1.msra.mxu0 0.0
  %389 = vmatprep.subr.mxu0 0.0
  %390 = vmatpush1.msra.mxu0 0.0
  %391 = vmatprep.subr.mxu0 0.0
  %392 = vmatpush1.msra.mxu0 0.0
  %393 = vmatprep.subr.mxu0 0.0
  %394 = vmatpush1.msra.mxu0 0.0
  %395 = vmatprep.subr.mxu0 0.0
  %396 = vmatpush1.msra.mxu0 0.0
  %397 = vmatprep.subr.mxu0 0.0
  %398 = vmatpush1.msra.mxu0 0.0
  %399 = vmatprep.subr.mxu0 0.0
  %400 = vmatpush1.msra.mxu0 0.0
  %401 = vmatprep.subr.mxu0 0.0
  %402 = vmatpush1.msra.mxu0 0.0
  %403 = vmatprep.subr.mxu0 0.0
  %404 = vmatpush1.msra.mxu0 0.0
  %405 = vmatprep.subr.mxu0 0.0
  %406 = vmatpush1.msra.mxu0 0.0
  %407 = vmatprep.subr.mxu0 0.0
  %408 = vmatpush1.msra.mxu0 0.0
  %409 = vmatprep.subr.mxu0 0.0
  %410 = vmatpush1.msra.mxu0 0.0
  %411 = vmatprep.subr.mxu0 0.0
  %412 = vmatpush1.msra.mxu0 0.0
  %413 = vmatprep.subr.mxu0 0.0
  %414 = vmatpush1.msra.mxu0 0.0
  %415 = vmatprep.subr.mxu0 0.0
  %416 = vmatpush1.msra.mxu0 0.0
  %417 = vmatprep.subr.mxu0 0.0
  %418 = vmatpush1.msra.mxu0 0.0
  %419 = vmatprep.subr.mxu0 0.0
  %420 = vmatpush1.msra.mxu0 0.0
  %421 = vmatprep.subr.mxu0 0.0
  %422 = vmatpush1.msra.mxu0 0.0
  %423 = vmatprep.subr.mxu0 0.0
  %424 = vmatpush1.msra.mxu0 0.0
  %425 = vmatprep.subr.mxu0 0.0
  %426 = vmatpush1.msra.mxu0 0.0
  %427 = vmatprep.mubr.f32.mxu0 0.0
  %428 = vmatmul.mubr.f32.gmra.mrb[0].mxu0 %v151
  %v429 = vpop.f32.mrb[0].mxu0
  %v430 = vadd.f32 0.0, %v429
  %v431 = vpop.f32.mrb[0].mxu0
  %432 = vdwg.mxu0
  %433 = vmatprep.subr.mxu0 0.0
  %434 = vmatpush1.msra.mxu0 %v53
  %435 = vmatprep.subr.mxu0 0.0
  %436 = vmatpush1.msra.mxu0 %v54
  %437 = vmatprep.subr.mxu0 0.0
  %438 = vmatpush1.msra.mxu0 %v55
  %439 = vmatprep.subr.mxu0 0.0
  %440 = vmatpush1.msra.mxu0 %v56
  %441 = vmatprep.subr.mxu0 0.0
  %442 = vmatpush1.msra.mxu0 %v57
  %443 = vmatprep.subr.mxu0 0.0
  %444 = vmatpush1.msra.mxu0 %v58
  %445 = vmatprep.subr.mxu0 0.0
  %446 = vmatpush1.msra.mxu0 %v59
  %447 = vmatprep.subr.mxu0 0.0
  %448 = vmatpush1.msra.mxu0 %v60
  %449 = vmatprep.subr.mxu0 0.0
  %450 = vmatpush1.msra.mxu0 0.0
  %451 = vmatprep.subr.mxu0 0.0
  %452 = vmatpush1.msra.mxu0 0.0
  %453 = vmatprep.subr.mxu0 0.0
  %454 = vmatpush1.msra.mxu0 0.0
  %455 = vmatprep.subr.mxu0 0.0
  %456 = vmatpush1.msra.mxu0 0.0
  %457 = vmatprep.subr.mxu0 0.0
  %458 = vmatpush1.msra.mxu0 0.0
  %459 = vmatprep.subr.mxu0 0.0
  %460 = vmatpush1.msra.mxu0 0.0
  %461 = vmatprep.subr.mxu0 0.0
  %462 = vmatpush1.msra.mxu0 0.0
  %463 = vmatprep.subr.mxu0 0.0
  %464 = vmatpush1.msra.mxu0 0.0
  %465 = vmatprep.subr.mxu0 0.0
  %466 = vmatpush1.msra.mxu0 0.0
  %467 = vmatprep.subr.mxu0 0.0
  %468 = vmatpush1.msra.mxu0 0.0
  %469 = vmatprep.subr.mxu0 0.0
  %470 = vmatpush1.msra.mxu0 0.0
  %471 = vmatprep.subr.mxu0 0.0
  %472 = vmatpush1.msra.mxu0 0.0
  %473 = vmatprep.subr.mxu0 0.0
  %474 = vmatpush1.msra.mxu0 0.0
  %475 = vmatprep.subr.mxu0 0.0
  %476 = vmatpush1.msra.mxu0 0.0
  %477 = vmatprep.subr.mxu0 0.0
  %478 = vmatpush1.msra.mxu0 0.0
  %479 = vmatprep.subr.mxu0 0.0
  %480 = vmatpush1.msra.mxu0 0.0
  %481 = vmatprep.subr.mxu0 0.0
  %482 = vmatpush1.msra.mxu0 0.0
  %483 = vmatprep.subr.mxu0 0.0
  %484 = vmatpush1.msra.mxu0 0.0
  %485 = vmatprep.subr.mxu0 0.0
  %486 = vmatpush1.msra.mxu0 0.0
  %487 = vmatprep.subr.mxu0 0.0
  %488 = vmatpush1.msra.mxu0 0.0
  %489 = vmatprep.subr.mxu0 0.0
  %490 = vmatpush1.msra.mxu0 0.0
  %491 = vmatprep.subr.mxu0 0.0
  %492 = vmatpush1.msra.mxu0 0.0
  %493 = vmatprep.subr.mxu0 0.0
  %494 = vmatpush1.msra.mxu0 0.0
  %495 = vmatprep.subr.mxu0 0.0
  %496 = vmatpush1.msra.mxu0 0.0
  %497 = vmatprep.mubr.f32.mxu0 0.0
  %498 = vmatmul.mubr.f32.gmra.mrb[0].mxu0 %v151
  %v499 = vpop.f32.mrb[0].mxu0
  %v500 = vadd.f32 0.0, %v499
  %v501 = vpop.f32.mrb[0].mxu0
  %502 = vdwg.mxu0
  %503 = vmatprep.subr.mxu0 0.0
  %504 = vmatpush1.msra.mxu0 %v61
  %505 = vmatprep.subr.mxu0 0.0
  %506 = vmatpush1.msra.mxu0 %v62
  %507 = vmatprep.subr.mxu0 0.0
  %508 = vmatpush1.msra.mxu0 %v63
  %509 = vmatprep.subr.mxu0 0.0
  %510 = vmatpush1.msra.mxu0 %v64
  %511 = vmatprep.subr.mxu0 0.0
  %512 = vmatpush1.msra.mxu0 %v65
  %513 = vmatprep.subr.mxu0 0.0
  %514 = vmatpush1.msra.mxu0 %v66
  %515 = vmatprep.subr.mxu0 0.0
  %516 = vmatpush1.msra.mxu0 %v67
  %517 = vmatprep.subr.mxu0 0.0
  %518 = vmatpush1.msra.mxu0 %v68
  %519 = vmatprep.subr.mxu0 0.0
  %520 = vmatpush1.msra.mxu0 0.0
  %521 = vmatprep.subr.mxu0 0.0
  %522 = vmatpush1.msra.mxu0 0.0
  %523 = vmatprep.subr.mxu0 0.0
  %524 = vmatpush1.msra.mxu0 0.0
  %525 = vmatprep.subr.mxu0 0.0
  %526 = vmatpush1.msra.mxu0 0.0
  %527 = vmatprep.subr.mxu0 0.0
  %528 = vmatpush1.msra.mxu0 0.0
  %529 = vmatprep.subr.mxu0 0.0
  %530 = vmatpush1.msra.mxu0 0.0
  %531 = vmatprep.subr.mxu0 0.0
  %532 = vmatpush1.msra.mxu0 0.0
  %533 = vmatprep.subr.mxu0 0.0
  %534 = vmatpush1.msra.mxu0 0.0
  %535 = vmatprep.subr.mxu0 0.0
  %536 = vmatpush1.msra.mxu0 0.0
  %537 = vmatprep.subr.mxu0 0.0
  %538 = vmatpush1.msra.mxu0 0.0
  %539 = vmatprep.subr.mxu0 0.0
  %540 = vmatpush1.msra.mxu0 0.0
  %541 = vmatprep.subr.mxu0 0.0
  %542 = vmatpush1.msra.mxu0 0.0
  %543 = vmatprep.subr.mxu0 0.0
  %544 = vmatpush1.msra.mxu0 0.0
  %545 = vmatprep.subr.mxu0 0.0
  %546 = vmatpush1.msra.mxu0 0.0
  %547 = vmatprep.subr.mxu0 0.0
  %548 = vmatpush1.msra.mxu0 0.0
  %549 = vmatprep.subr.mxu0 0.0
  %550 = vmatpush1.msra.mxu0 0.0
  %551 = vmatprep.subr.mxu0 0.0
  %552 = vmatpush1.msra.mxu0 0.0
  %553 = vmatprep.subr.mxu0 0.0
  %554 = vmatpush1.msra.mxu0 0.0
  %555 = vmatprep.subr.mxu0 0.0
  %556 = vmatpush1.msra.mxu0 0.0
  %557 = vmatprep.subr.mxu0 0.0
  %558 = vmatpush1.msra.mxu0 0.0
  %559 = vmatprep.subr.mxu0 0.0
  %560 = vmatpush1.msra.mxu0 0.0
  %561 = vmatprep.subr.mxu0 0.0
  %562 = vmatpush1.msra.mxu0 0.0
  %563 = vmatprep.subr.mxu0 0.0
  %564 = vmatpush1.msra.mxu0 0.0
  %565 = vmatprep.subr.mxu0 0.0
  %566 = vmatpush1.msra.mxu0 0.0
  %567 = vmatprep.mubr.f32.mxu0 0.0
  %568 = vmatmul.mubr.f32.gmra.mrb[0].mxu0 %v151
  %v569 = vpop.f32.mrb[0].mxu0
  %v570 = vadd.f32 0.0, %v569
  %v571 = vpop.f32.mrb[0].mxu0
  %572 = vdwg.mxu0
  %573 = vmatprep.subr.mxu0 0.0
  %574 = vmatpush1.msra.mxu0 %v69
  %575 = vmatprep.subr.mxu0 0.0
  %576 = vmatpush1.msra.mxu0 %v70
  %577 = vmatprep.subr.mxu0 0.0
  %578 = vmatpush1.msra.mxu0 %v71
  %579 = vmatprep.subr.mxu0 0.0
  %580 = vmatpush1.msra.mxu0 %v72
  %581 = vmatprep.subr.mxu0 0.0
  %582 = vmatpush1.msra.mxu0 %v73
  %583 = vmatprep.subr.mxu0 0.0
  %584 = vmatpush1.msra.mxu0 %v74
  %585 = vmatprep.subr.mxu0 0.0
  %586 = vmatpush1.msra.mxu0 %v75
  %587 = vmatprep.subr.mxu0 0.0
  %588 = vmatpush1.msra.mxu0 %v76
  %589 = vmatprep.subr.mxu0 0.0
  %590 = vmatpush1.msra.mxu0 0.0
  %591 = vmatprep.subr.mxu0 0.0
  %592 = vmatpush1.msra.mxu0 0.0
  %593 = vmatprep.subr.mxu0 0.0
  %594 = vmatpush1.msra.mxu0 0.0
  %595 = vmatprep.subr.mxu0 0.0
  %596 = vmatpush1.msra.mxu0 0.0
  %597 = vmatprep.subr.mxu0 0.0
  %598 = vmatpush1.msra.mxu0 0.0
  %599 = vmatprep.subr.mxu0 0.0
  %600 = vmatpush1.msra.mxu0 0.0
  %601 = vmatprep.subr.mxu0 0.0
  %602 = vmatpush1.msra.mxu0 0.0
  %603 = vmatprep.subr.mxu0 0.0
  %604 = vmatpush1.msra.mxu0 0.0
  %605 = vmatprep.subr.mxu0 0.0
  %606 = vmatpush1.msra.mxu0 0.0
  %607 = vmatprep.subr.mxu0 0.0
  %608 = vmatpush1.msra.mxu0 0.0
  %609 = vmatprep.subr.mxu0 0.0
  %610 = vmatpush1.msra.mxu0 0.0
  %611 = vmatprep.subr.mxu0 0.0
  %612 = vmatpush1.msra.mxu0 0.0
  %613 = vmatprep.subr.mxu0 0.0
  %614 = vmatpush1.msra.mxu0 0.0
  %615 = vmatprep.subr.mxu0 0.0
  %616 = vmatpush1.msra.mxu0 0.0
  %617 = vmatprep.subr.mxu0 0.0
  %618 = vmatpush1.msra.mxu0 0.0
  %619 = vmatprep.subr.mxu0 0.0
  %620 = vmatpush1.msra.mxu0 0.0
  %621 = vmatprep.subr.mxu0 0.0
  %622 = vmatpush1.msra.mxu0 0.0
  %623 = vmatprep.subr.mxu0 0.0
  %624 = vmatpush1.msra.mxu0 0.0
  %625 = vmatprep.subr.mxu0 0.0
  %626 = vmatpush1.msra.mxu0 0.0
  %627 = vmatprep.subr.mxu0 0.0
  %628 = vmatpush1.msra.mxu0 0.0
  %629 = vmatprep.subr.mxu0 0.0
  %630 = vmatpush1.msra.mxu0 0.0
  %631 = vmatprep.subr.mxu0 0.0
  %632 = vmatpush1.msra.mxu0 0.0
  %633 = vmatprep.subr.mxu0 0.0
  %634 = vmatpush1.msra.mxu0 0.0
  %635 = vmatprep.subr.mxu0 0.0
  %636 = vmatpush1.msra.mxu0 0.0
  %637 = vmatprep.mubr.f32.mxu0 0.0
  %638 = vmatmul.mubr.f32.gmra.mrb[0].mxu0 %v151
  %v639 = vpop.f32.mrb[0].mxu0
  %v640 = vadd.f32 0.0, %v639
  %v641 = vpop.f32.mrb[0].mxu0
  %642 = vdwg.mxu0
  %643 = vmatprep.subr.mxu0 0.0
  %644 = vmatpush1.msra.mxu0 %v77
  %645 = vmatprep.subr.mxu0 0.0
  %646 = vmatpush1.msra.mxu0 %v78
  %647 = vmatprep.subr.mxu0 0.0
  %648 = vmatpush1.msra.mxu0 %v79
  %649 = vmatprep.subr.mxu0 0.0
  %650 = vmatpush1.msra.mxu0 %v80
  %651 = vmatprep.subr.mxu0 0.0
  %652 = vmatpush1.msra.mxu0 %v81
  %653 = vmatprep.subr.mxu0 0.0
  %654 = vmatpush1.msra.mxu0 %v82
  %655 = vmatprep.subr.mxu0 0.0
  %656 = vmatpush1.msra.mxu0 %v83
  %657 = vmatprep.subr.mxu0 0.0
  %658 = vmatpush1.msra.mxu0 %v84
  %659 = vmatprep.subr.mxu0 0.0
  %660 = vmatpush1.msra.mxu0 0.0
  %661 = vmatprep.subr.mxu0 0.0
  %662 = vmatpush1.msra.mxu0 0.0
  %663 = vmatprep.subr.mxu0 0.0
  %664 = vmatpush1.msra.mxu0 0.0
  %665 = vmatprep.subr.mxu0 0.0
  %666 = vmatpush1.msra.mxu0 0.0
  %667 = vmatprep.subr.mxu0 0.0
  %668 = vmatpush1.msra.mxu0 0.0
  %669 = vmatprep.subr.mxu0 0.0
  %670 = vmatpush1.msra.mxu0 0.0
  %671 = vmatprep.subr.mxu0 0.0
  %672 = vmatpush1.msra.mxu0 0.0
  %673 = vmatprep.subr.mxu0 0.0
  %674 = vmatpush1.msra.mxu0 0.0
  %675 = vmatprep.subr.mxu0 0.0
  %676 = vmatpush1.msra.mxu0 0.0
  %677 = vmatprep.subr.mxu0 0.0
  %678 = vmatpush1.msra.mxu0 0.0
  %679 = vmatprep.subr.mxu0 0.0
  %680 = vmatpush1.msra.mxu0 0.0
  %681 = vmatprep.subr.mxu0 0.0
  %682 = vmatpush1.msra.mxu0 0.0
  %683 = vmatprep.subr.mxu0 0.0
  %684 = vmatpush1.msra.mxu0 0.0
  %685 = vmatprep.subr.mxu0 0.0
  %686 = vmatpush1.msra.mxu0 0.0
  %687 = vmatprep.subr.mxu0 0.0
  %688 = vmatpush1.msra.mxu0 0.0
  %689 = vmatprep.subr.mxu0 0.0
  %690 = vmatpush1.msra.mxu0 0.0
  %691 = vmatprep.subr.mxu0 0.0
  %692 = vmatpush1.msra.mxu0 0.0
  %693 = vmatprep.subr.mxu0 0.0
  %694 = vmatpush1.msra.mxu0 0.0
  %695 = vmatprep.subr.mxu0 0.0
  %696 = vmatpush1.msra.mxu0 0.0
  %697 = vmatprep.subr.mxu0 0.0
  %698 = vmatpush1.msra.mxu0 0.0
  %699 = vmatprep.subr.mxu0 0.0
  %700 = vmatpush1.msra.mxu0 0.0
  %701 = vmatprep.subr.mxu0 0.0
  %702 = vmatpush1.msra.mxu0 0.0
  %703 = vmatprep.subr.mxu0 0.0
  %704 = vmatpush1.msra.mxu0 0.0
  %705 = vmatprep.subr.mxu0 0.0
  %706 = vmatpush1.msra.mxu0 0.0
  %707 = vmatprep.mubr.f32.mxu0 0.0
  %708 = vmatmul.mubr.f32.gmra.mrb[0].mxu0 %v151
  %v709 = vpop.f32.mrb[0].mxu0
  %v710 = vadd.f32 0.0, %v709
  %v711 = vpop.f32.mrb[0].mxu0
  %712 = vdwg.mxu0
  %713 = vmatprep.subr.mxu0 0.0
  %714 = vmatpush1.msra.mxu0 %v85
  %715 = vmatprep.subr.mxu0 0.0
  %716 = vmatpush1.msra.mxu0 %v86
  %717 = vmatprep.subr.mxu0 0.0
  %718 = vmatpush1.msra.mxu0 %v87
  %719 = vmatprep.subr.mxu0 0.0
  %720 = vmatpush1.msra.mxu0 %v88
  %721 = vmatprep.subr.mxu0 0.0
  %722 = vmatpush1.msra.mxu0 %v89
  %723 = vmatprep.subr.mxu0 0.0
  %724 = vmatpush1.msra.mxu0 %v90
  %725 = vmatprep.subr.mxu0 0.0
  %726 = vmatpush1.msra.mxu0 %v91
  %727 = vmatprep.subr.mxu0 0.0
  %728 = vmatpush1.msra.mxu0 %v92
  %729 = vmatprep.subr.mxu0 0.0
  %730 = vmatpush1.msra.mxu0 0.0
  %731 = vmatprep.subr.mxu0 0.0
  %732 = vmatpush1.msra.mxu0 0.0
  %733 = vmatprep.subr.mxu0 0.0
  %734 = vmatpush1.msra.mxu0 0.0
  %735 = vmatprep.subr.mxu0 0.0
  %736 = vmatpush1.msra.mxu0 0.0
  %737 = vmatprep.subr.mxu0 0.0
  %738 = vmatpush1.msra.mxu0 0.0
  %739 = vmatprep.subr.mxu0 0.0
  %740 = vmatpush1.msra.mxu0 0.0
  %741 = vmatprep.subr.mxu0 0.0
  %742 = vmatpush1.msra.mxu0 0.0
  %743 = vmatprep.subr.mxu0 0.0
  %744 = vmatpush1.msra.mxu0 0.0
  %745 = vmatprep.subr.mxu0 0.0
  %746 = vmatpush1.msra.mxu0 0.0
  %747 = vmatprep.subr.mxu0 0.0
  %748 = vmatpush1.msra.mxu0 0.0
  %749 = vmatprep.subr.mxu0 0.0
  %750 = vmatpush1.msra.mxu0 0.0
  %751 = vmatprep.subr.mxu0 0.0
  %752 = vmatpush1.msra.mxu0 0.0
  %753 = vmatprep.subr.mxu0 0.0
  %754 = vmatpush1.msra.mxu0 0.0
  %755 = vmatprep.subr.mxu0 0.0
  %756 = vmatpush1.msra.mxu0 0.0
  %757 = vmatprep.subr.mxu0 0.0
  %758 = vmatpush1.msra.mxu0 0.0
  %759 = vmatprep.subr.mxu0 0.0
  %760 = vmatpush1.msra.mxu0 0.0
  %761 = vmatprep.subr.mxu0 0.0
  %762 = vmatpush1.msra.mxu0 0.0
  %763 = vmatprep.subr.mxu0 0.0
  %764 = vmatpush1.msra.mxu0 0.0
  %765 = vmatprep.subr.mxu0 0.0
  %766 = vmatpush1.msra.mxu0 0.0
  %767 = vmatprep.subr.mxu0 0.0
  %768 = vmatpush1.msra.mxu0 0.0
  %769 = vmatprep.subr.mxu0 0.0
  %770 = vmatpush1.msra.mxu0 0.0
  %771 = vmatprep.subr.mxu0 0.0
  %772 = vmatpush1.msra.mxu0 0.0
  %773 = vmatprep.subr.mxu0 0.0
  %774 = vmatpush1.msra.mxu0 0.0
  %775 = vmatprep.subr.mxu0 0.0
  %776 = vmatpush1.msra.mxu0 0.0
  %777 = vmatprep.mubr.f32.mxu0 0.0
  %778 = vmatmul.mubr.f32.gmra.mrb[0].mxu0 %v151
  %v779 = vpop.f32.mrb[0].mxu0
  %v780 = vadd.f32 0.0, %v779
  %v781 = vpop.f32.mrb[0].mxu0
  %782 = vdwg.mxu0
  %783 = vmatprep.subr.mxu0 0.0
  %784 = vmatpush1.msra.mxu0 %v93
  %785 = vmatprep.subr.mxu0 0.0
  %786 = vmatpush1.msra.mxu0 %v94
  %787 = vmatprep.subr.mxu0 0.0
  %788 = vmatpush1.msra.mxu0 %v95
  %789 = vmatprep.subr.mxu0 0.0
  %790 = vmatpush1.msra.mxu0 %v96
  %791 = vmatprep.subr.mxu0 0.0
  %792 = vmatpush1.msra.mxu0 %v97
  %793 = vmatprep.subr.mxu0 0.0
  %794 = vmatpush1.msra.mxu0 %v98
  %795 = vmatprep.subr.mxu0 0.0
  %796 = vmatpush1.msra.mxu0 %v99
  %797 = vmatprep.subr.mxu0 0.0
  %798 = vmatpush1.msra.mxu0 %v100
  %799 = vmatprep.subr.mxu0 0.0
  %800 = vmatpush1.msra.mxu0 0.0
  %801 = vmatprep.subr.mxu0 0.0
  %802 = vmatpush1.msra.mxu0 0.0
  %803 = vmatprep.subr.mxu0 0.0
  %804 = vmatpush1.msra.mxu0 0.0
  %805 = vmatprep.subr.mxu0 0.0
  %806 = vmatpush1.msra.mxu0 0.0
  %807 = vmatprep.subr.mxu0 0.0
  %808 = vmatpush1.msra.mxu0 0.0
  %809 = vmatprep.subr.mxu0 0.0
  %810 = vmatpush1.msra.mxu0 0.0
  %811 = vmatprep.subr.mxu0 0.0
  %812 = vmatpush1.msra.mxu0 0.0
  %813 = vmatprep.subr.mxu0 0.0
  %814 = vmatpush1.msra.mxu0 0.0
  %815 = vmatprep.subr.mxu0 0.0
  %816 = vmatpush1.msra.mxu0 0.0
  %817 = vmatprep.subr.mxu0 0.0
  %818 = vmatpush1.msra.mxu0 0.0
  %819 = vmatprep.subr.mxu0 0.0
  %820 = vmatpush1.msra.mxu0 0.0
  %821 = vmatprep.subr.mxu0 0.0
  %822 = vmatpush1.msra.mxu0 0.0
  %823 = vmatprep.subr.mxu0 0.0
  %824 = vmatpush1.msra.mxu0 0.0
  %825 = vmatprep.subr.mxu0 0.0
  %826 = vmatpush1.msra.mxu0 0.0
  %827 = vmatprep.subr.mxu0 0.0
  %828 = vmatpush1.msra.mxu0 0.0
  %829 = vmatprep.subr.mxu0 0.0
  %830 = vmatpush1.msra.mxu0 0.0
  %831 = vmatprep.subr.mxu0 0.0
  %832 = vmatpush1.msra.mxu0 0.0
  %833 = vmatprep.subr.mxu0 0.0
  %834 = vmatpush1.msra.mxu0 0.0
  %835 = vmatprep.subr.mxu0 0.0
  %836 = vmatpush1.msra.mxu0 0.0
  %837 = vmatprep.subr.mxu0 0.0
  %838 = vmatpush1.msra.mxu0 0.0
  %839 = vmatprep.subr.mxu0 0.0
  %840 = vmatpush1.msra.mxu0 0.0
  %841 = vmatprep.subr.mxu0 0.0
  %842 = vmatpush1.msra.mxu0 0.0
  %843 = vmatprep.subr.mxu0 0.0
  %844 = vmatpush1.msra.mxu0 0.0
  %845 = vmatprep.subr.mxu0 0.0
  %846 = vmatpush1.msra.mxu0 0.0
  %847 = vmatprep.mubr.f32.mxu0 0.0
  %848 = vmatmul.mubr.f32.gmra.mrb[0].mxu0 %v151
  %v849 = vpop.f32.mrb[0].mxu0
  %v850 = vadd.f32 0.0, %v849
  %v851 = vpop.f32.mrb[0].mxu0
  %852 = vdwg.mxu0
  %853 = vmatprep.subr.mxu0 0.0
  %854 = vmatpush1.msra.mxu0 %v101
  %855 = vmatprep.subr.mxu0 0.0
  %856 = vmatpush1.msra.mxu0 %v102
  %857 = vmatprep.subr.mxu0 0.0
  %858 = vmatpush1.msra.mxu0 %v103
  %859 = vmatprep.subr.mxu0 0.0
  %860 = vmatpush1.msra.mxu0 %v104
  %861 = vmatprep.subr.mxu0 0.0
  %862 = vmatpush1.msra.mxu0 %v105
  %863 = vmatprep.subr.mxu0 0.0
  %864 = vmatpush1.msra.mxu0 %v106
  %865 = vmatprep.subr.mxu0 0.0
  %866 = vmatpush1.msra.mxu0 %v107
  %867 = vmatprep.subr.mxu0 0.0
  %868 = vmatpush1.msra.mxu0 %v108
  %869 = vmatprep.subr.mxu0 0.0
  %870 = vmatpush1.msra.mxu0 0.0
  %871 = vmatprep.subr.mxu0 0.0
  %872 = vmatpush1.msra.mxu0 0.0
  %873 = vmatprep.subr.mxu0 0.0
  %874 = vmatpush1.msra.mxu0 0.0
  %875 = vmatprep.subr.mxu0 0.0
  %876 = vmatpush1.msra.mxu0 0.0
  %877 = vmatprep.subr.mxu0 0.0
  %878 = vmatpush1.msra.mxu0 0.0
  %879 = vmatprep.subr.mxu0 0.0
  %880 = vmatpush1.msra.mxu0 0.0
  %881 = vmatprep.subr.mxu0 0.0
  %882 = vmatpush1.msra.mxu0 0.0
  %883 = vmatprep.subr.mxu0 0.0
  %884 = vmatpush1.msra.mxu0 0.0
  %885 = vmatprep.subr.mxu0 0.0
  %886 = vmatpush1.msra.mxu0 0.0
  %887 = vmatprep.subr.mxu0 0.0
  %888 = vmatpush1.msra.mxu0 0.0
  %889 = vmatprep.subr.mxu0 0.0
  %890 = vmatpush1.msra.mxu0 0.0
  %891 = vmatprep.subr.mxu0 0.0
  %892 = vmatpush1.msra.mxu0 0.0
  %893 = vmatprep.subr.mxu0 0.0
  %894 = vmatpush1.msra.mxu0 0.0
  %895 = vmatprep.subr.mxu0 0.0
  %896 = vmatpush1.msra.mxu0 0.0
  %897 = vmatprep.subr.mxu0 0.0
  %898 = vmatpush1.msra.mxu0 0.0
  %899 = vmatprep.subr.mxu0 0.0
  %900 = vmatpush1.msra.mxu0 0.0
  %901 = vmatprep.subr.mxu0 0.0
  %902 = vmatpush1.msra.mxu0 0.0
  %903 = vmatprep.subr.mxu0 0.0
  %904 = vmatpush1.msra.mxu0 0.0
  %905 = vmatprep.subr.mxu0 0.0
  %906 = vmatpush1.msra.mxu0 0.0
  %907 = vmatprep.subr.mxu0 0.0
  %908 = vmatpush1.msra.mxu0 0.0
  %909 = vmatprep.subr.mxu0 0.0
  %910 = vmatpush1.msra.mxu0 0.0
  %911 = vmatprep.subr.mxu0 0.0
  %912 = vmatpush1.msra.mxu0 0.0
  %913 = vmatprep.subr.mxu0 0.0
  %914 = vmatpush1.msra.mxu0 0.0
  %915 = vmatprep.subr.mxu0 0.0
  %916 = vmatpush1.msra.mxu0 0.0
  %917 = vmatprep.mubr.f32.mxu0 0.0
  %918 = vmatmul.mubr.f32.gmra.mrb[0].mxu0 %v151
  %v919 = vpop.f32.mrb[0].mxu0
  %v920 = vadd.f32 0.0, %v919
  %v921 = vpop.f32.mrb[0].mxu0
  %922 = vdwg.mxu0
  %923 = vmatprep.subr.mxu0 0.0
  %924 = vmatpush1.msra.mxu0 %v109
  %925 = vmatprep.subr.mxu0 0.0
  %926 = vmatpush1.msra.mxu0 %v110
  %927 = vmatprep.subr.mxu0 0.0
  %928 = vmatpush1.msra.mxu0 %v111
  %929 = vmatprep.subr.mxu0 0.0
  %930 = vmatpush1.msra.mxu0 %v112
  %931 = vmatprep.subr.mxu0 0.0
  %932 = vmatpush1.msra.mxu0 %v113
  %933 = vmatprep.subr.mxu0 0.0
  %934 = vmatpush1.msra.mxu0 %v114
  %935 = vmatprep.subr.mxu0 0.0
  %936 = vmatpush1.msra.mxu0 %v115
  %937 = vmatprep.subr.mxu0 0.0
  %938 = vmatpush1.msra.mxu0 %v116
  %939 = vmatprep.subr.mxu0 0.0
  %940 = vmatpush1.msra.mxu0 0.0
  %941 = vmatprep.subr.mxu0 0.0
  %942 = vmatpush1.msra.mxu0 0.0
  %943 = vmatprep.subr.mxu0 0.0
  %944 = vmatpush1.msra.mxu0 0.0
  %945 = vmatprep.subr.mxu0 0.0
  %946 = vmatpush1.msra.mxu0 0.0
  %947 = vmatprep.subr.mxu0 0.0
  %948 = vmatpush1.msra.mxu0 0.0
  %949 = vmatprep.subr.mxu0 0.0
  %950 = vmatpush1.msra.mxu0 0.0
  %951 = vmatprep.subr.mxu0 0.0
  %952 = vmatpush1.msra.mxu0 0.0
  %953 = vmatprep.subr.mxu0 0.0
  %954 = vmatpush1.msra.mxu0 0.0
  %955 = vmatprep.subr.mxu0 0.0
  %956 = vmatpush1.msra.mxu0 0.0
  %957 = vmatprep.subr.mxu0 0.0
  %958 = vmatpush1.msra.mxu0 0.0
  %959 = vmatprep.subr.mxu0 0.0
  %960 = vmatpush1.msra.mxu0 0.0
  %961 = vmatprep.subr.mxu0 0.0
  %962 = vmatpush1.msra.mxu0 0.0
  %963 = vmatprep.subr.mxu0 0.0
  %964 = vmatpush1.msra.mxu0 0.0
  %965 = vmatprep.subr.mxu0 0.0
  %966 = vmatpush1.msra.mxu0 0.0
  %967 = vmatprep.subr.mxu0 0.0
  %968 = vmatpush1.msra.mxu0 0.0
  %969 = vmatprep.subr.mxu0 0.0
  %970 = vmatpush1.msra.mxu0 0.0
  %971 = vmatprep.subr.mxu0 0.0
  %972 = vmatpush1.msra.mxu0 0.0
  %973 = vmatprep.subr.mxu0 0.0
  %974 = vmatpush1.msra.mxu0 0.0
  %975 = vmatprep.subr.mxu0 0.0
  %976 = vmatpush1.msra.mxu0 0.0
  %977 = vmatprep.subr.mxu0 0.0
  %978 = vmatpush1.msra.mxu0 0.0
  %979 = vmatprep.subr.mxu0 0.0
  %980 = vmatpush1.msra.mxu0 0.0
  %981 = vmatprep.subr.mxu0 0.0
  %982 = vmatpush1.msra.mxu0 0.0
  %983 = vmatprep.subr.mxu0 0.0
  %984 = vmatpush1.msra.mxu0 0.0
  %985 = vmatprep.subr.mxu0 0.0
  %986 = vmatpush1.msra.mxu0 0.0
  %987 = vmatprep.mubr.f32.mxu0 0.0
  %988 = vmatmul.mubr.f32.gmra.mrb[0].mxu0 %v151
  %v989 = vpop.f32.mrb[0].mxu0
  %v990 = vadd.f32 0.0, %v989
  %v991 = vpop.f32.mrb[0].mxu0
  %992 = vdwg.mxu0
  %993 = vmatprep.subr.mxu0 0.0
  %994 = vmatpush1.msra.mxu0 %v117
  %995 = vmatprep.subr.mxu0 0.0
  %996 = vmatpush1.msra.mxu0 %v118
  %997 = vmatprep.subr.mxu0 0.0
  %998 = vmatpush1.msra.mxu0 %v119
  %999 = vmatprep.subr.mxu0 0.0
  %1000 = vmatpush1.msra.mxu0 %v120
  %1001 = vmatprep.subr.mxu0 0.0
  %1002 = vmatpush1.msra.mxu0 %v121
  %1003 = vmatprep.subr.mxu0 0.0
  %1004 = vmatpush1.msra.mxu0 %v122
  %1005 = vmatprep.subr.mxu0 0.0
  %1006 = vmatpush1.msra.mxu0 %v123
  %1007 = vmatprep.subr.mxu0 0.0
  %1008 = vmatpush1.msra.mxu0 %v124
  %1009 = vmatprep.subr.mxu0 0.0
  %1010 = vmatpush1.msra.mxu0 0.0
  %1011 = vmatprep.subr.mxu0 0.0
  %1012 = vmatpush1.msra.mxu0 0.0
  %1013 = vmatprep.subr.mxu0 0.0
  %1014 = vmatpush1.msra.mxu0 0.0
  %1015 = vmatprep.subr.mxu0 0.0
  %1016 = vmatpush1.msra.mxu0 0.0
  %1017 = vmatprep.subr.mxu0 0.0
  %1018 = vmatpush1.msra.mxu0 0.0
  %1019 = vmatprep.subr.mxu0 0.0
  %1020 = vmatpush1.msra.mxu0 0.0
  %1021 = vmatprep.subr.mxu0 0.0
  %1022 = vmatpush1.msra.mxu0 0.0
  %1023 = vmatprep.subr.mxu0 0.0
  %1024 = vmatpush1.msra.mxu0 0.0
  %1025 = vmatprep.subr.mxu0 0.0
  %1026 = vmatpush1.msra.mxu0 0.0
  %1027 = vmatprep.subr.mxu0 0.0
  %1028 = vmatpush1.msra.mxu0 0.0
  %1029 = vmatprep.subr.mxu0 0.0
  %1030 = vmatpush1.msra.mxu0 0.0
  %1031 = vmatprep.subr.mxu0 0.0
  %1032 = vmatpush1.msra.mxu0 0.0
  %1033 = vmatprep.subr.mxu0 0.0
  %1034 = vmatpush1.msra.mxu0 0.0
  %1035 = vmatprep.subr.mxu0 0.0
  %1036 = vmatpush1.msra.mxu0 0.0
  %1037 = vmatprep.subr.mxu0 0.0
  %1038 = vmatpush1.msra.mxu0 0.0
  %1039 = vmatprep.subr.mxu0 0.0
  %1040 = vmatpush1.msra.mxu0 0.0
  %1041 = vmatprep.subr.mxu0 0.0
  %1042 = vmatpush1.msra.mxu0 0.0
  %1043 = vmatprep.subr.mxu0 0.0
  %1044 = vmatpush1.msra.mxu0 0.0
  %1045 = vmatprep.subr.mxu0 0.0
  %1046 = vmatpush1.msra.mxu0 0.0
  %1047 = vmatprep.subr.mxu0 0.0
  %1048 = vmatpush1.msra.mxu0 0.0
  %1049 = vmatprep.subr.mxu0 0.0
  %1050 = vmatpush1.msra.mxu0 0.0
  %1051 = vmatprep.subr.mxu0 0.0
  %1052 = vmatpush1.msra.mxu0 0.0
  %1053 = vmatprep.subr.mxu0 0.0
  %1054 = vmatpush1.msra.mxu0 0.0
  %1055 = vmatprep.subr.mxu0 0.0
  %1056 = vmatpush1.msra.mxu0 0.0
  %1057 = vmatprep.mubr.f32.mxu0 0.0
  %1058 = vmatmul.mubr.f32.gmra.mrb[0].mxu0 %v151
  %v1059 = vpop.f32.mrb[0].mxu0
  %v1060 = vadd.f32 0.0, %v1059
  %v1061 = vpop.f32.mrb[0].mxu0
  %1062 = vdwg.mxu0
  %1063 = vmatprep.subr.mxu0 0.0
  %1064 = vmatpush1.msra.mxu0 %v125
  %1065 = vmatprep.subr.mxu0 0.0
  %1066 = vmatpush1.msra.mxu0 %v126
  %1067 = vmatprep.subr.mxu0 0.0
  %1068 = vmatpush1.msra.mxu0 %v127
  %1069 = vmatprep.subr.mxu0 0.0
  %1070 = vmatpush1.msra.mxu0 %v128
  %1071 = vmatprep.subr.mxu0 0.0
  %1072 = vmatpush1.msra.mxu0 %v129
  %1073 = vmatprep.subr.mxu0 0.0
  %1074 = vmatpush1.msra.mxu0 %v130
  %1075 = vmatprep.subr.mxu0 0.0
  %1076 = vmatpush1.msra.mxu0 %v131
  %1077 = vmatprep.subr.mxu0 0.0
  %1078 = vmatpush1.msra.mxu0 %v132
  %1079 = vmatprep.subr.mxu0 0.0
  %1080 = vmatpush1.msra.mxu0 0.0
  %1081 = vmatprep.subr.mxu0 0.0
  %1082 = vmatpush1.msra.mxu0 0.0
  %1083 = vmatprep.subr.mxu0 0.0
  %1084 = vmatpush1.msra.mxu0 0.0
  %1085 = vmatprep.subr.mxu0 0.0
  %1086 = vmatpush1.msra.mxu0 0.0
  %1087 = vmatprep.subr.mxu0 0.0
  %1088 = vmatpush1.msra.mxu0 0.0
  %1089 = vmatprep.subr.mxu0 0.0
  %1090 = vmatpush1.msra.mxu0 0.0
  %1091 = vmatprep.subr.mxu0 0.0
  %1092 = vmatpush1.msra.mxu0 0.0
  %1093 = vmatprep.subr.mxu0 0.0
  %1094 = vmatpush1.msra.mxu0 0.0
  %1095 = vmatprep.subr.mxu0 0.0
  %1096 = vmatpush1.msra.mxu0 0.0
  %1097 = vmatprep.subr.mxu0 0.0
  %1098 = vmatpush1.msra.mxu0 0.0
  %1099 = vmatprep.subr.mxu0 0.0
  %1100 = vmatpush1.msra.mxu0 0.0
  %1101 = vmatprep.subr.mxu0 0.0
  %1102 = vmatpush1.msra.mxu0 0.0
  %1103 = vmatprep.subr.mxu0 0.0
  %1104 = vmatpush1.msra.mxu0 0.0
  %1105 = vmatprep.subr.mxu0 0.0
  %1106 = vmatpush1.msra.mxu0 0.0
  %1107 = vmatprep.subr.mxu0 0.0
  %1108 = vmatpush1.msra.mxu0 0.0
  %1109 = vmatprep.subr.mxu0 0.0
  %1110 = vmatpush1.msra.mxu0 0.0
  %1111 = vmatprep.subr.mxu0 0.0
  %1112 = vmatpush1.msra.mxu0 0.0
  %1113 = vmatprep.subr.mxu0 0.0
  %1114 = vmatpush1.msra.mxu0 0.0
  %1115 = vmatprep.subr.mxu0 0.0
  %1116 = vmatpush1.msra.mxu0 0.0
  %1117 = vmatprep.subr.mxu0 0.0
  %1118 = vmatpush1.msra.mxu0 0.0
  %1119 = vmatprep.subr.mxu0 0.0
  %1120 = vmatpush1.msra.mxu0 0.0
  %1121 = vmatprep.subr.mxu0 0.0
  %1122 = vmatpush1.msra.mxu0 0.0
  %1123 = vmatprep.subr.mxu0 0.0
  %1124 = vmatpush1.msra.mxu0 0.0
  %1125 = vmatprep.subr.mxu0 0.0
  %1126 = vmatpush1.msra.mxu0 0.0
  %1127 = vmatprep.mubr.f32.mxu0 0.0
  %1128 = vmatmul.mubr.f32.gmra.mrb[0].mxu0 %v151
  %v1129 = vpop.f32.mrb[0].mxu0
  %v1130 = vadd.f32 0.0, %v1129
  %v1131 = vpop.f32.mrb[0].mxu0
  %1132 = vdwg.mxu0
  %1133 = vmatprep.subr.mxu0 0.0
  %1134 = vmatpush1.msra.mxu0 %v133
  %1135 = vmatprep.subr.mxu0 0.0
  %1136 = vmatpush1.msra.mxu0 %v134
  %1137 = vmatprep.subr.mxu0 0.0
  %1138 = vmatpush1.msra.mxu0 %v135
  %1139 = vmatprep.subr.mxu0 0.0
  %1140 = vmatpush1.msra.mxu0 %v136
  %1141 = vmatprep.subr.mxu0 0.0
  %1142 = vmatpush1.msra.mxu0 %v137
  %1143 = vmatprep.subr.mxu0 0.0
  %1144 = vmatpush1.msra.mxu0 %v138
  %1145 = vmatprep.subr.mxu0 0.0
  %1146 = vmatpush1.msra.mxu0 %v139
  %1147 = vmatprep.subr.mxu0 0.0
  %1148 = vmatpush1.msra.mxu0 %v140
  %1149 = vmatprep.subr.mxu0 0.0
  %1150 = vmatpush1.msra.mxu0 0.0
  %1151 = vmatprep.subr.mxu0 0.0
  %1152 = vmatpush1.msra.mxu0 0.0
  %1153 = vmatprep.subr.mxu0 0.0
  %1154 = vmatpush1.msra.mxu0 0.0
  %1155 = vmatprep.subr.mxu0 0.0
  %1156 = vmatpush1.msra.mxu0 0.0
  %1157 = vmatprep.subr.mxu0 0.0
  %1158 = vmatpush1.msra.mxu0 0.0
  %1159 = vmatprep.subr.mxu0 0.0
  %1160 = vmatpush1.msra.mxu0 0.0
  %1161 = vmatprep.subr.mxu0 0.0
  %1162 = vmatpush1.msra.mxu0 0.0
  %1163 = vmatprep.subr.mxu0 0.0
  %1164 = vmatpush1.msra.mxu0 0.0
  %1165 = vmatprep.subr.mxu0 0.0
  %1166 = vmatpush1.msra.mxu0 0.0
  %1167 = vmatprep.subr.mxu0 0.0
  %1168 = vmatpush1.msra.mxu0 0.0
  %1169 = vmatprep.subr.mxu0 0.0
  %1170 = vmatpush1.msra.mxu0 0.0
  %1171 = vmatprep.subr.mxu0 0.0
  %1172 = vmatpush1.msra.mxu0 0.0
  %1173 = vmatprep.subr.mxu0 0.0
  %1174 = vmatpush1.msra.mxu0 0.0
  %1175 = vmatprep.subr.mxu0 0.0
  %1176 = vmatpush1.msra.mxu0 0.0
  %1177 = vmatprep.subr.mxu0 0.0
  %1178 = vmatpush1.msra.mxu0 0.0
  %1179 = vmatprep.subr.mxu0 0.0
  %1180 = vmatpush1.msra.mxu0 0.0
  %1181 = vmatprep.subr.mxu0 0.0
  %1182 = vmatpush1.msra.mxu0 0.0
  %1183 = vmatprep.subr.mxu0 0.0
  %1184 = vmatpush1.msra.mxu0 0.0
  %1185 = vmatprep.subr.mxu0 0.0
  %1186 = vmatpush1.msra.mxu0 0.0
  %1187 = vmatprep.subr.mxu0 0.0
  %1188 = vmatpush1.msra.mxu0 0.0
  %1189 = vmatprep.subr.mxu0 0.0
  %1190 = vmatpush1.msra.mxu0 0.0
  %1191 = vmatprep.subr.mxu0 0.0
  %1192 = vmatpush1.msra.mxu0 0.0
  %1193 = vmatprep.subr.mxu0 0.0
  %1194 = vmatpush1.msra.mxu0 0.0
  %1195 = vmatprep.subr.mxu0 0.0
  %1196 = vmatpush1.msra.mxu0 0.0
  %1197 = vmatprep.mubr.f32.mxu0 0.0
  %1198 = vmatmul.mubr.f32.gmra.mrb[0].mxu0 %v151
  %v1199 = vpop.f32.mrb[0].mxu0
  %v1200 = vadd.f32 0.0, %v1199
  %v1201 = vpop.f32.mrb[0].mxu0
  %1202 = vdwg.mxu0
  %1203 = vmatprep.subr.mxu0 0.0
  %1204 = vmatpush1.msra.mxu0 %v141
  %1205 = vmatprep.subr.mxu0 0.0
  %1206 = vmatpush1.msra.mxu0 %v142
  %1207 = vmatprep.subr.mxu0 0.0
  %1208 = vmatpush1.msra.mxu0 %v143
  %1209 = vmatprep.subr.mxu0 0.0
  %1210 = vmatpush1.msra.mxu0 %v144
  %1211 = vmatprep.subr.mxu0 0.0
  %1212 = vmatpush1.msra.mxu0 %v145
  %1213 = vmatprep.subr.mxu0 0.0
  %1214 = vmatpush1.msra.mxu0 %v146
  %1215 = vmatprep.subr.mxu0 0.0
  %1216 = vmatpush1.msra.mxu0 %v147
  %1217 = vmatprep.subr.mxu0 0.0
  %1218 = vmatpush1.msra.mxu0 %v148
  %1219 = vmatprep.subr.mxu0 0.0
  %1220 = vmatpush1.msra.mxu0 0.0
  %1221 = vmatprep.subr.mxu0 0.0
  %1222 = vmatpush1.msra.mxu0 0.0
  %1223 = vmatprep.subr.mxu0 0.0
  %1224 = vmatpush1.msra.mxu0 0.0
  %1225 = vmatprep.subr.mxu0 0.0
  %1226 = vmatpush1.msra.mxu0 0.0
  %1227 = vmatprep.subr.mxu0 0.0
  %1228 = vmatpush1.msra.mxu0 0.0
  %1229 = vmatprep.subr.mxu0 0.0
  %1230 = vmatpush1.msra.mxu0 0.0
  %1231 = vmatprep.subr.mxu0 0.0
  %1232 = vmatpush1.msra.mxu0 0.0
  %1233 = vmatprep.subr.mxu0 0.0
  %1234 = vmatpush1.msra.mxu0 0.0
  %1235 = vmatprep.subr.mxu0 0.0
  %1236 = vmatpush1.msra.mxu0 0.0
  %1237 = vmatprep.subr.mxu0 0.0
  %1238 = vmatpush1.msra.mxu0 0.0
  %1239 = vmatprep.subr.mxu0 0.0
  %1240 = vmatpush1.msra.mxu0 0.0
  %1241 = vmatprep.subr.mxu0 0.0
  %1242 = vmatpush1.msra.mxu0 0.0
  %1243 = vmatprep.subr.mxu0 0.0
  %1244 = vmatpush1.msra.mxu0 0.0
  %1245 = vmatprep.subr.mxu0 0.0
  %1246 = vmatpush1.msra.mxu0 0.0
  %1247 = vmatprep.subr.mxu0 0.0
  %1248 = vmatpush1.msra.mxu0 0.0
  %1249 = vmatprep.subr.mxu0 0.0
  %1250 = vmatpush1.msra.mxu0 0.0
  %1251 = vmatprep.subr.mxu0 0.0
  %1252 = vmatpush1.msra.mxu0 0.0
  %1253 = vmatprep.subr.mxu0 0.0
  %1254 = vmatpush1.msra.mxu0 0.0
  %1255 = vmatprep.subr.mxu0 0.0
  %1256 = vmatpush1.msra.mxu0 0.0
  %1257 = vmatprep.subr.mxu0 0.0
  %1258 = vmatpush1.msra.mxu0 0.0
  %1259 = vmatprep.subr.mxu0 0.0
  %1260 = vmatpush1.msra.mxu0 0.0
  %1261 = vmatprep.subr.mxu0 0.0
  %1262 = vmatpush1.msra.mxu0 0.0
  %1263 = vmatprep.subr.mxu0 0.0
  %1264 = vmatpush1.msra.mxu0 0.0
  %1265 = vmatprep.subr.mxu0 0.0
  %1266 = vmatpush1.msra.mxu0 0.0
  %1267 = vmatprep.mubr.f32.mxu0 0.0
  %1268 = vmatmul.mubr.f32.gmra.mrb[0].mxu0 %v151
  %v1269 = vpop.f32.mrb[0].mxu0
  %v1270 = vadd.f32 0.0, %v1269
  %v1271 = vpop.f32.mrb[0].mxu0
  %1272 = vdwg.mxu0
  %v1273 = vmul.f32 %v220, 0.125
  %v1274 = vmul.f32 %v290, 0.125
  %v1275 = vmul.f32 %v360, 0.125
  %v1276 = vmul.f32 %v430, 0.125
  %v1277 = vmul.f32 %v500, 0.125
  %v1278 = vmul.f32 %v570, 0.125
  %v1279 = vmul.f32 %v640, 0.125
  %v1280 = vmul.f32 %v710, 0.125
  %v1281 = vmul.f32 %v780, 0.125
  %v1282 = vmul.f32 %v850, 0.125
  %v1283 = vmul.f32 %v920, 0.125
  %v1284 = vmul.f32 %v990, 0.125
  %v1285 = vmul.f32 %v1060, 0.125
  %v1286 = vmul.f32 %v1130, 0.125
  %v1287 = vmul.f32 %v1200, 0.125
  %v1288 = vmul.f32 %v1270, 0.125
  %v1289 = vld [vmem:[%s1] sm:$0xff]
  %v1290 = vld [vmem:[%s1 + $0x8] sm:$0xff]
  %v1291 = vld [vmem:[%s1 + $0x10] sm:$0xff]
  %v1292 = vld [vmem:[%s1 + $0x18] sm:$0xff]
  %v1293 = vld [vmem:[%s1 + $0x20] sm:$0xff]
  %v1294 = vld [vmem:[%s1 + $0x28] sm:$0xff]
  %v1295 = vld [vmem:[%s1 + $0x30] sm:$0xff]
  %v1296 = vld [vmem:[%s1 + $0x38] sm:$0xff]
  %v1297 = vld [vmem:[%s1 + $0x40] sm:$0xff]
  %v1298 = vld [vmem:[%s1 + $0x48] sm:$0xff]
  %v1299 = vld [vmem:[%s1 + $0x50] sm:$0xff]
  %v1300 = vld [vmem:[%s1 + $0x58] sm:$0xff]
  %v1301 = vld [vmem:[%s1 + $0x60] sm:$0xff]
  %v1302 = vld [vmem:[%s1 + $0x68] sm:$0xff]
  %v1303 = vld [vmem:[%s1 + $0x70] sm:$0xff]
  %v1304 = vld [vmem:[%s1 + $0x78] sm:$0xff]
  %v1305 = vld [vmem:[%s1 + $0x80] sm:$0xff]
  %v1306 = vld [vmem:[%s1 + $0x88] sm:$0xff]
  %v1307 = vld [vmem:[%s1 + $0x90] sm:$0xff]
  %v1308 = vld [vmem:[%s1 + $0x98] sm:$0xff]
  %v1309 = vld [vmem:[%s1 + $0xa0] sm:$0xff]
  %v1310 = vld [vmem:[%s1 + $0xa8] sm:$0xff]
  %v1311 = vld [vmem:[%s1 + $0xb0] sm:$0xff]
  %v1312 = vld [vmem:[%s1 + $0xb8] sm:$0xff]
  %v1313 = vld [vmem:[%s1 + $0xc0] sm:$0xff]
  %v1314 = vld [vmem:[%s1 + $0xc8] sm:$0xff]
  %v1315 = vld [vmem:[%s1 + $0xd0] sm:$0xff]
  %v1316 = vld [vmem:[%s1 + $0xd8] sm:$0xff]
  %v1317 = vld [vmem:[%s1 + $0xe0] sm:$0xff]
  %v1318 = vld [vmem:[%s1 + $0xe8] sm:$0xff]
  %v1319 = vld [vmem:[%s1 + $0xf0] sm:$0xff]
  %v1320 = vld [vmem:[%s1 + $0xf8] sm:$0xff]
  %v1321 = vld [vmem:[%s1 + $0x100] sm:$0xff]
  %v1322 = vld [vmem:[%s1 + $0x108] sm:$0xff]
  %v1323 = vld [vmem:[%s1 + $0x110] sm:$0xff]
  %v1324 = vld [vmem:[%s1 + $0x118] sm:$0xff]
  %v1325 = vld [vmem:[%s1 + $0x120] sm:$0xff]
  %v1326 = vld [vmem:[%s1 + $0x128] sm:$0xff]
  %v1327 = vld [vmem:[%s1 + $0x130] sm:$0xff]
  %v1328 = vld [vmem:[%s1 + $0x138] sm:$0xff]
  %v1329 = vld [vmem:[%s1 + $0x140] sm:$0xff]
  %v1330 = vld [vmem:[%s1 + $0x148] sm:$0xff]
  %v1331 = vld [vmem:[%s1 + $0x150] sm:$0xff]
  %v1332 = vld [vmem:[%s1 + $0x158] sm:$0xff]
  %v1333 = vld [vmem:[%s1 + $0x160] sm:$0xff]
  %v1334 = vld [vmem:[%s1 + $0x168] sm:$0xff]
  %v1335 = vld [vmem:[%s1 + $0x170] sm:$0xff]
  %v1336 = vld [vmem:[%s1 + $0x178] sm:$0xff]
  %v1337 = vld [vmem:[%s1 + $0x180] sm:$0xff]
  %v1338 = vld [vmem:[%s1 + $0x188] sm:$0xff]
  %v1339 = vld [vmem:[%s1 + $0x190] sm:$0xff]
  %v1340 = vld [vmem:[%s1 + $0x198] sm:$0xff]
  %v1341 = vld [vmem:[%s1 + $0x1a0] sm:$0xff]
  %v1342 = vld [vmem:[%s1 + $0x1a8] sm:$0xff]
  %v1343 = vld [vmem:[%s1 + $0x1b0] sm:$0xff]
  %v1344 = vld [vmem:[%s1 + $0x1b8] sm:$0xff]
  %v1345 = vld [vmem:[%s1 + $0x1c0] sm:$0xff]
  %v1346 = vld [vmem:[%s1 + $0x1c8] sm:$0xff]
  %v1347 = vld [vmem:[%s1 + $0x1d0] sm:$0xff]
  %v1348 = vld [vmem:[%s1 + $0x1d8] sm:$0xff]
  %v1349 = vld [vmem:[%s1 + $0x1e0] sm:$0xff]
  %v1350 = vld [vmem:[%s1 + $0x1e8] sm:$0xff]
  %v1351 = vld [vmem:[%s1 + $0x1f0] sm:$0xff]
  %v1352 = vld [vmem:[%s1 + $0x1f8] sm:$0xff]
  %v1353 = vld [vmem:[%s1 + $0x200] sm:$0xff]
  %v1354 = vld [vmem:[%s1 + $0x208] sm:$0xff]
  %v1355 = vld [vmem:[%s1 + $0x210] sm:$0xff]
  %v1356 = vld [vmem:[%s1 + $0x218] sm:$0xff]
  %v1357 = vld [vmem:[%s1 + $0x220] sm:$0xff]
  %v1358 = vld [vmem:[%s1 + $0x228] sm:$0xff]
  %v1359 = vld [vmem:[%s1 + $0x230] sm:$0xff]
  %v1360 = vld [vmem:[%s1 + $0x238] sm:$0xff]
  %v1361 = vld [vmem:[%s1 + $0x240] sm:$0xff]
  %v1362 = vld [vmem:[%s1 + $0x248] sm:$0xff]
  %v1363 = vld [vmem:[%s1 + $0x250] sm:$0xff]
  %v1364 = vld [vmem:[%s1 + $0x258] sm:$0xff]
  %v1365 = vld [vmem:[%s1 + $0x260] sm:$0xff]
  %v1366 = vld [vmem:[%s1 + $0x268] sm:$0xff]
  %v1367 = vld [vmem:[%s1 + $0x270] sm:$0xff]
  %v1368 = vld [vmem:[%s1 + $0x278] sm:$0xff]
  %v1369 = vld [vmem:[%s1 + $0x280] sm:$0xff]
  %v1370 = vld [vmem:[%s1 + $0x288] sm:$0xff]
  %v1371 = vld [vmem:[%s1 + $0x290] sm:$0xff]
  %v1372 = vld [vmem:[%s1 + $0x298] sm:$0xff]
  %v1373 = vld [vmem:[%s1 + $0x2a0] sm:$0xff]
  %v1374 = vld [vmem:[%s1 + $0x2a8] sm:$0xff]
  %v1375 = vld [vmem:[%s1 + $0x2b0] sm:$0xff]
  %v1376 = vld [vmem:[%s1 + $0x2b8] sm:$0xff]
  %v1377 = vld [vmem:[%s1 + $0x2c0] sm:$0xff]
  %v1378 = vld [vmem:[%s1 + $0x2c8] sm:$0xff]
  %v1379 = vld [vmem:[%s1 + $0x2d0] sm:$0xff]
  %v1380 = vld [vmem:[%s1 + $0x2d8] sm:$0xff]
  %v1381 = vld [vmem:[%s1 + $0x2e0] sm:$0xff]
  %v1382 = vld [vmem:[%s1 + $0x2e8] sm:$0xff]
  %v1383 = vld [vmem:[%s1 + $0x2f0] sm:$0xff]
  %v1384 = vld [vmem:[%s1 + $0x2f8] sm:$0xff]
  %v1385 = vld [vmem:[%s1 + $0x300] sm:$0xff]
  %v1386 = vld [vmem:[%s1 + $0x308] sm:$0xff]
  %v1387 = vld [vmem:[%s1 + $0x310] sm:$0xff]
  %v1388 = vld [vmem:[%s1 + $0x318] sm:$0xff]
  %v1389 = vld [vmem:[%s1 + $0x320] sm:$0xff]
  %v1390 = vld [vmem:[%s1 + $0x328] sm:$0xff]
  %v1391 = vld [vmem:[%s1 + $0x330] sm:$0xff]
  %v1392 = vld [vmem:[%s1 + $0x338] sm:$0xff]
  %v1393 = vld [vmem:[%s1 + $0x340] sm:$0xff]
  %v1394 = vld [vmem:[%s1 + $0x348] sm:$0xff]
  %v1395 = vld [vmem:[%s1 + $0x350] sm:$0xff]
  %v1396 = vld [vmem:[%s1 + $0x358] sm:$0xff]
  %v1397 = vld [vmem:[%s1 + $0x360] sm:$0xff]
  %v1398 = vld [vmem:[%s1 + $0x368] sm:$0xff]
  %v1399 = vld [vmem:[%s1 + $0x370] sm:$0xff]
  %v1400 = vld [vmem:[%s1 + $0x378] sm:$0xff]
  %v1401 = vld [vmem:[%s1 + $0x380] sm:$0xff]
  %v1402 = vld [vmem:[%s1 + $0x388] sm:$0xff]
  %v1403 = vld [vmem:[%s1 + $0x390] sm:$0xff]
  %v1404 = vld [vmem:[%s1 + $0x398] sm:$0xff]
  %v1405 = vld [vmem:[%s1 + $0x3a0] sm:$0xff]
  %v1406 = vld [vmem:[%s1 + $0x3a8] sm:$0xff]
  %v1407 = vld [vmem:[%s1 + $0x3b0] sm:$0xff]
  %v1408 = vld [vmem:[%s1 + $0x3b8] sm:$0xff]
  %v1409 = vld [vmem:[%s1 + $0x3c0] sm:$0xff]
  %v1410 = vld [vmem:[%s1 + $0x3c8] sm:$0xff]
  %v1411 = vld [vmem:[%s1 + $0x3d0] sm:$0xff]
  %v1412 = vld [vmem:[%s1 + $0x3d8] sm:$0xff]
  %v1413 = vld [vmem:[%s1 + $0x3e0] sm:$0xff]
  %v1414 = vld [vmem:[%s1 + $0x3e8] sm:$0xff]
  %v1415 = vld [vmem:[%s1 + $0x3f0] sm:$0xff]
  %v1416 = vld [vmem:[%s1 + $0x3f8] sm:$0xff]
  %1417 = vmatprep.subr.mxu0 0.0
  %1418 = vmatpush1.msra.mxu0 %v1289
  %1419 = vmatprep.subr.mxu0 0.0
  %1420 = vmatpush1.msra.mxu0 %v1290
  %1421 = vmatprep.subr.mxu0 0.0
  %1422 = vmatpush1.msra.mxu0 %v1291
  %1423 = vmatprep.subr.mxu0 0.0
  %1424 = vmatpush1.msra.mxu0 %v1292
  %1425 = vmatprep.subr.mxu0 0.0
  %1426 = vmatpush1.msra.mxu0 %v1293
  %1427 = vmatprep.subr.mxu0 0.0
  %1428 = vmatpush1.msra.mxu0 %v1294
  %1429 = vmatprep.subr.mxu0 0.0
  %1430 = vmatpush1.msra.mxu0 %v1295
  %1431 = vmatprep.subr.mxu0 0.0
  %1432 = vmatpush1.msra.mxu0 %v1296
  %1433 = vmatprep.subr.mxu0 0.0
  %1434 = vmatpush1.msra.mxu0 0.0
  %1435 = vmatprep.subr.mxu0 0.0
  %1436 = vmatpush1.msra.mxu0 0.0
  %1437 = vmatprep.subr.mxu0 0.0
  %1438 = vmatpush1.msra.mxu0 0.0
  %1439 = vmatprep.subr.mxu0 0.0
  %1440 = vmatpush1.msra.mxu0 0.0
  %1441 = vmatprep.subr.mxu0 0.0
  %1442 = vmatpush1.msra.mxu0 0.0
  %1443 = vmatprep.subr.mxu0 0.0
  %1444 = vmatpush1.msra.mxu0 0.0
  %1445 = vmatprep.subr.mxu0 0.0
  %1446 = vmatpush1.msra.mxu0 0.0
  %1447 = vmatprep.subr.mxu0 0.0
  %1448 = vmatpush1.msra.mxu0 0.0
  %1449 = vmatprep.subr.mxu0 0.0
  %1450 = vmatpush1.msra.mxu0 0.0
  %1451 = vmatprep.subr.mxu0 0.0
  %1452 = vmatpush1.msra.mxu0 0.0
  %1453 = vmatprep.subr.mxu0 0.0
  %1454 = vmatpush1.msra.mxu0 0.0
  %1455 = vmatprep.subr.mxu0 0.0
  %1456 = vmatpush1.msra.mxu0 0.0
  %1457 = vmatprep.subr.mxu0 0.0
  %1458 = vmatpush1.msra.mxu0 0.0
  %1459 = vmatprep.subr.mxu0 0.0
  %1460 = vmatpush1.msra.mxu0 0.0
  %1461 = vmatprep.subr.mxu0 0.0
  %1462 = vmatpush1.msra.mxu0 0.0
  %1463 = vmatprep.subr.mxu0 0.0
  %1464 = vmatpush1.msra.mxu0 0.0
  %1465 = vmatprep.subr.mxu0 0.0
  %1466 = vmatpush1.msra.mxu0 0.0
  %1467 = vmatprep.subr.mxu0 0.0
  %1468 = vmatpush1.msra.mxu0 0.0
  %1469 = vmatprep.subr.mxu0 0.0
  %1470 = vmatpush1.msra.mxu0 0.0
  %1471 = vmatprep.subr.mxu0 0.0
  %1472 = vmatpush1.msra.mxu0 0.0
  %1473 = vmatprep.subr.mxu0 0.0
  %1474 = vmatpush1.msra.mxu0 0.0
  %1475 = vmatprep.subr.mxu0 0.0
  %1476 = vmatpush1.msra.mxu0 0.0
  %1477 = vmatprep.subr.mxu0 0.0
  %1478 = vmatpush1.msra.mxu0 0.0
  %1479 = vmatprep.subr.mxu0 0.0
  %1480 = vmatpush1.msra.mxu0 0.0
  %1481 = vmatprep.mubr.f32.mxu0 0.0
  %1482 = vmatmul.mubr.f32.gmra.mrb[0].mxu0 %v151
  %v1483 = vpop.f32.mrb[0].mxu0
  %v1484 = vadd.f32 0.0, %v1483
  %v1485 = vpop.f32.mrb[0].mxu0
  %1486 = vdwg.mxu0
  %1487 = vmatprep.subr.mxu0 0.0
  %1488 = vmatpush1.msra.mxu0 %v1297
  %1489 = vmatprep.subr.mxu0 0.0
  %1490 = vmatpush1.msra.mxu0 %v1298
  %1491 = vmatprep.subr.mxu0 0.0
  %1492 = vmatpush1.msra.mxu0 %v1299
  %1493 = vmatprep.subr.mxu0 0.0
  %1494 = vmatpush1.msra.mxu0 %v1300
  %1495 = vmatprep.subr.mxu0 0.0
  %1496 = vmatpush1.msra.mxu0 %v1301
  %1497 = vmatprep.subr.mxu0 0.0
  %1498 = vmatpush1.msra.mxu0 %v1302
  %1499 = vmatprep.subr.mxu0 0.0
  %1500 = vmatpush1.msra.mxu0 %v1303
  %1501 = vmatprep.subr.mxu0 0.0
  %1502 = vmatpush1.msra.mxu0 %v1304
  %1503 = vmatprep.subr.mxu0 0.0
  %1504 = vmatpush1.msra.mxu0 0.0
  %1505 = vmatprep.subr.mxu0 0.0
  %1506 = vmatpush1.msra.mxu0 0.0
  %1507 = vmatprep.subr.mxu0 0.0
  %1508 = vmatpush1.msra.mxu0 0.0
  %1509 = vmatprep.subr.mxu0 0.0
  %1510 = vmatpush1.msra.mxu0 0.0
  %1511 = vmatprep.subr.mxu0 0.0
  %1512 = vmatpush1.msra.mxu0 0.0
  %1513 = vmatprep.subr.mxu0 0.0
  %1514 = vmatpush1.msra.mxu0 0.0
  %1515 = vmatprep.subr.mxu0 0.0
  %1516 = vmatpush1.msra.mxu0 0.0
  %1517 = vmatprep.subr.mxu0 0.0
  %1518 = vmatpush1.msra.mxu0 0.0
  %1519 = vmatprep.subr.mxu0 0.0
  %1520 = vmatpush1.msra.mxu0 0.0
  %1521 = vmatprep.subr.mxu0 0.0
  %1522 = vmatpush1.msra.mxu0 0.0
  %1523 = vmatprep.subr.mxu0 0.0
  %1524 = vmatpush1.msra.mxu0 0.0
  %1525 = vmatprep.subr.mxu0 0.0
  %1526 = vmatpush1.msra.mxu0 0.0
  %1527 = vmatprep.subr.mxu0 0.0
  %1528 = vmatpush1.msra.mxu0 0.0
  %1529 = vmatprep.subr.mxu0 0.0
  %1530 = vmatpush1.msra.mxu0 0.0
  %1531 = vmatprep.subr.mxu0 0.0
  %1532 = vmatpush1.msra.mxu0 0.0
  %1533 = vmatprep.subr.mxu0 0.0
  %1534 = vmatpush1.msra.mxu0 0.0
  %1535 = vmatprep.subr.mxu0 0.0
  %1536 = vmatpush1.msra.mxu0 0.0
  %1537 = vmatprep.subr.mxu0 0.0
  %1538 = vmatpush1.msra.mxu0 0.0
  %1539 = vmatprep.subr.mxu0 0.0
  %1540 = vmatpush1.msra.mxu0 0.0
  %1541 = vmatprep.subr.mxu0 0.0
  %1542 = vmatpush1.msra.mxu0 0.0
  %1543 = vmatprep.subr.mxu0 0.0
  %1544 = vmatpush1.msra.mxu0 0.0
  %1545 = vmatprep.subr.mxu0 0.0
  %1546 = vmatpush1.msra.mxu0 0.0
  %1547 = vmatprep.subr.mxu0 0.0
  %1548 = vmatpush1.msra.mxu0 0.0
  %1549 = vmatprep.subr.mxu0 0.0
  %1550 = vmatpush1.msra.mxu0 0.0
  %1551 = vmatprep.mubr.f32.mxu0 0.0
  %1552 = vmatmul.mubr.f32.gmra.mrb[0].mxu0 %v151
  %v1553 = vpop.f32.mrb[0].mxu0
  %v1554 = vadd.f32 0.0, %v1553
  %v1555 = vpop.f32.mrb[0].mxu0
  %1556 = vdwg.mxu0
  %1557 = vmatprep.subr.mxu0 0.0
  %1558 = vmatpush1.msra.mxu0 %v1305
  %1559 = vmatprep.subr.mxu0 0.0
  %1560 = vmatpush1.msra.mxu0 %v1306
  %1561 = vmatprep.subr.mxu0 0.0
  %1562 = vmatpush1.msra.mxu0 %v1307
  %1563 = vmatprep.subr.mxu0 0.0
  %1564 = vmatpush1.msra.mxu0 %v1308
  %1565 = vmatprep.subr.mxu0 0.0
  %1566 = vmatpush1.msra.mxu0 %v1309
  %1567 = vmatprep.subr.mxu0 0.0
  %1568 = vmatpush1.msra.mxu0 %v1310
  %1569 = vmatprep.subr.mxu0 0.0
  %1570 = vmatpush1.msra.mxu0 %v1311
  %1571 = vmatprep.subr.mxu0 0.0
  %1572 = vmatpush1.msra.mxu0 %v1312
  %1573 = vmatprep.subr.mxu0 0.0
  %1574 = vmatpush1.msra.mxu0 0.0
  %1575 = vmatprep.subr.mxu0 0.0
  %1576 = vmatpush1.msra.mxu0 0.0
  %1577 = vmatprep.subr.mxu0 0.0
  %1578 = vmatpush1.msra.mxu0 0.0
  %1579 = vmatprep.subr.mxu0 0.0
  %1580 = vmatpush1.msra.mxu0 0.0
  %1581 = vmatprep.subr.mxu0 0.0
  %1582 = vmatpush1.msra.mxu0 0.0
  %1583 = vmatprep.subr.mxu0 0.0
  %1584 = vmatpush1.msra.mxu0 0.0
  %1585 = vmatprep.subr.mxu0 0.0
  %1586 = vmatpush1.msra.mxu0 0.0
  %1587 = vmatprep.subr.mxu0 0.0
  %1588 = vmatpush1.msra.mxu0 0.0
  %1589 = vmatprep.subr.mxu0 0.0
  %1590 = vmatpush1.msra.mxu0 0.0
  %1591 = vmatprep.subr.mxu0 0.0
  %1592 = vmatpush1.msra.mxu0 0.0
  %1593 = vmatprep.subr.mxu0 0.0
  %1594 = vmatpush1.msra.mxu0 0.0
  %1595 = vmatprep.subr.mxu0 0.0
  %1596 = vmatpush1.msra.mxu0 0.0
  %1597 = vmatprep.subr.mxu0 0.0
  %1598 = vmatpush1.msra.mxu0 0.0
  %1599 = vmatprep.subr.mxu0 0.0
  %1600 = vmatpush1.msra.mxu0 0.0
  %1601 = vmatprep.subr.mxu0 0.0
  %1602 = vmatpush1.msra.mxu0 0.0
  %1603 = vmatprep.subr.mxu0 0.0
  %1604 = vmatpush1.msra.mxu0 0.0
  %1605 = vmatprep.subr.mxu0 0.0
  %1606 = vmatpush1.msra.mxu0 0.0
  %1607 = vmatprep.subr.mxu0 0.0
  %1608 = vmatpush1.msra.mxu0 0.0
  %1609 = vmatprep.subr.mxu0 0.0
  %1610 = vmatpush1.msra.mxu0 0.0
  %1611 = vmatprep.subr.mxu0 0.0
  %1612 = vmatpush1.msra.mxu0 0.0
  %1613 = vmatprep.subr.mxu0 0.0
  %1614 = vmatpush1.msra.mxu0 0.0
  %1615 = vmatprep.subr.mxu0 0.0
  %1616 = vmatpush1.msra.mxu0 0.0
  %1617 = vmatprep.subr.mxu0 0.0
  %1618 = vmatpush1.msra.mxu0 0.0
  %1619 = vmatprep.subr.mxu0 0.0
  %1620 = vmatpush1.msra.mxu0 0.0
  %1621 = vmatprep.mubr.f32.mxu0 0.0
  %1622 = vmatmul.mubr.f32.gmra.mrb[0].mxu0 %v151
  %v1623 = vpop.f32.mrb[0].mxu0
  %v1624 = vadd.f32 0.0, %v1623
  %v1625 = vpop.f32.mrb[0].mxu0
  %1626 = vdwg.mxu0
  %1627 = vmatprep.subr.mxu0 0.0
  %1628 = vmatpush1.msra.mxu0 %v1313
  %1629 = vmatprep.subr.mxu0 0.0
  %1630 = vmatpush1.msra.mxu0 %v1314
  %1631 = vmatprep.subr.mxu0 0.0
  %1632 = vmatpush1.msra.mxu0 %v1315
  %1633 = vmatprep.subr.mxu0 0.0
  %1634 = vmatpush1.msra.mxu0 %v1316
  %1635 = vmatprep.subr.mxu0 0.0
  %1636 = vmatpush1.msra.mxu0 %v1317
  %1637 = vmatprep.subr.mxu0 0.0
  %1638 = vmatpush1.msra.mxu0 %v1318
  %1639 = vmatprep.subr.mxu0 0.0
  %1640 = vmatpush1.msra.mxu0 %v1319
  %1641 = vmatprep.subr.mxu0 0.0
  %1642 = vmatpush1.msra.mxu0 %v1320
  %1643 = vmatprep.subr.mxu0 0.0
  %1644 = vmatpush1.msra.mxu0 0.0
  %1645 = vmatprep.subr.mxu0 0.0
  %1646 = vmatpush1.msra.mxu0 0.0
  %1647 = vmatprep.subr.mxu0 0.0
  %1648 = vmatpush1.msra.mxu0 0.0
  %1649 = vmatprep.subr.mxu0 0.0
  %1650 = vmatpush1.msra.mxu0 0.0
  %1651 = vmatprep.subr.mxu0 0.0
  %1652 = vmatpush1.msra.mxu0 0.0
  %1653 = vmatprep.subr.mxu0 0.0
  %1654 = vmatpush1.msra.mxu0 0.0
  %1655 = vmatprep.subr.mxu0 0.0
  %1656 = vmatpush1.msra.mxu0 0.0
  %1657 = vmatprep.subr.mxu0 0.0
  %1658 = vmatpush1.msra.mxu0 0.0
  %1659 = vmatprep.subr.mxu0 0.0
  %1660 = vmatpush1.msra.mxu0 0.0
  %1661 = vmatprep.subr.mxu0 0.0
  %1662 = vmatpush1.msra.mxu0 0.0
  %1663 = vmatprep.subr.mxu0 0.0
  %1664 = vmatpush1.msra.mxu0 0.0
  %1665 = vmatprep.subr.mxu0 0.0
  %1666 = vmatpush1.msra.mxu0 0.0
  %1667 = vmatprep.subr.mxu0 0.0
  %1668 = vmatpush1.msra.mxu0 0.0
  %1669 = vmatprep.subr.mxu0 0.0
  %1670 = vmatpush1.msra.mxu0 0.0
  %1671 = vmatprep.subr.mxu0 0.0
  %1672 = vmatpush1.msra.mxu0 0.0
  %1673 = vmatprep.subr.mxu0 0.0
  %1674 = vmatpush1.msra.mxu0 0.0
  %1675 = vmatprep.subr.mxu0 0.0
  %1676 = vmatpush1.msra.mxu0 0.0
  %1677 = vmatprep.subr.mxu0 0.0
  %1678 = vmatpush1.msra.mxu0 0.0
  %1679 = vmatprep.subr.mxu0 0.0
  %1680 = vmatpush1.msra.mxu0 0.0
  %1681 = vmatprep.subr.mxu0 0.0
  %1682 = vmatpush1.msra.mxu0 0.0
  %1683 = vmatprep.subr.mxu0 0.0
  %1684 = vmatpush1.msra.mxu0 0.0
  %1685 = vmatprep.subr.mxu0 0.0
  %1686 = vmatpush1.msra.mxu0 0.0
  %1687 = vmatprep.subr.mxu0 0.0
  %1688 = vmatpush1.msra.mxu0 0.0
  %1689 = vmatprep.subr.mxu0 0.0
  %1690 = vmatpush1.msra.mxu0 0.0
  %1691 = vmatprep.mubr.f32.mxu0 0.0
  %1692 = vmatmul.mubr.f32.gmra.mrb[0].mxu0 %v151
  %v1693 = vpop.f32.mrb[0].mxu0
  %v1694 = vadd.f32 0.0, %v1693
  %v1695 = vpop.f32.mrb[0].mxu0
  %1696 = vdwg.mxu0
  %1697 = vmatprep.subr.mxu0 0.0
  %1698 = vmatpush1.msra.mxu0 %v1321
  %1699 = vmatprep.subr.mxu0 0.0
  %1700 = vmatpush1.msra.mxu0 %v1322
  %1701 = vmatprep.subr.mxu0 0.0
  %1702 = vmatpush1.msra.mxu0 %v1323
  %1703 = vmatprep.subr.mxu0 0.0
  %1704 = vmatpush1.msra.mxu0 %v1324
  %1705 = vmatprep.subr.mxu0 0.0
  %1706 = vmatpush1.msra.mxu0 %v1325
  %1707 = vmatprep.subr.mxu0 0.0
  %1708 = vmatpush1.msra.mxu0 %v1326
  %1709 = vmatprep.subr.mxu0 0.0
  %1710 = vmatpush1.msra.mxu0 %v1327
  %1711 = vmatprep.subr.mxu0 0.0
  %1712 = vmatpush1.msra.mxu0 %v1328
  %1713 = vmatprep.subr.mxu0 0.0
  %1714 = vmatpush1.msra.mxu0 0.0
  %1715 = vmatprep.subr.mxu0 0.0
  %1716 = vmatpush1.msra.mxu0 0.0
  %1717 = vmatprep.subr.mxu0 0.0
  %1718 = vmatpush1.msra.mxu0 0.0
  %1719 = vmatprep.subr.mxu0 0.0
  %1720 = vmatpush1.msra.mxu0 0.0
  %1721 = vmatprep.subr.mxu0 0.0
  %1722 = vmatpush1.msra.mxu0 0.0
  %1723 = vmatprep.subr.mxu0 0.0
  %1724 = vmatpush1.msra.mxu0 0.0
  %1725 = vmatprep.subr.mxu0 0.0
  %1726 = vmatpush1.msra.mxu0 0.0
  %1727 = vmatprep.subr.mxu0 0.0
  %1728 = vmatpush1.msra.mxu0 0.0
  %1729 = vmatprep.subr.mxu0 0.0
  %1730 = vmatpush1.msra.mxu0 0.0
  %1731 = vmatprep.subr.mxu0 0.0
  %1732 = vmatpush1.msra.mxu0 0.0
  %1733 = vmatprep.subr.mxu0 0.0
  %1734 = vmatpush1.msra.mxu0 0.0
  %1735 = vmatprep.subr.mxu0 0.0
  %1736 = vmatpush1.msra.mxu0 0.0
  %1737 = vmatprep.subr.mxu0 0.0
  %1738 = vmatpush1.msra.mxu0 0.0
  %1739 = vmatprep.subr.mxu0 0.0
  %1740 = vmatpush1.msra.mxu0 0.0
  %1741 = vmatprep.subr.mxu0 0.0
  %1742 = vmatpush1.msra.mxu0 0.0
  %1743 = vmatprep.subr.mxu0 0.0
  %1744 = vmatpush1.msra.mxu0 0.0
  %1745 = vmatprep.subr.mxu0 0.0
  %1746 = vmatpush1.msra.mxu0 0.0
  %1747 = vmatprep.subr.mxu0 0.0
  %1748 = vmatpush1.msra.mxu0 0.0
  %1749 = vmatprep.subr.mxu0 0.0
  %1750 = vmatpush1.msra.mxu0 0.0
  %1751 = vmatprep.subr.mxu0 0.0
  %1752 = vmatpush1.msra.mxu0 0.0
  %1753 = vmatprep.subr.mxu0 0.0
  %1754 = vmatpush1.msra.mxu0 0.0
  %1755 = vmatprep.subr.mxu0 0.0
  %1756 = vmatpush1.msra.mxu0 0.0
  %1757 = vmatprep.subr.mxu0 0.0
  %1758 = vmatpush1.msra.mxu0 0.0
  %1759 = vmatprep.subr.mxu0 0.0
  %1760 = vmatpush1.msra.mxu0 0.0
  %1761 = vmatprep.mubr.f32.mxu0 0.0
  %1762 = vmatmul.mubr.f32.gmra.mrb[0].mxu0 %v151
  %v1763 = vpop.f32.mrb[0].mxu0
  %v1764 = vadd.f32 0.0, %v1763
  %v1765 = vpop.f32.mrb[0].mxu0
  %1766 = vdwg.mxu0
  %1767 = vmatprep.subr.mxu0 0.0
  %1768 = vmatpush1.msra.mxu0 %v1329
  %1769 = vmatprep.subr.mxu0 0.0
  %1770 = vmatpush1.msra.mxu0 %v1330
  %1771 = vmatprep.subr.mxu0 0.0
  %1772 = vmatpush1.msra.mxu0 %v1331
  %1773 = vmatprep.subr.mxu0 0.0
  %1774 = vmatpush1.msra.mxu0 %v1332
  %1775 = vmatprep.subr.mxu0 0.0
  %1776 = vmatpush1.msra.mxu0 %v1333
  %1777 = vmatprep.subr.mxu0 0.0
  %1778 = vmatpush1.msra.mxu0 %v1334
  %1779 = vmatprep.subr.mxu0 0.0
  %1780 = vmatpush1.msra.mxu0 %v1335
  %1781 = vmatprep.subr.mxu0 0.0
  %1782 = vmatpush1.msra.mxu0 %v1336
  %1783 = vmatprep.subr.mxu0 0.0
  %1784 = vmatpush1.msra.mxu0 0.0
  %1785 = vmatprep.subr.mxu0 0.0
  %1786 = vmatpush1.msra.mxu0 0.0
  %1787 = vmatprep.subr.mxu0 0.0
  %1788 = vmatpush1.msra.mxu0 0.0
  %1789 = vmatprep.subr.mxu0 0.0
  %1790 = vmatpush1.msra.mxu0 0.0
  %1791 = vmatprep.subr.mxu0 0.0
  %1792 = vmatpush1.msra.mxu0 0.0
  %1793 = vmatprep.subr.mxu0 0.0
  %1794 = vmatpush1.msra.mxu0 0.0
  %1795 = vmatprep.subr.mxu0 0.0
  %1796 = vmatpush1.msra.mxu0 0.0
  %1797 = vmatprep.subr.mxu0 0.0
  %1798 = vmatpush1.msra.mxu0 0.0
  %1799 = vmatprep.subr.mxu0 0.0
  %1800 = vmatpush1.msra.mxu0 0.0
  %1801 = vmatprep.subr.mxu0 0.0
  %1802 = vmatpush1.msra.mxu0 0.0
  %1803 = vmatprep.subr.mxu0 0.0
  %1804 = vmatpush1.msra.mxu0 0.0
  %1805 = vmatprep.subr.mxu0 0.0
  %1806 = vmatpush1.msra.mxu0 0.0
  %1807 = vmatprep.subr.mxu0 0.0
  %1808 = vmatpush1.msra.mxu0 0.0
  %1809 = vmatprep.subr.mxu0 0.0
  %1810 = vmatpush1.msra.mxu0 0.0
  %1811 = vmatprep.subr.mxu0 0.0
  %1812 = vmatpush1.msra.mxu0 0.0
  %1813 = vmatprep.subr.mxu0 0.0
  %1814 = vmatpush1.msra.mxu0 0.0
  %1815 = vmatprep.subr.mxu0 0.0
  %1816 = vmatpush1.msra.mxu0 0.0
  %1817 = vmatprep.subr.mxu0 0.0
  %1818 = vmatpush1.msra.mxu0 0.0
  %1819 = vmatprep.subr.mxu0 0.0
  %1820 = vmatpush1.msra.mxu0 0.0
  %1821 = vmatprep.subr.mxu0 0.0
  %1822 = vmatpush1.msra.mxu0 0.0
  %1823 = vmatprep.subr.mxu0 0.0
  %1824 = vmatpush1.msra.mxu0 0.0
  %1825 = vmatprep.subr.mxu0 0.0
  %1826 = vmatpush1.msra.mxu0 0.0
  %1827 = vmatprep.subr.mxu0 0.0
  %1828 = vmatpush1.msra.mxu0 0.0
  %1829 = vmatprep.subr.mxu0 0.0
  %1830 = vmatpush1.msra.mxu0 0.0
  %1831 = vmatprep.mubr.f32.mxu0 0.0
  %1832 = vmatmul.mubr.f32.gmra.mrb[0].mxu0 %v151
  %v1833 = vpop.f32.mrb[0].mxu0
  %v1834 = vadd.f32 0.0, %v1833
  %v1835 = vpop.f32.mrb[0].mxu0
  %1836 = vdwg.mxu0
  %1837 = vmatprep.subr.mxu0 0.0
  %1838 = vmatpush1.msra.mxu0 %v1337
  %1839 = vmatprep.subr.mxu0 0.0
  %1840 = vmatpush1.msra.mxu0 %v1338
  %1841 = vmatprep.subr.mxu0 0.0
  %1842 = vmatpush1.msra.mxu0 %v1339
  %1843 = vmatprep.subr.mxu0 0.0
  %1844 = vmatpush1.msra.mxu0 %v1340
  %1845 = vmatprep.subr.mxu0 0.0
  %1846 = vmatpush1.msra.mxu0 %v1341
  %1847 = vmatprep.subr.mxu0 0.0
  %1848 = vmatpush1.msra.mxu0 %v1342
  %1849 = vmatprep.subr.mxu0 0.0
  %1850 = vmatpush1.msra.mxu0 %v1343
  %1851 = vmatprep.subr.mxu0 0.0
  %1852 = vmatpush1.msra.mxu0 %v1344
  %1853 = vmatprep.subr.mxu0 0.0
  %1854 = vmatpush1.msra.mxu0 0.0
  %1855 = vmatprep.subr.mxu0 0.0
  %1856 = vmatpush1.msra.mxu0 0.0
  %1857 = vmatprep.subr.mxu0 0.0
  %1858 = vmatpush1.msra.mxu0 0.0
  %1859 = vmatprep.subr.mxu0 0.0
  %1860 = vmatpush1.msra.mxu0 0.0
  %1861 = vmatprep.subr.mxu0 0.0
  %1862 = vmatpush1.msra.mxu0 0.0
  %1863 = vmatprep.subr.mxu0 0.0
  %1864 = vmatpush1.msra.mxu0 0.0
  %1865 = vmatprep.subr.mxu0 0.0
  %1866 = vmatpush1.msra.mxu0 0.0
  %1867 = vmatprep.subr.mxu0 0.0
  %1868 = vmatpush1.msra.mxu0 0.0
  %1869 = vmatprep.subr.mxu0 0.0
  %1870 = vmatpush1.msra.mxu0 0.0
  %1871 = vmatprep.subr.mxu0 0.0
  %1872 = vmatpush1.msra.mxu0 0.0
  %1873 = vmatprep.subr.mxu0 0.0
  %1874 = vmatpush1.msra.mxu0 0.0
  %1875 = vmatprep.subr.mxu0 0.0
  %1876 = vmatpush1.msra.mxu0 0.0
  %1877 = vmatprep.subr.mxu0 0.0
  %1878 = vmatpush1.msra.mxu0 0.0
  %1879 = vmatprep.subr.mxu0 0.0
  %1880 = vmatpush1.msra.mxu0 0.0
  %1881 = vmatprep.subr.mxu0 0.0
  %1882 = vmatpush1.msra.mxu0 0.0
  %1883 = vmatprep.subr.mxu0 0.0
  %1884 = vmatpush1.msra.mxu0 0.0
  %1885 = vmatprep.subr.mxu0 0.0
  %1886 = vmatpush1.msra.mxu0 0.0
  %1887 = vmatprep.subr.mxu0 0.0
  %1888 = vmatpush1.msra.mxu0 0.0
  %1889 = vmatprep.subr.mxu0 0.0
  %1890 = vmatpush1.msra.mxu0 0.0
  %1891 = vmatprep.subr.mxu0 0.0
  %1892 = vmatpush1.msra.mxu0 0.0
  %1893 = vmatprep.subr.mxu0 0.0
  %1894 = vmatpush1.msra.mxu0 0.0
  %1895 = vmatprep.subr.mxu0 0.0
  %1896 = vmatpush1.msra.mxu0 0.0
  %1897 = vmatprep.subr.mxu0 0.0
  %1898 = vmatpush1.msra.mxu0 0.0
  %1899 = vmatprep.subr.mxu0 0.0
  %1900 = vmatpush1.msra.mxu0 0.0
  %1901 = vmatprep.mubr.f32.mxu0 0.0
  %1902 = vmatmul.mubr.f32.gmra.mrb[0].mxu0 %v151
  %v1903 = vpop.f32.mrb[0].mxu0
  %v1904 = vadd.f32 0.0, %v1903
  %v1905 = vpop.f32.mrb[0].mxu0
  %1906 = vdwg.mxu0
  %1907 = vmatprep.subr.mxu0 0.0
  %1908 = vmatpush1.msra.mxu0 %v1345
  %1909 = vmatprep.subr.mxu0 0.0
  %1910 = vmatpush1.msra.mxu0 %v1346
  %1911 = vmatprep.subr.mxu0 0.0
  %1912 = vmatpush1.msra.mxu0 %v1347
  %1913 = vmatprep.subr.mxu0 0.0
  %1914 = vmatpush1.msra.mxu0 %v1348
  %1915 = vmatprep.subr.mxu0 0.0
  %1916 = vmatpush1.msra.mxu0 %v1349
  %1917 = vmatprep.subr.mxu0 0.0
  %1918 = vmatpush1.msra.mxu0 %v1350
  %1919 = vmatprep.subr.mxu0 0.0
  %1920 = vmatpush1.msra.mxu0 %v1351
  %1921 = vmatprep.subr.mxu0 0.0
  %1922 = vmatpush1.msra.mxu0 %v1352
  %1923 = vmatprep.subr.mxu0 0.0
  %1924 = vmatpush1.msra.mxu0 0.0
  %1925 = vmatprep.subr.mxu0 0.0
  %1926 = vmatpush1.msra.mxu0 0.0
  %1927 = vmatprep.subr.mxu0 0.0
  %1928 = vmatpush1.msra.mxu0 0.0
  %1929 = vmatprep.subr.mxu0 0.0
  %1930 = vmatpush1.msra.mxu0 0.0
  %1931 = vmatprep.subr.mxu0 0.0
  %1932 = vmatpush1.msra.mxu0 0.0
  %1933 = vmatprep.subr.mxu0 0.0
  %1934 = vmatpush1.msra.mxu0 0.0
  %1935 = vmatprep.subr.mxu0 0.0
  %1936 = vmatpush1.msra.mxu0 0.0
  %1937 = vmatprep.subr.mxu0 0.0
  %1938 = vmatpush1.msra.mxu0 0.0
  %1939 = vmatprep.subr.mxu0 0.0
  %1940 = vmatpush1.msra.mxu0 0.0
  %1941 = vmatprep.subr.mxu0 0.0
  %1942 = vmatpush1.msra.mxu0 0.0
  %1943 = vmatprep.subr.mxu0 0.0
  %1944 = vmatpush1.msra.mxu0 0.0
  %1945 = vmatprep.subr.mxu0 0.0
  %1946 = vmatpush1.msra.mxu0 0.0
  %1947 = vmatprep.subr.mxu0 0.0
  %1948 = vmatpush1.msra.mxu0 0.0
  %1949 = vmatprep.subr.mxu0 0.0
  %1950 = vmatpush1.msra.mxu0 0.0
  %1951 = vmatprep.subr.mxu0 0.0
  %1952 = vmatpush1.msra.mxu0 0.0
  %1953 = vmatprep.subr.mxu0 0.0
  %1954 = vmatpush1.msra.mxu0 0.0
  %1955 = vmatprep.subr.mxu0 0.0
  %1956 = vmatpush1.msra.mxu0 0.0
  %1957 = vmatprep.subr.mxu0 0.0
  %1958 = vmatpush1.msra.mxu0 0.0
  %1959 = vmatprep.subr.mxu0 0.0
  %1960 = vmatpush1.msra.mxu0 0.0
  %1961 = vmatprep.subr.mxu0 0.0
  %1962 = vmatpush1.msra.mxu0 0.0
  %1963 = vmatprep.subr.mxu0 0.0
  %1964 = vmatpush1.msra.mxu0 0.0
  %1965 = vmatprep.subr.mxu0 0.0
  %1966 = vmatpush1.msra.mxu0 0.0
  %1967 = vmatprep.subr.mxu0 0.0
  %1968 = vmatpush1.msra.mxu0 0.0
  %1969 = vmatprep.subr.mxu0 0.0
  %1970 = vmatpush1.msra.mxu0 0.0
  %1971 = vmatprep.mubr.f32.mxu0 0.0
  %1972 = vmatmul.mubr.f32.gmra.mrb[0].mxu0 %v151
  %v1973 = vpop.f32.mrb[0].mxu0
  %v1974 = vadd.f32 0.0, %v1973
  %v1975 = vpop.f32.mrb[0].mxu0
  %1976 = vdwg.mxu0
  %1977 = vmatprep.subr.mxu0 0.0
  %1978 = vmatpush1.msra.mxu0 %v1353
  %1979 = vmatprep.subr.mxu0 0.0
  %1980 = vmatpush1.msra.mxu0 %v1354
  %1981 = vmatprep.subr.mxu0 0.0
  %1982 = vmatpush1.msra.mxu0 %v1355
  %1983 = vmatprep.subr.mxu0 0.0
  %1984 = vmatpush1.msra.mxu0 %v1356
  %1985 = vmatprep.subr.mxu0 0.0
  %1986 = vmatpush1.msra.mxu0 %v1357
  %1987 = vmatprep.subr.mxu0 0.0
  %1988 = vmatpush1.msra.mxu0 %v1358
  %1989 = vmatprep.subr.mxu0 0.0
  %1990 = vmatpush1.msra.mxu0 %v1359
  %1991 = vmatprep.subr.mxu0 0.0
  %1992 = vmatpush1.msra.mxu0 %v1360
  %1993 = vmatprep.subr.mxu0 0.0
  %1994 = vmatpush1.msra.mxu0 0.0
  %1995 = vmatprep.subr.mxu0 0.0
  %1996 = vmatpush1.msra.mxu0 0.0
  %1997 = vmatprep.subr.mxu0 0.0
  %1998 = vmatpush1.msra.mxu0 0.0
  %1999 = vmatprep.subr.mxu0 0.0
  %2000 = vmatpush1.msra.mxu0 0.0
  %2001 = vmatprep.subr.mxu0 0.0
  %2002 = vmatpush1.msra.mxu0 0.0
  %2003 = vmatprep.subr.mxu0 0.0
  %2004 = vmatpush1.msra.mxu0 0.0
  %2005 = vmatprep.subr.mxu0 0.0
  %2006 = vmatpush1.msra.mxu0 0.0
  %2007 = vmatprep.subr.mxu0 0.0
  %2008 = vmatpush1.msra.mxu0 0.0
  %2009 = vmatprep.subr.mxu0 0.0
  %2010 = vmatpush1.msra.mxu0 0.0
  %2011 = vmatprep.subr.mxu0 0.0
  %2012 = vmatpush1.msra.mxu0 0.0
  %2013 = vmatprep.subr.mxu0 0.0
  %2014 = vmatpush1.msra.mxu0 0.0
  %2015 = vmatprep.subr.mxu0 0.0
  %2016 = vmatpush1.msra.mxu0 0.0
  %2017 = vmatprep.subr.mxu0 0.0
  %2018 = vmatpush1.msra.mxu0 0.0
  %2019 = vmatprep.subr.mxu0 0.0
  %2020 = vmatpush1.msra.mxu0 0.0
  %2021 = vmatprep.subr.mxu0 0.0
  %2022 = vmatpush1.msra.mxu0 0.0
  %2023 = vmatprep.subr.mxu0 0.0
  %2024 = vmatpush1.msra.mxu0 0.0
  %2025 = vmatprep.subr.mxu0 0.0
  %2026 = vmatpush1.msra.mxu0 0.0
  %2027 = vmatprep.subr.mxu0 0.0
  %2028 = vmatpush1.msra.mxu0 0.0
  %2029 = vmatprep.subr.mxu0 0.0
  %2030 = vmatpush1.msra.mxu0 0.0
  %2031 = vmatprep.subr.mxu0 0.0
  %2032 = vmatpush1.msra.mxu0 0.0
  %2033 = vmatprep.subr.mxu0 0.0
  %2034 = vmatpush1.msra.mxu0 0.0
  %2035 = vmatprep.subr.mxu0 0.0
  %2036 = vmatpush1.msra.mxu0 0.0
  %2037 = vmatprep.subr.mxu0 0.0
  %2038 = vmatpush1.msra.mxu0 0.0
  %2039 = vmatprep.subr.mxu0 0.0
  %2040 = vmatpush1.msra.mxu0 0.0
  %2041 = vmatprep.mubr.f32.mxu0 0.0
  %2042 = vmatmul.mubr.f32.gmra.mrb[0].mxu0 %v151
  %v2043 = vpop.f32.mrb[0].mxu0
  %v2044 = vadd.f32 0.0, %v2043
  %v2045 = vpop.f32.mrb[0].mxu0
  %2046 = vdwg.mxu0
  %2047 = vmatprep.subr.mxu0 0.0
  %2048 = vmatpush1.msra.mxu0 %v1361
  %2049 = vmatprep.subr.mxu0 0.0
  %2050 = vmatpush1.msra.mxu0 %v1362
  %2051 = vmatprep.subr.mxu0 0.0
  %2052 = vmatpush1.msra.mxu0 %v1363
  %2053 = vmatprep.subr.mxu0 0.0
  %2054 = vmatpush1.msra.mxu0 %v1364
  %2055 = vmatprep.subr.mxu0 0.0
  %2056 = vmatpush1.msra.mxu0 %v1365
  %2057 = vmatprep.subr.mxu0 0.0
  %2058 = vmatpush1.msra.mxu0 %v1366
  %2059 = vmatprep.subr.mxu0 0.0
  %2060 = vmatpush1.msra.mxu0 %v1367
  %2061 = vmatprep.subr.mxu0 0.0
  %2062 = vmatpush1.msra.mxu0 %v1368
  %2063 = vmatprep.subr.mxu0 0.0
  %2064 = vmatpush1.msra.mxu0 0.0
  %2065 = vmatprep.subr.mxu0 0.0
  %2066 = vmatpush1.msra.mxu0 0.0
  %2067 = vmatprep.subr.mxu0 0.0
  %2068 = vmatpush1.msra.mxu0 0.0
  %2069 = vmatprep.subr.mxu0 0.0
  %2070 = vmatpush1.msra.mxu0 0.0
  %2071 = vmatprep.subr.mxu0 0.0
  %2072 = vmatpush1.msra.mxu0 0.0
  %2073 = vmatprep.subr.mxu0 0.0
  %2074 = vmatpush1.msra.mxu0 0.0
  %2075 = vmatprep.subr.mxu0 0.0
  %2076 = vmatpush1.msra.mxu0 0.0
  %2077 = vmatprep.subr.mxu0 0.0
  %2078 = vmatpush1.msra.mxu0 0.0
  %2079 = vmatprep.subr.mxu0 0.0
  %2080 = vmatpush1.msra.mxu0 0.0
  %2081 = vmatprep.subr.mxu0 0.0
  %2082 = vmatpush1.msra.mxu0 0.0
  %2083 = vmatprep.subr.mxu0 0.0
  %2084 = vmatpush1.msra.mxu0 0.0
  %2085 = vmatprep.subr.mxu0 0.0
  %2086 = vmatpush1.msra.mxu0 0.0
  %2087 = vmatprep.subr.mxu0 0.0
  %2088 = vmatpush1.msra.mxu0 0.0
  %2089 = vmatprep.subr.mxu0 0.0
  %2090 = vmatpush1.msra.mxu0 0.0
  %2091 = vmatprep.subr.mxu0 0.0
  %2092 = vmatpush1.msra.mxu0 0.0
  %2093 = vmatprep.subr.mxu0 0.0
  %2094 = vmatpush1.msra.mxu0 0.0
  %2095 = vmatprep.subr.mxu0 0.0
  %2096 = vmatpush1.msra.mxu0 0.0
  %2097 = vmatprep.subr.mxu0 0.0
  %2098 = vmatpush1.msra.mxu0 0.0
  %2099 = vmatprep.subr.mxu0 0.0
  %2100 = vmatpush1.msra.mxu0 0.0
  %2101 = vmatprep.subr.mxu0 0.0
  %2102 = vmatpush1.msra.mxu0 0.0
  %2103 = vmatprep.subr.mxu0 0.0
  %2104 = vmatpush1.msra.mxu0 0.0
  %2105 = vmatprep.subr.mxu0 0.0
  %2106 = vmatpush1.msra.mxu0 0.0
  %2107 = vmatprep.subr.mxu0 0.0
  %2108 = vmatpush1.msra.mxu0 0.0
  %2109 = vmatprep.subr.mxu0 0.0
  %2110 = vmatpush1.msra.mxu0 0.0
  %2111 = vmatprep.mubr.f32.mxu0 0.0
  %2112 = vmatmul.mubr.f32.gmra.mrb[0].mxu0 %v151
  %v2113 = vpop.f32.mrb[0].mxu0
  %v2114 = vadd.f32 0.0, %v2113
  %v2115 = vpop.f32.mrb[0].mxu0
  %2116 = vdwg.mxu0
  %2117 = vmatprep.subr.mxu0 0.0
  %2118 = vmatpush1.msra.mxu0 %v1369
  %2119 = vmatprep.subr.mxu0 0.0
  %2120 = vmatpush1.msra.mxu0 %v1370
  %2121 = vmatprep.subr.mxu0 0.0
  %2122 = vmatpush1.msra.mxu0 %v1371
  %2123 = vmatprep.subr.mxu0 0.0
  %2124 = vmatpush1.msra.mxu0 %v1372
  %2125 = vmatprep.subr.mxu0 0.0
  %2126 = vmatpush1.msra.mxu0 %v1373
  %2127 = vmatprep.subr.mxu0 0.0
  %2128 = vmatpush1.msra.mxu0 %v1374
  %2129 = vmatprep.subr.mxu0 0.0
  %2130 = vmatpush1.msra.mxu0 %v1375
  %2131 = vmatprep.subr.mxu0 0.0
  %2132 = vmatpush1.msra.mxu0 %v1376
  %2133 = vmatprep.subr.mxu0 0.0
  %2134 = vmatpush1.msra.mxu0 0.0
  %2135 = vmatprep.subr.mxu0 0.0
  %2136 = vmatpush1.msra.mxu0 0.0
  %2137 = vmatprep.subr.mxu0 0.0
  %2138 = vmatpush1.msra.mxu0 0.0
  %2139 = vmatprep.subr.mxu0 0.0
  %2140 = vmatpush1.msra.mxu0 0.0
  %2141 = vmatprep.subr.mxu0 0.0
  %2142 = vmatpush1.msra.mxu0 0.0
  %2143 = vmatprep.subr.mxu0 0.0
  %2144 = vmatpush1.msra.mxu0 0.0
  %2145 = vmatprep.subr.mxu0 0.0
  %2146 = vmatpush1.msra.mxu0 0.0
  %2147 = vmatprep.subr.mxu0 0.0
  %2148 = vmatpush1.msra.mxu0 0.0
  %2149 = vmatprep.subr.mxu0 0.0
  %2150 = vmatpush1.msra.mxu0 0.0
  %2151 = vmatprep.subr.mxu0 0.0
  %2152 = vmatpush1.msra.mxu0 0.0
  %2153 = vmatprep.subr.mxu0 0.0
  %2154 = vmatpush1.msra.mxu0 0.0
  %2155 = vmatprep.subr.mxu0 0.0
  %2156 = vmatpush1.msra.mxu0 0.0
  %2157 = vmatprep.subr.mxu0 0.0
  %2158 = vmatpush1.msra.mxu0 0.0
  %2159 = vmatprep.subr.mxu0 0.0
  %2160 = vmatpush1.msra.mxu0 0.0
  %2161 = vmatprep.subr.mxu0 0.0
  %2162 = vmatpush1.msra.mxu0 0.0
  %2163 = vmatprep.subr.mxu0 0.0
  %2164 = vmatpush1.msra.mxu0 0.0
  %2165 = vmatprep.subr.mxu0 0.0
  %2166 = vmatpush1.msra.mxu0 0.0
  %2167 = vmatprep.subr.mxu0 0.0
  %2168 = vmatpush1.msra.mxu0 0.0
  %2169 = vmatprep.subr.mxu0 0.0
  %2170 = vmatpush1.msra.mxu0 0.0
  %2171 = vmatprep.subr.mxu0 0.0
  %2172 = vmatpush1.msra.mxu0 0.0
  %2173 = vmatprep.subr.mxu0 0.0
  %2174 = vmatpush1.msra.mxu0 0.0
  %2175 = vmatprep.subr.mxu0 0.0
  %2176 = vmatpush1.msra.mxu0 0.0
  %2177 = vmatprep.subr.mxu0 0.0
  %2178 = vmatpush1.msra.mxu0 0.0
  %2179 = vmatprep.subr.mxu0 0.0
  %2180 = vmatpush1.msra.mxu0 0.0
  %2181 = vmatprep.mubr.f32.mxu0 0.0
  %2182 = vmatmul.mubr.f32.gmra.mrb[0].mxu0 %v151
  %v2183 = vpop.f32.mrb[0].mxu0
  %v2184 = vadd.f32 0.0, %v2183
  %v2185 = vpop.f32.mrb[0].mxu0
  %2186 = vdwg.mxu0
  %2187 = vmatprep.subr.mxu0 0.0
  %2188 = vmatpush1.msra.mxu0 %v1377
  %2189 = vmatprep.subr.mxu0 0.0
  %2190 = vmatpush1.msra.mxu0 %v1378
  %2191 = vmatprep.subr.mxu0 0.0
  %2192 = vmatpush1.msra.mxu0 %v1379
  %2193 = vmatprep.subr.mxu0 0.0
  %2194 = vmatpush1.msra.mxu0 %v1380
  %2195 = vmatprep.subr.mxu0 0.0
  %2196 = vmatpush1.msra.mxu0 %v1381
  %2197 = vmatprep.subr.mxu0 0.0
  %2198 = vmatpush1.msra.mxu0 %v1382
  %2199 = vmatprep.subr.mxu0 0.0
  %2200 = vmatpush1.msra.mxu0 %v1383
  %2201 = vmatprep.subr.mxu0 0.0
  %2202 = vmatpush1.msra.mxu0 %v1384
  %2203 = vmatprep.subr.mxu0 0.0
  %2204 = vmatpush1.msra.mxu0 0.0
  %2205 = vmatprep.subr.mxu0 0.0
  %2206 = vmatpush1.msra.mxu0 0.0
  %2207 = vmatprep.subr.mxu0 0.0
  %2208 = vmatpush1.msra.mxu0 0.0
  %2209 = vmatprep.subr.mxu0 0.0
  %2210 = vmatpush1.msra.mxu0 0.0
  %2211 = vmatprep.subr.mxu0 0.0
  %2212 = vmatpush1.msra.mxu0 0.0
  %2213 = vmatprep.subr.mxu0 0.0
  %2214 = vmatpush1.msra.mxu0 0.0
  %2215 = vmatprep.subr.mxu0 0.0
  %2216 = vmatpush1.msra.mxu0 0.0
  %2217 = vmatprep.subr.mxu0 0.0
  %2218 = vmatpush1.msra.mxu0 0.0
  %2219 = vmatprep.subr.mxu0 0.0
  %2220 = vmatpush1.msra.mxu0 0.0
  %2221 = vmatprep.subr.mxu0 0.0
  %2222 = vmatpush1.msra.mxu0 0.0
  %2223 = vmatprep.subr.mxu0 0.0
  %2224 = vmatpush1.msra.mxu0 0.0
  %2225 = vmatprep.subr.mxu0 0.0
  %2226 = vmatpush1.msra.mxu0 0.0
  %2227 = vmatprep.subr.mxu0 0.0
  %2228 = vmatpush1.msra.mxu0 0.0
  %2229 = vmatprep.subr.mxu0 0.0
  %2230 = vmatpush1.msra.mxu0 0.0
  %2231 = vmatprep.subr.mxu0 0.0
  %2232 = vmatpush1.msra.mxu0 0.0
  %2233 = vmatprep.subr.mxu0 0.0
  %2234 = vmatpush1.msra.mxu0 0.0
  %2235 = vmatprep.subr.mxu0 0.0
  %2236 = vmatpush1.msra.mxu0 0.0
  %2237 = vmatprep.subr.mxu0 0.0
  %2238 = vmatpush1.msra.mxu0 0.0
  %2239 = vmatprep.subr.mxu0 0.0
  %2240 = vmatpush1.msra.mxu0 0.0
  %2241 = vmatprep.subr.mxu0 0.0
  %2242 = vmatpush1.msra.mxu0 0.0
  %2243 = vmatprep.subr.mxu0 0.0
  %2244 = vmatpush1.msra.mxu0 0.0
  %2245 = vmatprep.subr.mxu0 0.0
  %2246 = vmatpush1.msra.mxu0 0.0
  %2247 = vmatprep.subr.mxu0 0.0
  %2248 = vmatpush1.msra.mxu0 0.0
  %2249 = vmatprep.subr.mxu0 0.0
  %2250 = vmatpush1.msra.mxu0 0.0
  %2251 = vmatprep.mubr.f32.mxu0 0.0
  %2252 = vmatmul.mubr.f32.gmra.mrb[0].mxu0 %v151
  %v2253 = vpop.f32.mrb[0].mxu0
  %v2254 = vadd.f32 0.0, %v2253
  %v2255 = vpop.f32.mrb[0].mxu0
  %2256 = vdwg.mxu0
  %2257 = vmatprep.subr.mxu0 0.0
  %2258 = vmatpush1.msra.mxu0 %v1385
  %2259 = vmatprep.subr.mxu0 0.0
  %2260 = vmatpush1.msra.mxu0 %v1386
  %2261 = vmatprep.subr.mxu0 0.0
  %2262 = vmatpush1.msra.mxu0 %v1387
  %2263 = vmatprep.subr.mxu0 0.0
  %2264 = vmatpush1.msra.mxu0 %v1388
  %2265 = vmatprep.subr.mxu0 0.0
  %2266 = vmatpush1.msra.mxu0 %v1389
  %2267 = vmatprep.subr.mxu0 0.0
  %2268 = vmatpush1.msra.mxu0 %v1390
  %2269 = vmatprep.subr.mxu0 0.0
  %2270 = vmatpush1.msra.mxu0 %v1391
  %2271 = vmatprep.subr.mxu0 0.0
  %2272 = vmatpush1.msra.mxu0 %v1392
  %2273 = vmatprep.subr.mxu0 0.0
  %2274 = vmatpush1.msra.mxu0 0.0
  %2275 = vmatprep.subr.mxu0 0.0
  %2276 = vmatpush1.msra.mxu0 0.0
  %2277 = vmatprep.subr.mxu0 0.0
  %2278 = vmatpush1.msra.mxu0 0.0
  %2279 = vmatprep.subr.mxu0 0.0
  %2280 = vmatpush1.msra.mxu0 0.0
  %2281 = vmatprep.subr.mxu0 0.0
  %2282 = vmatpush1.msra.mxu0 0.0
  %2283 = vmatprep.subr.mxu0 0.0
  %2284 = vmatpush1.msra.mxu0 0.0
  %2285 = vmatprep.subr.mxu0 0.0
  %2286 = vmatpush1.msra.mxu0 0.0
  %2287 = vmatprep.subr.mxu0 0.0
  %2288 = vmatpush1.msra.mxu0 0.0
  %2289 = vmatprep.subr.mxu0 0.0
  %2290 = vmatpush1.msra.mxu0 0.0
  %2291 = vmatprep.subr.mxu0 0.0
  %2292 = vmatpush1.msra.mxu0 0.0
  %2293 = vmatprep.subr.mxu0 0.0
  %2294 = vmatpush1.msra.mxu0 0.0
  %2295 = vmatprep.subr.mxu0 0.0
  %2296 = vmatpush1.msra.mxu0 0.0
  %2297 = vmatprep.subr.mxu0 0.0
  %2298 = vmatpush1.msra.mxu0 0.0
  %2299 = vmatprep.subr.mxu0 0.0
  %2300 = vmatpush1.msra.mxu0 0.0
  %2301 = vmatprep.subr.mxu0 0.0
  %2302 = vmatpush1.msra.mxu0 0.0
  %2303 = vmatprep.subr.mxu0 0.0
  %2304 = vmatpush1.msra.mxu0 0.0
  %2305 = vmatprep.subr.mxu0 0.0
  %2306 = vmatpush1.msra.mxu0 0.0
  %2307 = vmatprep.subr.mxu0 0.0
  %2308 = vmatpush1.msra.mxu0 0.0
  %2309 = vmatprep.subr.mxu0 0.0
  %2310 = vmatpush1.msra.mxu0 0.0
  %2311 = vmatprep.subr.mxu0 0.0
  %2312 = vmatpush1.msra.mxu0 0.0
  %2313 = vmatprep.subr.mxu0 0.0
  %2314 = vmatpush1.msra.mxu0 0.0
  %2315 = vmatprep.subr.mxu0 0.0
  %2316 = vmatpush1.msra.mxu0 0.0
  %2317 = vmatprep.subr.mxu0 0.0
  %2318 = vmatpush1.msra.mxu0 0.0
  %2319 = vmatprep.subr.mxu0 0.0
  %2320 = vmatpush1.msra.mxu0 0.0
  %2321 = vmatprep.mubr.f32.mxu0 0.0
  %2322 = vmatmul.mubr.f32.gmra.mrb[0].mxu0 %v151
  %v2323 = vpop.f32.mrb[0].mxu0
  %v2324 = vadd.f32 0.0, %v2323
  %v2325 = vpop.f32.mrb[0].mxu0
  %2326 = vdwg.mxu0
  %2327 = vmatprep.subr.mxu0 0.0
  %2328 = vmatpush1.msra.mxu0 %v1393
  %2329 = vmatprep.subr.mxu0 0.0
  %2330 = vmatpush1.msra.mxu0 %v1394
  %2331 = vmatprep.subr.mxu0 0.0
  %2332 = vmatpush1.msra.mxu0 %v1395
  %2333 = vmatprep.subr.mxu0 0.0
  %2334 = vmatpush1.msra.mxu0 %v1396
  %2335 = vmatprep.subr.mxu0 0.0
  %2336 = vmatpush1.msra.mxu0 %v1397
  %2337 = vmatprep.subr.mxu0 0.0
  %2338 = vmatpush1.msra.mxu0 %v1398
  %2339 = vmatprep.subr.mxu0 0.0
  %2340 = vmatpush1.msra.mxu0 %v1399
  %2341 = vmatprep.subr.mxu0 0.0
  %2342 = vmatpush1.msra.mxu0 %v1400
  %2343 = vmatprep.subr.mxu0 0.0
  %2344 = vmatpush1.msra.mxu0 0.0
  %2345 = vmatprep.subr.mxu0 0.0
  %2346 = vmatpush1.msra.mxu0 0.0
  %2347 = vmatprep.subr.mxu0 0.0
  %2348 = vmatpush1.msra.mxu0 0.0
  %2349 = vmatprep.subr.mxu0 0.0
  %2350 = vmatpush1.msra.mxu0 0.0
  %2351 = vmatprep.subr.mxu0 0.0
  %2352 = vmatpush1.msra.mxu0 0.0
  %2353 = vmatprep.subr.mxu0 0.0
  %2354 = vmatpush1.msra.mxu0 0.0
  %2355 = vmatprep.subr.mxu0 0.0
  %2356 = vmatpush1.msra.mxu0 0.0
  %2357 = vmatprep.subr.mxu0 0.0
  %2358 = vmatpush1.msra.mxu0 0.0
  %2359 = vmatprep.subr.mxu0 0.0
  %2360 = vmatpush1.msra.mxu0 0.0
  %2361 = vmatprep.subr.mxu0 0.0
  %2362 = vmatpush1.msra.mxu0 0.0
  %2363 = vmatprep.subr.mxu0 0.0
  %2364 = vmatpush1.msra.mxu0 0.0
  %2365 = vmatprep.subr.mxu0 0.0
  %2366 = vmatpush1.msra.mxu0 0.0
  %2367 = vmatprep.subr.mxu0 0.0
  %2368 = vmatpush1.msra.mxu0 0.0
  %2369 = vmatprep.subr.mxu0 0.0
  %2370 = vmatpush1.msra.mxu0 0.0
  %2371 = vmatprep.subr.mxu0 0.0
  %2372 = vmatpush1.msra.mxu0 0.0
  %2373 = vmatprep.subr.mxu0 0.0
  %2374 = vmatpush1.msra.mxu0 0.0
  %2375 = vmatprep.subr.mxu0 0.0
  %2376 = vmatpush1.msra.mxu0 0.0
  %2377 = vmatprep.subr.mxu0 0.0
  %2378 = vmatpush1.msra.mxu0 0.0
  %2379 = vmatprep.subr.mxu0 0.0
  %2380 = vmatpush1.msra.mxu0 0.0
  %2381 = vmatprep.subr.mxu0 0.0
  %2382 = vmatpush1.msra.mxu0 0.0
  %2383 = vmatprep.subr.mxu0 0.0
  %2384 = vmatpush1.msra.mxu0 0.0
  %2385 = vmatprep.subr.mxu0 0.0
  %2386 = vmatpush1.msra.mxu0 0.0
  %2387 = vmatprep.subr.mxu0 0.0
  %2388 = vmatpush1.msra.mxu0 0.0
  %2389 = vmatprep.subr.mxu0 0.0
  %2390 = vmatpush1.msra.mxu0 0.0
  %2391 = vmatprep.mubr.f32.mxu0 0.0
  %2392 = vmatmul.mubr.f32.gmra.mrb[0].mxu0 %v151
  %v2393 = vpop.f32.mrb[0].mxu0
  %v2394 = vadd.f32 0.0, %v2393
  %v2395 = vpop.f32.mrb[0].mxu0
  %2396 = vdwg.mxu0
  %2397 = vmatprep.subr.mxu0 0.0
  %2398 = vmatpush1.msra.mxu0 %v1401
  %2399 = vmatprep.subr.mxu0 0.0
  %2400 = vmatpush1.msra.mxu0 %v1402
  %2401 = vmatprep.subr.mxu0 0.0
  %2402 = vmatpush1.msra.mxu0 %v1403
  %2403 = vmatprep.subr.mxu0 0.0
  %2404 = vmatpush1.msra.mxu0 %v1404
  %2405 = vmatprep.subr.mxu0 0.0
  %2406 = vmatpush1.msra.mxu0 %v1405
  %2407 = vmatprep.subr.mxu0 0.0
  %2408 = vmatpush1.msra.mxu0 %v1406
  %2409 = vmatprep.subr.mxu0 0.0
  %2410 = vmatpush1.msra.mxu0 %v1407
  %2411 = vmatprep.subr.mxu0 0.0
  %2412 = vmatpush1.msra.mxu0 %v1408
  %2413 = vmatprep.subr.mxu0 0.0
  %2414 = vmatpush1.msra.mxu0 0.0
  %2415 = vmatprep.subr.mxu0 0.0
  %2416 = vmatpush1.msra.mxu0 0.0
  %2417 = vmatprep.subr.mxu0 0.0
  %2418 = vmatpush1.msra.mxu0 0.0
  %2419 = vmatprep.subr.mxu0 0.0
  %2420 = vmatpush1.msra.mxu0 0.0
  %2421 = vmatprep.subr.mxu0 0.0
  %2422 = vmatpush1.msra.mxu0 0.0
  %2423 = vmatprep.subr.mxu0 0.0
  %2424 = vmatpush1.msra.mxu0 0.0
  %2425 = vmatprep.subr.mxu0 0.0
  %2426 = vmatpush1.msra.mxu0 0.0
  %2427 = vmatprep.subr.mxu0 0.0
  %2428 = vmatpush1.msra.mxu0 0.0
  %2429 = vmatprep.subr.mxu0 0.0
  %2430 = vmatpush1.msra.mxu0 0.0
  %2431 = vmatprep.subr.mxu0 0.0
  %2432 = vmatpush1.msra.mxu0 0.0
  %2433 = vmatprep.subr.mxu0 0.0
  %2434 = vmatpush1.msra.mxu0 0.0
  %2435 = vmatprep.subr.mxu0 0.0
  %2436 = vmatpush1.msra.mxu0 0.0
  %2437 = vmatprep.subr.mxu0 0.0
  %2438 = vmatpush1.msra.mxu0 0.0
  %2439 = vmatprep.subr.mxu0 0.0
  %2440 = vmatpush1.msra.mxu0 0.0
  %2441 = vmatprep.subr.mxu0 0.0
  %2442 = vmatpush1.msra.mxu0 0.0
  %2443 = vmatprep.subr.mxu0 0.0
  %2444 = vmatpush1.msra.mxu0 0.0
  %2445 = vmatprep.subr.mxu0 0.0
  %2446 = vmatpush1.msra.mxu0 0.0
  %2447 = vmatprep.subr.mxu0 0.0
  %2448 = vmatpush1.msra.mxu0 0.0
  %2449 = vmatprep.subr.mxu0 0.0
  %2450 = vmatpush1.msra.mxu0 0.0
  %2451 = vmatprep.subr.mxu0 0.0
  %2452 = vmatpush1.msra.mxu0 0.0
  %2453 = vmatprep.subr.mxu0 0.0
  %2454 = vmatpush1.msra.mxu0 0.0
  %2455 = vmatprep.subr.mxu0 0.0
  %2456 = vmatpush1.msra.mxu0 0.0
  %2457 = vmatprep.subr.mxu0 0.0
  %2458 = vmatpush1.msra.mxu0 0.0
  %2459 = vmatprep.subr.mxu0 0.0
  %2460 = vmatpush1.msra.mxu0 0.0
  %2461 = vmatprep.mubr.f32.mxu0 0.0
  %2462 = vmatmul.mubr.f32.gmra.mrb[0].mxu0 %v151
  %v2463 = vpop.f32.mrb[0].mxu0
  %v2464 = vadd.f32 0.0, %v2463
  %v2465 = vpop.f32.mrb[0].mxu0
  %2466 = vdwg.mxu0
  %2467 = vmatprep.subr.mxu0 0.0
  %2468 = vmatpush1.msra.mxu0 %v1409
  %2469 = vmatprep.subr.mxu0 0.0
  %2470 = vmatpush1.msra.mxu0 %v1410
  %2471 = vmatprep.subr.mxu0 0.0
  %2472 = vmatpush1.msra.mxu0 %v1411
  %2473 = vmatprep.subr.mxu0 0.0
  %2474 = vmatpush1.msra.mxu0 %v1412
  %2475 = vmatprep.subr.mxu0 0.0
  %2476 = vmatpush1.msra.mxu0 %v1413
  %2477 = vmatprep.subr.mxu0 0.0
  %2478 = vmatpush1.msra.mxu0 %v1414
  %2479 = vmatprep.subr.mxu0 0.0
  %2480 = vmatpush1.msra.mxu0 %v1415
  %2481 = vmatprep.subr.mxu0 0.0
  %2482 = vmatpush1.msra.mxu0 %v1416
  %2483 = vmatprep.subr.mxu0 0.0
  %2484 = vmatpush1.msra.mxu0 0.0
  %2485 = vmatprep.subr.mxu0 0.0
  %2486 = vmatpush1.msra.mxu0 0.0
  %2487 = vmatprep.subr.mxu0 0.0
  %2488 = vmatpush1.msra.mxu0 0.0
  %2489 = vmatprep.subr.mxu0 0.0
  %2490 = vmatpush1.msra.mxu0 0.0
  %2491 = vmatprep.subr.mxu0 0.0
  %2492 = vmatpush1.msra.mxu0 0.0
  %2493 = vmatprep.subr.mxu0 0.0
  %2494 = vmatpush1.msra.mxu0 0.0
  %2495 = vmatprep.subr.mxu0 0.0
  %2496 = vmatpush1.msra.mxu0 0.0
  %2497 = vmatprep.subr.mxu0 0.0
  %2498 = vmatpush1.msra.mxu0 0.0
  %2499 = vmatprep.subr.mxu0 0.0
  %2500 = vmatpush1.msra.mxu0 0.0
  %2501 = vmatprep.subr.mxu0 0.0
  %2502 = vmatpush1.msra.mxu0 0.0
  %2503 = vmatprep.subr.mxu0 0.0
  %2504 = vmatpush1.msra.mxu0 0.0
  %2505 = vmatprep.subr.mxu0 0.0
  %2506 = vmatpush1.msra.mxu0 0.0
  %2507 = vmatprep.subr.mxu0 0.0
  %2508 = vmatpush1.msra.mxu0 0.0
  %2509 = vmatprep.subr.mxu0 0.0
  %2510 = vmatpush1.msra.mxu0 0.0
  %2511 = vmatprep.subr.mxu0 0.0
  %2512 = vmatpush1.msra.mxu0 0.0
  %2513 = vmatprep.subr.mxu0 0.0
  %2514 = vmatpush1.msra.mxu0 0.0
  %2515 = vmatprep.subr.mxu0 0.0
  %2516 = vmatpush1.msra.mxu0 0.0
  %2517 = vmatprep.subr.mxu0 0.0
  %2518 = vmatpush1.msra.mxu0 0.0
  %2519 = vmatprep.subr.mxu0 0.0
  %2520 = vmatpush1.msra.mxu0 0.0
  %2521 = vmatprep.subr.mxu0 0.0
  %2522 = vmatpush1.msra.mxu0 0.0
  %2523 = vmatprep.subr.mxu0 0.0
  %2524 = vmatpush1.msra.mxu0 0.0
  %2525 = vmatprep.subr.mxu0 0.0
  %2526 = vmatpush1.msra.mxu0 0.0
  %2527 = vmatprep.subr.mxu0 0.0
  %2528 = vmatpush1.msra.mxu0 0.0
  %2529 = vmatprep.subr.mxu0 0.0
  %2530 = vmatpush1.msra.mxu0 0.0
  %2531 = vmatprep.mubr.f32.mxu0 0.0
  %2532 = vmatmul.mubr.f32.gmra.mrb[0].mxu0 %v151
  %v2533 = vpop.f32.mrb[0].mxu0
  %v2534 = vadd.f32 0.0, %v2533
  %v2535 = vpop.f32.mrb[0].mxu0
  %2536 = vdwg.mxu0
  %v2537 = vmul.f32 %v1484, 0.125
  %v2538 = vmul.f32 %v1554, 0.125
  %v2539 = vmul.f32 %v1624, 0.125
  %v2540 = vmul.f32 %v1694, 0.125
  %v2541 = vmul.f32 %v1764, 0.125
  %v2542 = vmul.f32 %v1834, 0.125
  %v2543 = vmul.f32 %v1904, 0.125
  %v2544 = vmul.f32 %v1974, 0.125
  %v2545 = vmul.f32 %v2044, 0.125
  %v2546 = vmul.f32 %v2114, 0.125
  %v2547 = vmul.f32 %v2184, 0.125
  %v2548 = vmul.f32 %v2254, 0.125
  %v2549 = vmul.f32 %v2324, 0.125
  %v2550 = vmul.f32 %v2394, 0.125
  %v2551 = vmul.f32 %v2464, 0.125
  %v2552 = vmul.f32 %v2534, 0.125
  %v2553 = vld [vmem:[%s3] sm:$0xff]
  %v2554 = vld [vmem:[%s3 + $0x8] sm:$0xff]
  %v2555 = vld [vmem:[%s3 + $0x10] sm:$0xff]
  %v2556 = vld [vmem:[%s3 + $0x18] sm:$0xff]
  %v2557 = vld [vmem:[%s4] sm:$0xff]
  %v2558 = vld [vmem:[%s4 + $0x8] sm:$0xff]
  %v2559 = vld [vmem:[%s4 + $0x10] sm:$0xff]
  %v2560 = vld [vmem:[%s4 + $0x18] sm:$0xff]
  %v2561 = vadd.f32 %v1273, %v2553
  %v2562 = vadd.f32 %v1274, %v2554
  %v2563 = vadd.f32 %v1275, %v2555
  %v2564 = vadd.f32 %v1276, %v2556
  %v2565 = vadd.f32 %v1277, %v2553
  %v2566 = vadd.f32 %v1278, %v2554
  %v2567 = vadd.f32 %v1279, %v2555
  %v2568 = vadd.f32 %v1280, %v2556
  %v2569 = vadd.f32 %v1281, %v2553
  %v2570 = vadd.f32 %v1282, %v2554
  %v2571 = vadd.f32 %v1283, %v2555
  %v2572 = vadd.f32 %v1284, %v2556
  %v2573 = vadd.f32 %v1285, %v2553
  %v2574 = vadd.f32 %v1286, %v2554
  %v2575 = vadd.f32 %v1287, %v2555
  %v2576 = vadd.f32 %v1288, %v2556
  %v2577 = vadd.f32 %v2537, %v2557
  %v2578 = vadd.f32 %v2538, %v2558
  %v2579 = vadd.f32 %v2539, %v2559
  %v2580 = vadd.f32 %v2540, %v2560
  %v2581 = vadd.f32 %v2541, %v2557
  %v2582 = vadd.f32 %v2542, %v2558
  %v2583 = vadd.f32 %v2543, %v2559
  %v2584 = vadd.f32 %v2544, %v2560
  %v2585 = vadd.f32 %v2545, %v2557
  %v2586 = vadd.f32 %v2546, %v2558
  %v2587 = vadd.f32 %v2547, %v2559
  %v2588 = vadd.f32 %v2548, %v2560
  %v2589 = vadd.f32 %v2549, %v2557
  %v2590 = vadd.f32 %v2550, %v2558
  %v2591 = vadd.f32 %v2551, %v2559
  %v2592 = vadd.f32 %v2552, %v2560
  %vm2593 = vcmask 261120
  %v2595 = vsel %vm2593, %v2561, 0
  %v2598 = vsel %vm2593, %v2577, 0
  %2600 = vmatprep.subr.mxu0 0.0
  %2601 = vmatpush1.xpose.msra.mxu0 %v2598
  %2602 = vmatprep.subr.mxu0 0.0
  %2603 = vmatpush1.xpose.msra.mxu0 0.0
  %2604 = vmatprep.subr.mxu0 0.0
  %2605 = vmatpush1.xpose.msra.mxu0 0.0
  %2606 = vmatprep.subr.mxu0 0.0
  %2607 = vmatpush1.xpose.msra.mxu0 0.0
  %2608 = vmatprep.subr.mxu0 0.0
  %2609 = vmatpush1.xpose.msra.mxu0 0.0
  %2610 = vmatprep.subr.mxu0 0.0
  %2611 = vmatpush1.xpose.msra.mxu0 0.0
  %2612 = vmatprep.subr.mxu0 0.0
  %2613 = vmatpush1.xpose.msra.mxu0 0.0
  %2614 = vmatprep.subr.mxu0 0.0
  %2615 = vmatpush1.xpose.msra.mxu0 0.0
  %2616 = vmatprep.subr.mxu0 0.0
  %2617 = vmatpush1.xpose.msra.mxu0 0.0
  %2618 = vmatprep.subr.mxu0 0.0
  %2619 = vmatpush1.xpose.msra.mxu0 0.0
  %2620 = vmatprep.subr.mxu0 0.0
  %2621 = vmatpush1.xpose.msra.mxu0 0.0
  %2622 = vmatprep.subr.mxu0 0.0
  %2623 = vmatpush1.xpose.msra.mxu0 0.0
  %2624 = vmatprep.subr.mxu0 0.0
  %2625 = vmatpush1.xpose.msra.mxu0 0.0
  %2626 = vmatprep.subr.mxu0 0.0
  %2627 = vmatpush1.xpose.msra.mxu0 0.0
  %2628 = vmatprep.subr.mxu0 0.0
  %2629 = vmatpush1.xpose.msra.mxu0 0.0
  %2630 = vmatprep.subr.mxu0 0.0
  %2631 = vmatpush1.xpose.msra.mxu0 0.0
  %2632 = vmatprep.subr.mxu0 0.0
  %2633 = vmatpush1.xpose.msra.mxu0 0.0
  %2634 = vmatprep.subr.mxu0 0.0
  %2635 = vmatpush1.xpose.msra.mxu0 0.0
  %2636 = vmatprep.subr.mxu0 0.0
  %2637 = vmatpush1.xpose.msra.mxu0 0.0
  %2638 = vmatprep.subr.mxu0 0.0
  %2639 = vmatpush1.xpose.msra.mxu0 0.0
  %2640 = vmatprep.subr.mxu0 0.0
  %2641 = vmatpush1.xpose.msra.mxu0 0.0
  %2642 = vmatprep.subr.mxu0 0.0
  %2643 = vmatpush1.xpose.msra.mxu0 0.0
  %2644 = vmatprep.subr.mxu0 0.0
  %2645 = vmatpush1.xpose.msra.mxu0 0.0
  %2646 = vmatprep.subr.mxu0 0.0
  %2647 = vmatpush1.xpose.msra.mxu0 0.0
  %2648 = vmatprep.subr.mxu0 0.0
  %2649 = vmatpush1.xpose.msra.mxu0 0.0
  %2650 = vmatprep.subr.mxu0 0.0
  %2651 = vmatpush1.xpose.msra.mxu0 0.0
  %2652 = vmatprep.subr.mxu0 0.0
  %2653 = vmatpush1.xpose.msra.mxu0 0.0
  %2654 = vmatprep.subr.mxu0 0.0
  %2655 = vmatpush1.xpose.msra.mxu0 0.0
  %2656 = vmatprep.subr.mxu0 0.0
  %2657 = vmatpush1.xpose.msra.mxu0 0.0
  %2658 = vmatprep.subr.mxu0 0.0
  %2659 = vmatpush1.xpose.msra.mxu0 0.0
  %2660 = vmatprep.subr.mxu0 0.0
  %2661 = vmatpush1.xpose.msra.mxu0 0.0
  %2662 = vmatprep.subr.mxu0 0.0
  %2663 = vmatpush1.xpose.msra.mxu0 0.0
  %2664 = vmatprep.mubr.f32.mxu0 0.0
  %2665 = vmatmul.mubr.f32.gmra.mrb[0].mxu0 %v2595
  %v2666 = vpop.f32.mrb[0].mxu0
  %v2667 = vadd.f32 0.0, %v2666
  %v2668 = vpop.f32.mrb[0].mxu0
  %2669 = vdwg.mxu0
  %v2671 = vsel %vm2593, %v2562, 0
  %v2674 = vsel %vm2593, %v2578, 0
  %2676 = vmatprep.subr.mxu0 0.0
  %2677 = vmatpush1.xpose.msra.mxu0 %v2674
  %2678 = vmatprep.subr.mxu0 0.0
  %2679 = vmatpush1.xpose.msra.mxu0 0.0
  %2680 = vmatprep.subr.mxu0 0.0
  %2681 = vmatpush1.xpose.msra.mxu0 0.0
  %2682 = vmatprep.subr.mxu0 0.0
  %2683 = vmatpush1.xpose.msra.mxu0 0.0
  %2684 = vmatprep.subr.mxu0 0.0
  %2685 = vmatpush1.xpose.msra.mxu0 0.0
  %2686 = vmatprep.subr.mxu0 0.0
  %2687 = vmatpush1.xpose.msra.mxu0 0.0
  %2688 = vmatprep.subr.mxu0 0.0
  %2689 = vmatpush1.xpose.msra.mxu0 0.0
  %2690 = vmatprep.subr.mxu0 0.0
  %2691 = vmatpush1.xpose.msra.mxu0 0.0
  %2692 = vmatprep.subr.mxu0 0.0
  %2693 = vmatpush1.xpose.msra.mxu0 0.0
  %2694 = vmatprep.subr.mxu0 0.0
  %2695 = vmatpush1.xpose.msra.mxu0 0.0
  %2696 = vmatprep.subr.mxu0 0.0
  %2697 = vmatpush1.xpose.msra.mxu0 0.0
  %2698 = vmatprep.subr.mxu0 0.0
  %2699 = vmatpush1.xpose.msra.mxu0 0.0
  %2700 = vmatprep.subr.mxu0 0.0
  %2701 = vmatpush1.xpose.msra.mxu0 0.0
  %2702 = vmatprep.subr.mxu0 0.0
  %2703 = vmatpush1.xpose.msra.mxu0 0.0
  %2704 = vmatprep.subr.mxu0 0.0
  %2705 = vmatpush1.xpose.msra.mxu0 0.0
  %2706 = vmatprep.subr.mxu0 0.0
  %2707 = vmatpush1.xpose.msra.mxu0 0.0
  %2708 = vmatprep.subr.mxu0 0.0
  %2709 = vmatpush1.xpose.msra.mxu0 0.0
  %2710 = vmatprep.subr.mxu0 0.0
  %2711 = vmatpush1.xpose.msra.mxu0 0.0
  %2712 = vmatprep.subr.mxu0 0.0
  %2713 = vmatpush1.xpose.msra.mxu0 0.0
  %2714 = vmatprep.subr.mxu0 0.0
  %2715 = vmatpush1.xpose.msra.mxu0 0.0
  %2716 = vmatprep.subr.mxu0 0.0
  %2717 = vmatpush1.xpose.msra.mxu0 0.0
  %2718 = vmatprep.subr.mxu0 0.0
  %2719 = vmatpush1.xpose.msra.mxu0 0.0
  %2720 = vmatprep.subr.mxu0 0.0
  %2721 = vmatpush1.xpose.msra.mxu0 0.0
  %2722 = vmatprep.subr.mxu0 0.0
  %2723 = vmatpush1.xpose.msra.mxu0 0.0
  %2724 = vmatprep.subr.mxu0 0.0
  %2725 = vmatpush1.xpose.msra.mxu0 0.0
  %2726 = vmatprep.subr.mxu0 0.0
  %2727 = vmatpush1.xpose.msra.mxu0 0.0
  %2728 = vmatprep.subr.mxu0 0.0
  %2729 = vmatpush1.xpose.msra.mxu0 0.0
  %2730 = vmatprep.subr.mxu0 0.0
  %2731 = vmatpush1.xpose.msra.mxu0 0.0
  %2732 = vmatprep.subr.mxu0 0.0
  %2733 = vmatpush1.xpose.msra.mxu0 0.0
  %2734 = vmatprep.subr.mxu0 0.0
  %2735 = vmatpush1.xpose.msra.mxu0 0.0
  %2736 = vmatprep.subr.mxu0 0.0
  %2737 = vmatpush1.xpose.msra.mxu0 0.0
  %2738 = vmatprep.subr.mxu0 0.0
  %2739 = vmatpush1.xpose.msra.mxu0 0.0
  %2740 = vmatprep.mubr.f32.mxu0 0.0
  %2741 = vmatmul.mubr.f32.gmra.mrb[0].mxu0 %v2671
  %v2742 = vpop.f32.mrb[0].mxu0
  %v2743 = vadd.f32 0.0, %v2742
  %v2744 = vpop.f32.mrb[0].mxu0
  %2745 = vdwg.mxu0
  %v2747 = vsel %vm2593, %v2563, 0
  %v2750 = vsel %vm2593, %v2579, 0
  %2752 = vmatprep.subr.mxu0 0.0
  %2753 = vmatpush1.xpose.msra.mxu0 %v2750
  %2754 = vmatprep.subr.mxu0 0.0
  %2755 = vmatpush1.xpose.msra.mxu0 0.0
  %2756 = vmatprep.subr.mxu0 0.0
  %2757 = vmatpush1.xpose.msra.mxu0 0.0
  %2758 = vmatprep.subr.mxu0 0.0
  %2759 = vmatpush1.xpose.msra.mxu0 0.0
  %2760 = vmatprep.subr.mxu0 0.0
  %2761 = vmatpush1.xpose.msra.mxu0 0.0
  %2762 = vmatprep.subr.mxu0 0.0
  %2763 = vmatpush1.xpose.msra.mxu0 0.0
  %2764 = vmatprep.subr.mxu0 0.0
  %2765 = vmatpush1.xpose.msra.mxu0 0.0
  %2766 = vmatprep.subr.mxu0 0.0
  %2767 = vmatpush1.xpose.msra.mxu0 0.0
  %2768 = vmatprep.subr.mxu0 0.0
  %2769 = vmatpush1.xpose.msra.mxu0 0.0
  %2770 = vmatprep.subr.mxu0 0.0
  %2771 = vmatpush1.xpose.msra.mxu0 0.0
  %2772 = vmatprep.subr.mxu0 0.0
  %2773 = vmatpush1.xpose.msra.mxu0 0.0
  %2774 = vmatprep.subr.mxu0 0.0
  %2775 = vmatpush1.xpose.msra.mxu0 0.0
  %2776 = vmatprep.subr.mxu0 0.0
  %2777 = vmatpush1.xpose.msra.mxu0 0.0
  %2778 = vmatprep.subr.mxu0 0.0
  %2779 = vmatpush1.xpose.msra.mxu0 0.0
  %2780 = vmatprep.subr.mxu0 0.0
  %2781 = vmatpush1.xpose.msra.mxu0 0.0
  %2782 = vmatprep.subr.mxu0 0.0
  %2783 = vmatpush1.xpose.msra.mxu0 0.0
  %2784 = vmatprep.subr.mxu0 0.0
  %2785 = vmatpush1.xpose.msra.mxu0 0.0
  %2786 = vmatprep.subr.mxu0 0.0
  %2787 = vmatpush1.xpose.msra.mxu0 0.0
  %2788 = vmatprep.subr.mxu0 0.0
  %2789 = vmatpush1.xpose.msra.mxu0 0.0
  %2790 = vmatprep.subr.mxu0 0.0
  %2791 = vmatpush1.xpose.msra.mxu0 0.0
  %2792 = vmatprep.subr.mxu0 0.0
  %2793 = vmatpush1.xpose.msra.mxu0 0.0
  %2794 = vmatprep.subr.mxu0 0.0
  %2795 = vmatpush1.xpose.msra.mxu0 0.0
  %2796 = vmatprep.subr.mxu0 0.0
  %2797 = vmatpush1.xpose.msra.mxu0 0.0
  %2798 = vmatprep.subr.mxu0 0.0
  %2799 = vmatpush1.xpose.msra.mxu0 0.0
  %2800 = vmatprep.subr.mxu0 0.0
  %2801 = vmatpush1.xpose.msra.mxu0 0.0
  %2802 = vmatprep.subr.mxu0 0.0
  %2803 = vmatpush1.xpose.msra.mxu0 0.0
  %2804 = vmatprep.subr.mxu0 0.0
  %2805 = vmatpush1.xpose.msra.mxu0 0.0
  %2806 = vmatprep.subr.mxu0 0.0
  %2807 = vmatpush1.xpose.msra.mxu0 0.0
  %2808 = vmatprep.subr.mxu0 0.0
  %2809 = vmatpush1.xpose.msra.mxu0 0.0
  %2810 = vmatprep.subr.mxu0 0.0
  %2811 = vmatpush1.xpose.msra.mxu0 0.0
  %2812 = vmatprep.subr.mxu0 0.0
  %2813 = vmatpush1.xpose.msra.mxu0 0.0
  %2814 = vmatprep.subr.mxu0 0.0
  %2815 = vmatpush1.xpose.msra.mxu0 0.0
  %2816 = vmatprep.mubr.f32.mxu0 0.0
  %2817 = vmatmul.mubr.f32.gmra.mrb[0].mxu0 %v2747
  %v2818 = vpop.f32.mrb[0].mxu0
  %v2819 = vadd.f32 0.0, %v2818
  %v2820 = vpop.f32.mrb[0].mxu0
  %2821 = vdwg.mxu0
  %v2823 = vsel %vm2593, %v2564, 0
  %v2826 = vsel %vm2593, %v2580, 0
  %2828 = vmatprep.subr.mxu0 0.0
  %2829 = vmatpush1.xpose.msra.mxu0 %v2826
  %2830 = vmatprep.subr.mxu0 0.0
  %2831 = vmatpush1.xpose.msra.mxu0 0.0
  %2832 = vmatprep.subr.mxu0 0.0
  %2833 = vmatpush1.xpose.msra.mxu0 0.0
  %2834 = vmatprep.subr.mxu0 0.0
  %2835 = vmatpush1.xpose.msra.mxu0 0.0
  %2836 = vmatprep.subr.mxu0 0.0
  %2837 = vmatpush1.xpose.msra.mxu0 0.0
  %2838 = vmatprep.subr.mxu0 0.0
  %2839 = vmatpush1.xpose.msra.mxu0 0.0
  %2840 = vmatprep.subr.mxu0 0.0
  %2841 = vmatpush1.xpose.msra.mxu0 0.0
  %2842 = vmatprep.subr.mxu0 0.0
  %2843 = vmatpush1.xpose.msra.mxu0 0.0
  %2844 = vmatprep.subr.mxu0 0.0
  %2845 = vmatpush1.xpose.msra.mxu0 0.0
  %2846 = vmatprep.subr.mxu0 0.0
  %2847 = vmatpush1.xpose.msra.mxu0 0.0
  %2848 = vmatprep.subr.mxu0 0.0
  %2849 = vmatpush1.xpose.msra.mxu0 0.0
  %2850 = vmatprep.subr.mxu0 0.0
  %2851 = vmatpush1.xpose.msra.mxu0 0.0
  %2852 = vmatprep.subr.mxu0 0.0
  %2853 = vmatpush1.xpose.msra.mxu0 0.0
  %2854 = vmatprep.subr.mxu0 0.0
  %2855 = vmatpush1.xpose.msra.mxu0 0.0
  %2856 = vmatprep.subr.mxu0 0.0
  %2857 = vmatpush1.xpose.msra.mxu0 0.0
  %2858 = vmatprep.subr.mxu0 0.0
  %2859 = vmatpush1.xpose.msra.mxu0 0.0
  %2860 = vmatprep.subr.mxu0 0.0
  %2861 = vmatpush1.xpose.msra.mxu0 0.0
  %2862 = vmatprep.subr.mxu0 0.0
  %2863 = vmatpush1.xpose.msra.mxu0 0.0
  %2864 = vmatprep.subr.mxu0 0.0
  %2865 = vmatpush1.xpose.msra.mxu0 0.0
  %2866 = vmatprep.subr.mxu0 0.0
  %2867 = vmatpush1.xpose.msra.mxu0 0.0
  %2868 = vmatprep.subr.mxu0 0.0
  %2869 = vmatpush1.xpose.msra.mxu0 0.0
  %2870 = vmatprep.subr.mxu0 0.0
  %2871 = vmatpush1.xpose.msra.mxu0 0.0
  %2872 = vmatprep.subr.mxu0 0.0
  %2873 = vmatpush1.xpose.msra.mxu0 0.0
  %2874 = vmatprep.subr.mxu0 0.0
  %2875 = vmatpush1.xpose.msra.mxu0 0.0
  %2876 = vmatprep.subr.mxu0 0.0
  %2877 = vmatpush1.xpose.msra.mxu0 0.0
  %2878 = vmatprep.subr.mxu0 0.0
  %2879 = vmatpush1.xpose.msra.mxu0 0.0
  %2880 = vmatprep.subr.mxu0 0.0
  %2881 = vmatpush1.xpose.msra.mxu0 0.0
  %2882 = vmatprep.subr.mxu0 0.0
  %2883 = vmatpush1.xpose.msra.mxu0 0.0
  %2884 = vmatprep.subr.mxu0 0.0
  %2885 = vmatpush1.xpose.msra.mxu0 0.0
  %2886 = vmatprep.subr.mxu0 0.0
  %2887 = vmatpush1.xpose.msra.mxu0 0.0
  %2888 = vmatprep.subr.mxu0 0.0
  %2889 = vmatpush1.xpose.msra.mxu0 0.0
  %2890 = vmatprep.subr.mxu0 0.0
  %2891 = vmatpush1.xpose.msra.mxu0 0.0
  %2892 = vmatprep.mubr.f32.mxu0 0.0
  %2893 = vmatmul.mubr.f32.gmra.mrb[0].mxu0 %v2823
  %v2894 = vpop.f32.mrb[0].mxu0
  %v2895 = vadd.f32 0.0, %v2894
  %v2896 = vpop.f32.mrb[0].mxu0
  %2897 = vdwg.mxu0
  %v2899 = vsel %vm2593, %v2565, 0
  %v2902 = vsel %vm2593, %v2581, 0
  %2904 = vmatprep.subr.mxu0 0.0
  %2905 = vmatpush1.xpose.msra.mxu0 %v2902
  %2906 = vmatprep.subr.mxu0 0.0
  %2907 = vmatpush1.xpose.msra.mxu0 0.0
  %2908 = vmatprep.subr.mxu0 0.0
  %2909 = vmatpush1.xpose.msra.mxu0 0.0
  %2910 = vmatprep.subr.mxu0 0.0
  %2911 = vmatpush1.xpose.msra.mxu0 0.0
  %2912 = vmatprep.subr.mxu0 0.0
  %2913 = vmatpush1.xpose.msra.mxu0 0.0
  %2914 = vmatprep.subr.mxu0 0.0
  %2915 = vmatpush1.xpose.msra.mxu0 0.0
  %2916 = vmatprep.subr.mxu0 0.0
  %2917 = vmatpush1.xpose.msra.mxu0 0.0
  %2918 = vmatprep.subr.mxu0 0.0
  %2919 = vmatpush1.xpose.msra.mxu0 0.0
  %2920 = vmatprep.subr.mxu0 0.0
  %2921 = vmatpush1.xpose.msra.mxu0 0.0
  %2922 = vmatprep.subr.mxu0 0.0
  %2923 = vmatpush1.xpose.msra.mxu0 0.0
  %2924 = vmatprep.subr.mxu0 0.0
  %2925 = vmatpush1.xpose.msra.mxu0 0.0
  %2926 = vmatprep.subr.mxu0 0.0
  %2927 = vmatpush1.xpose.msra.mxu0 0.0
  %2928 = vmatprep.subr.mxu0 0.0
  %2929 = vmatpush1.xpose.msra.mxu0 0.0
  %2930 = vmatprep.subr.mxu0 0.0
  %2931 = vmatpush1.xpose.msra.mxu0 0.0
  %2932 = vmatprep.subr.mxu0 0.0
  %2933 = vmatpush1.xpose.msra.mxu0 0.0
  %2934 = vmatprep.subr.mxu0 0.0
  %2935 = vmatpush1.xpose.msra.mxu0 0.0
  %2936 = vmatprep.subr.mxu0 0.0
  %2937 = vmatpush1.xpose.msra.mxu0 0.0
  %2938 = vmatprep.subr.mxu0 0.0
  %2939 = vmatpush1.xpose.msra.mxu0 0.0
  %2940 = vmatprep.subr.mxu0 0.0
  %2941 = vmatpush1.xpose.msra.mxu0 0.0
  %2942 = vmatprep.subr.mxu0 0.0
  %2943 = vmatpush1.xpose.msra.mxu0 0.0
  %2944 = vmatprep.subr.mxu0 0.0
  %2945 = vmatpush1.xpose.msra.mxu0 0.0
  %2946 = vmatprep.subr.mxu0 0.0
  %2947 = vmatpush1.xpose.msra.mxu0 0.0
  %2948 = vmatprep.subr.mxu0 0.0
  %2949 = vmatpush1.xpose.msra.mxu0 0.0
  %2950 = vmatprep.subr.mxu0 0.0
  %2951 = vmatpush1.xpose.msra.mxu0 0.0
  %2952 = vmatprep.subr.mxu0 0.0
  %2953 = vmatpush1.xpose.msra.mxu0 0.0
  %2954 = vmatprep.subr.mxu0 0.0
  %2955 = vmatpush1.xpose.msra.mxu0 0.0
  %2956 = vmatprep.subr.mxu0 0.0
  %2957 = vmatpush1.xpose.msra.mxu0 0.0
  %2958 = vmatprep.subr.mxu0 0.0
  %2959 = vmatpush1.xpose.msra.mxu0 0.0
  %2960 = vmatprep.subr.mxu0 0.0
  %2961 = vmatpush1.xpose.msra.mxu0 0.0
  %2962 = vmatprep.subr.mxu0 0.0
  %2963 = vmatpush1.xpose.msra.mxu0 0.0
  %2964 = vmatprep.subr.mxu0 0.0
  %2965 = vmatpush1.xpose.msra.mxu0 0.0
  %2966 = vmatprep.subr.mxu0 0.0
  %2967 = vmatpush1.xpose.msra.mxu0 0.0
  %2968 = vmatprep.mubr.f32.mxu0 0.0
  %2969 = vmatmul.mubr.f32.gmra.mrb[0].mxu0 %v2899
  %v2970 = vpop.f32.mrb[0].mxu0
  %v2971 = vadd.f32 0.0, %v2970
  %v2972 = vpop.f32.mrb[0].mxu0
  %2973 = vdwg.mxu0
  %v2975 = vsel %vm2593, %v2566, 0
  %v2978 = vsel %vm2593, %v2582, 0
  %2980 = vmatprep.subr.mxu0 0.0
  %2981 = vmatpush1.xpose.msra.mxu0 %v2978
  %2982 = vmatprep.subr.mxu0 0.0
  %2983 = vmatpush1.xpose.msra.mxu0 0.0
  %2984 = vmatprep.subr.mxu0 0.0
  %2985 = vmatpush1.xpose.msra.mxu0 0.0
  %2986 = vmatprep.subr.mxu0 0.0
  %2987 = vmatpush1.xpose.msra.mxu0 0.0
  %2988 = vmatprep.subr.mxu0 0.0
  %2989 = vmatpush1.xpose.msra.mxu0 0.0
  %2990 = vmatprep.subr.mxu0 0.0
  %2991 = vmatpush1.xpose.msra.mxu0 0.0
  %2992 = vmatprep.subr.mxu0 0.0
  %2993 = vmatpush1.xpose.msra.mxu0 0.0
  %2994 = vmatprep.subr.mxu0 0.0
  %2995 = vmatpush1.xpose.msra.mxu0 0.0
  %2996 = vmatprep.subr.mxu0 0.0
  %2997 = vmatpush1.xpose.msra.mxu0 0.0
  %2998 = vmatprep.subr.mxu0 0.0
  %2999 = vmatpush1.xpose.msra.mxu0 0.0
  %3000 = vmatprep.subr.mxu0 0.0
  %3001 = vmatpush1.xpose.msra.mxu0 0.0
  %3002 = vmatprep.subr.mxu0 0.0
  %3003 = vmatpush1.xpose.msra.mxu0 0.0
  %3004 = vmatprep.subr.mxu0 0.0
  %3005 = vmatpush1.xpose.msra.mxu0 0.0
  %3006 = vmatprep.subr.mxu0 0.0
  %3007 = vmatpush1.xpose.msra.mxu0 0.0
  %3008 = vmatprep.subr.mxu0 0.0
  %3009 = vmatpush1.xpose.msra.mxu0 0.0
  %3010 = vmatprep.subr.mxu0 0.0
  %3011 = vmatpush1.xpose.msra.mxu0 0.0
  %3012 = vmatprep.subr.mxu0 0.0
  %3013 = vmatpush1.xpose.msra.mxu0 0.0
  %3014 = vmatprep.subr.mxu0 0.0
  %3015 = vmatpush1.xpose.msra.mxu0 0.0
  %3016 = vmatprep.subr.mxu0 0.0
  %3017 = vmatpush1.xpose.msra.mxu0 0.0
  %3018 = vmatprep.subr.mxu0 0.0
  %3019 = vmatpush1.xpose.msra.mxu0 0.0
  %3020 = vmatprep.subr.mxu0 0.0
  %3021 = vmatpush1.xpose.msra.mxu0 0.0
  %3022 = vmatprep.subr.mxu0 0.0
  %3023 = vmatpush1.xpose.msra.mxu0 0.0
  %3024 = vmatprep.subr.mxu0 0.0
  %3025 = vmatpush1.xpose.msra.mxu0 0.0
  %3026 = vmatprep.subr.mxu0 0.0
  %3027 = vmatpush1.xpose.msra.mxu0 0.0
  %3028 = vmatprep.subr.mxu0 0.0
  %3029 = vmatpush1.xpose.msra.mxu0 0.0
  %3030 = vmatprep.subr.mxu0 0.0
  %3031 = vmatpush1.xpose.msra.mxu0 0.0
  %3032 = vmatprep.subr.mxu0 0.0
  %3033 = vmatpush1.xpose.msra.mxu0 0.0
  %3034 = vmatprep.subr.mxu0 0.0
  %3035 = vmatpush1.xpose.msra.mxu0 0.0
  %3036 = vmatprep.subr.mxu0 0.0
  %3037 = vmatpush1.xpose.msra.mxu0 0.0
  %3038 = vmatprep.subr.mxu0 0.0
  %3039 = vmatpush1.xpose.msra.mxu0 0.0
  %3040 = vmatprep.subr.mxu0 0.0
  %3041 = vmatpush1.xpose.msra.mxu0 0.0
  %3042 = vmatprep.subr.mxu0 0.0
  %3043 = vmatpush1.xpose.msra.mxu0 0.0
  %3044 = vmatprep.mubr.f32.mxu0 0.0
  %3045 = vmatmul.mubr.f32.gmra.mrb[0].mxu0 %v2975
  %v3046 = vpop.f32.mrb[0].mxu0
  %v3047 = vadd.f32 0.0, %v3046
  %v3048 = vpop.f32.mrb[0].mxu0
  %3049 = vdwg.mxu0
  %v3051 = vsel %vm2593, %v2567, 0
  %v3054 = vsel %vm2593, %v2583, 0
  %3056 = vmatprep.subr.mxu0 0.0
  %3057 = vmatpush1.xpose.msra.mxu0 %v3054
  %3058 = vmatprep.subr.mxu0 0.0
  %3059 = vmatpush1.xpose.msra.mxu0 0.0
  %3060 = vmatprep.subr.mxu0 0.0
  %3061 = vmatpush1.xpose.msra.mxu0 0.0
  %3062 = vmatprep.subr.mxu0 0.0
  %3063 = vmatpush1.xpose.msra.mxu0 0.0
  %3064 = vmatprep.subr.mxu0 0.0
  %3065 = vmatpush1.xpose.msra.mxu0 0.0
  %3066 = vmatprep.subr.mxu0 0.0
  %3067 = vmatpush1.xpose.msra.mxu0 0.0
  %3068 = vmatprep.subr.mxu0 0.0
  %3069 = vmatpush1.xpose.msra.mxu0 0.0
  %3070 = vmatprep.subr.mxu0 0.0
  %3071 = vmatpush1.xpose.msra.mxu0 0.0
  %3072 = vmatprep.subr.mxu0 0.0
  %3073 = vmatpush1.xpose.msra.mxu0 0.0
  %3074 = vmatprep.subr.mxu0 0.0
  %3075 = vmatpush1.xpose.msra.mxu0 0.0
  %3076 = vmatprep.subr.mxu0 0.0
  %3077 = vmatpush1.xpose.msra.mxu0 0.0
  %3078 = vmatprep.subr.mxu0 0.0
  %3079 = vmatpush1.xpose.msra.mxu0 0.0
  %3080 = vmatprep.subr.mxu0 0.0
  %3081 = vmatpush1.xpose.msra.mxu0 0.0
  %3082 = vmatprep.subr.mxu0 0.0
  %3083 = vmatpush1.xpose.msra.mxu0 0.0
  %3084 = vmatprep.subr.mxu0 0.0
  %3085 = vmatpush1.xpose.msra.mxu0 0.0
  %3086 = vmatprep.subr.mxu0 0.0
  %3087 = vmatpush1.xpose.msra.mxu0 0.0
  %3088 = vmatprep.subr.mxu0 0.0
  %3089 = vmatpush1.xpose.msra.mxu0 0.0
  %3090 = vmatprep.subr.mxu0 0.0
  %3091 = vmatpush1.xpose.msra.mxu0 0.0
  %3092 = vmatprep.subr.mxu0 0.0
  %3093 = vmatpush1.xpose.msra.mxu0 0.0
  %3094 = vmatprep.subr.mxu0 0.0
  %3095 = vmatpush1.xpose.msra.mxu0 0.0
  %3096 = vmatprep.subr.mxu0 0.0
  %3097 = vmatpush1.xpose.msra.mxu0 0.0
  %3098 = vmatprep.subr.mxu0 0.0
  %3099 = vmatpush1.xpose.msra.mxu0 0.0
  %3100 = vmatprep.subr.mxu0 0.0
  %3101 = vmatpush1.xpose.msra.mxu0 0.0
  %3102 = vmatprep.subr.mxu0 0.0
  %3103 = vmatpush1.xpose.msra.mxu0 0.0
  %3104 = vmatprep.subr.mxu0 0.0
  %3105 = vmatpush1.xpose.msra.mxu0 0.0
  %3106 = vmatprep.subr.mxu0 0.0
  %3107 = vmatpush1.xpose.msra.mxu0 0.0
  %3108 = vmatprep.subr.mxu0 0.0
  %3109 = vmatpush1.xpose.msra.mxu0 0.0
  %3110 = vmatprep.subr.mxu0 0.0
  %3111 = vmatpush1.xpose.msra.mxu0 0.0
  %3112 = vmatprep.subr.mxu0 0.0
  %3113 = vmatpush1.xpose.msra.mxu0 0.0
  %3114 = vmatprep.subr.mxu0 0.0
  %3115 = vmatpush1.xpose.msra.mxu0 0.0
  %3116 = vmatprep.subr.mxu0 0.0
  %3117 = vmatpush1.xpose.msra.mxu0 0.0
  %3118 = vmatprep.subr.mxu0 0.0
  %3119 = vmatpush1.xpose.msra.mxu0 0.0
  %3120 = vmatprep.mubr.f32.mxu0 0.0
  %3121 = vmatmul.mubr.f32.gmra.mrb[0].mxu0 %v3051
  %v3122 = vpop.f32.mrb[0].mxu0
  %v3123 = vadd.f32 0.0, %v3122
  %v3124 = vpop.f32.mrb[0].mxu0
  %3125 = vdwg.mxu0
  %v3127 = vsel %vm2593, %v2568, 0
  %v3130 = vsel %vm2593, %v2584, 0
  %3132 = vmatprep.subr.mxu0 0.0
  %3133 = vmatpush1.xpose.msra.mxu0 %v3130
  %3134 = vmatprep.subr.mxu0 0.0
  %3135 = vmatpush1.xpose.msra.mxu0 0.0
  %3136 = vmatprep.subr.mxu0 0.0
  %3137 = vmatpush1.xpose.msra.mxu0 0.0
  %3138 = vmatprep.subr.mxu0 0.0
  %3139 = vmatpush1.xpose.msra.mxu0 0.0
  %3140 = vmatprep.subr.mxu0 0.0
  %3141 = vmatpush1.xpose.msra.mxu0 0.0
  %3142 = vmatprep.subr.mxu0 0.0
  %3143 = vmatpush1.xpose.msra.mxu0 0.0
  %3144 = vmatprep.subr.mxu0 0.0
  %3145 = vmatpush1.xpose.msra.mxu0 0.0
  %3146 = vmatprep.subr.mxu0 0.0
  %3147 = vmatpush1.xpose.msra.mxu0 0.0
  %3148 = vmatprep.subr.mxu0 0.0
  %3149 = vmatpush1.xpose.msra.mxu0 0.0
  %3150 = vmatprep.subr.mxu0 0.0
  %3151 = vmatpush1.xpose.msra.mxu0 0.0
  %3152 = vmatprep.subr.mxu0 0.0
  %3153 = vmatpush1.xpose.msra.mxu0 0.0
  %3154 = vmatprep.subr.mxu0 0.0
  %3155 = vmatpush1.xpose.msra.mxu0 0.0
  %3156 = vmatprep.subr.mxu0 0.0
  %3157 = vmatpush1.xpose.msra.mxu0 0.0
  %3158 = vmatprep.subr.mxu0 0.0
  %3159 = vmatpush1.xpose.msra.mxu0 0.0
  %3160 = vmatprep.subr.mxu0 0.0
  %3161 = vmatpush1.xpose.msra.mxu0 0.0
  %3162 = vmatprep.subr.mxu0 0.0
  %3163 = vmatpush1.xpose.msra.mxu0 0.0
  %3164 = vmatprep.subr.mxu0 0.0
  %3165 = vmatpush1.xpose.msra.mxu0 0.0
  %3166 = vmatprep.subr.mxu0 0.0
  %3167 = vmatpush1.xpose.msra.mxu0 0.0
  %3168 = vmatprep.subr.mxu0 0.0
  %3169 = vmatpush1.xpose.msra.mxu0 0.0
  %3170 = vmatprep.subr.mxu0 0.0
  %3171 = vmatpush1.xpose.msra.mxu0 0.0
  %3172 = vmatprep.subr.mxu0 0.0
  %3173 = vmatpush1.xpose.msra.mxu0 0.0
  %3174 = vmatprep.subr.mxu0 0.0
  %3175 = vmatpush1.xpose.msra.mxu0 0.0
  %3176 = vmatprep.subr.mxu0 0.0
  %3177 = vmatpush1.xpose.msra.mxu0 0.0
  %3178 = vmatprep.subr.mxu0 0.0
  %3179 = vmatpush1.xpose.msra.mxu0 0.0
  %3180 = vmatprep.subr.mxu0 0.0
  %3181 = vmatpush1.xpose.msra.mxu0 0.0
  %3182 = vmatprep.subr.mxu0 0.0
  %3183 = vmatpush1.xpose.msra.mxu0 0.0
  %3184 = vmatprep.subr.mxu0 0.0
  %3185 = vmatpush1.xpose.msra.mxu0 0.0
  %3186 = vmatprep.subr.mxu0 0.0
  %3187 = vmatpush1.xpose.msra.mxu0 0.0
  %3188 = vmatprep.subr.mxu0 0.0
  %3189 = vmatpush1.xpose.msra.mxu0 0.0
  %3190 = vmatprep.subr.mxu0 0.0
  %3191 = vmatpush1.xpose.msra.mxu0 0.0
  %3192 = vmatprep.subr.mxu0 0.0
  %3193 = vmatpush1.xpose.msra.mxu0 0.0
  %3194 = vmatprep.subr.mxu0 0.0
  %3195 = vmatpush1.xpose.msra.mxu0 0.0
  %3196 = vmatprep.mubr.f32.mxu0 0.0
  %3197 = vmatmul.mubr.f32.gmra.mrb[0].mxu0 %v3127
  %v3198 = vpop.f32.mrb[0].mxu0
  %v3199 = vadd.f32 0.0, %v3198
  %v3200 = vpop.f32.mrb[0].mxu0
  %3201 = vdwg.mxu0
  %v3203 = vsel %vm2593, %v2569, 0
  %v3206 = vsel %vm2593, %v2585, 0
  %3208 = vmatprep.subr.mxu0 0.0
  %3209 = vmatpush1.xpose.msra.mxu0 %v3206
  %3210 = vmatprep.subr.mxu0 0.0
  %3211 = vmatpush1.xpose.msra.mxu0 0.0
  %3212 = vmatprep.subr.mxu0 0.0
  %3213 = vmatpush1.xpose.msra.mxu0 0.0
  %3214 = vmatprep.subr.mxu0 0.0
  %3215 = vmatpush1.xpose.msra.mxu0 0.0
  %3216 = vmatprep.subr.mxu0 0.0
  %3217 = vmatpush1.xpose.msra.mxu0 0.0
  %3218 = vmatprep.subr.mxu0 0.0
  %3219 = vmatpush1.xpose.msra.mxu0 0.0
  %3220 = vmatprep.subr.mxu0 0.0
  %3221 = vmatpush1.xpose.msra.mxu0 0.0
  %3222 = vmatprep.subr.mxu0 0.0
  %3223 = vmatpush1.xpose.msra.mxu0 0.0
  %3224 = vmatprep.subr.mxu0 0.0
  %3225 = vmatpush1.xpose.msra.mxu0 0.0
  %3226 = vmatprep.subr.mxu0 0.0
  %3227 = vmatpush1.xpose.msra.mxu0 0.0
  %3228 = vmatprep.subr.mxu0 0.0
  %3229 = vmatpush1.xpose.msra.mxu0 0.0
  %3230 = vmatprep.subr.mxu0 0.0
  %3231 = vmatpush1.xpose.msra.mxu0 0.0
  %3232 = vmatprep.subr.mxu0 0.0
  %3233 = vmatpush1.xpose.msra.mxu0 0.0
  %3234 = vmatprep.subr.mxu0 0.0
  %3235 = vmatpush1.xpose.msra.mxu0 0.0
  %3236 = vmatprep.subr.mxu0 0.0
  %3237 = vmatpush1.xpose.msra.mxu0 0.0
  %3238 = vmatprep.subr.mxu0 0.0
  %3239 = vmatpush1.xpose.msra.mxu0 0.0
  %3240 = vmatprep.subr.mxu0 0.0
  %3241 = vmatpush1.xpose.msra.mxu0 0.0
  %3242 = vmatprep.subr.mxu0 0.0
  %3243 = vmatpush1.xpose.msra.mxu0 0.0
  %3244 = vmatprep.subr.mxu0 0.0
  %3245 = vmatpush1.xpose.msra.mxu0 0.0
  %3246 = vmatprep.subr.mxu0 0.0
  %3247 = vmatpush1.xpose.msra.mxu0 0.0
  %3248 = vmatprep.subr.mxu0 0.0
  %3249 = vmatpush1.xpose.msra.mxu0 0.0
  %3250 = vmatprep.subr.mxu0 0.0
  %3251 = vmatpush1.xpose.msra.mxu0 0.0
  %3252 = vmatprep.subr.mxu0 0.0
  %3253 = vmatpush1.xpose.msra.mxu0 0.0
  %3254 = vmatprep.subr.mxu0 0.0
  %3255 = vmatpush1.xpose.msra.mxu0 0.0
  %3256 = vmatprep.subr.mxu0 0.0
  %3257 = vmatpush1.xpose.msra.mxu0 0.0
  %3258 = vmatprep.subr.mxu0 0.0
  %3259 = vmatpush1.xpose.msra.mxu0 0.0
  %3260 = vmatprep.subr.mxu0 0.0
  %3261 = vmatpush1.xpose.msra.mxu0 0.0
  %3262 = vmatprep.subr.mxu0 0.0
  %3263 = vmatpush1.xpose.msra.mxu0 0.0
  %3264 = vmatprep.subr.mxu0 0.0
  %3265 = vmatpush1.xpose.msra.mxu0 0.0
  %3266 = vmatprep.subr.mxu0 0.0
  %3267 = vmatpush1.xpose.msra.mxu0 0.0
  %3268 = vmatprep.subr.mxu0 0.0
  %3269 = vmatpush1.xpose.msra.mxu0 0.0
  %3270 = vmatprep.subr.mxu0 0.0
  %3271 = vmatpush1.xpose.msra.mxu0 0.0
  %3272 = vmatprep.mubr.f32.mxu0 0.0
  %3273 = vmatmul.mubr.f32.gmra.mrb[0].mxu0 %v3203
  %v3274 = vpop.f32.mrb[0].mxu0
  %v3275 = vadd.f32 0.0, %v3274
  %v3276 = vpop.f32.mrb[0].mxu0
  %3277 = vdwg.mxu0
  %v3279 = vsel %vm2593, %v2570, 0
  %v3282 = vsel %vm2593, %v2586, 0
  %3284 = vmatprep.subr.mxu0 0.0
  %3285 = vmatpush1.xpose.msra.mxu0 %v3282
  %3286 = vmatprep.subr.mxu0 0.0
  %3287 = vmatpush1.xpose.msra.mxu0 0.0
  %3288 = vmatprep.subr.mxu0 0.0
  %3289 = vmatpush1.xpose.msra.mxu0 0.0
  %3290 = vmatprep.subr.mxu0 0.0
  %3291 = vmatpush1.xpose.msra.mxu0 0.0
  %3292 = vmatprep.subr.mxu0 0.0
  %3293 = vmatpush1.xpose.msra.mxu0 0.0
  %3294 = vmatprep.subr.mxu0 0.0
  %3295 = vmatpush1.xpose.msra.mxu0 0.0
  %3296 = vmatprep.subr.mxu0 0.0
  %3297 = vmatpush1.xpose.msra.mxu0 0.0
  %3298 = vmatprep.subr.mxu0 0.0
  %3299 = vmatpush1.xpose.msra.mxu0 0.0
  %3300 = vmatprep.subr.mxu0 0.0
  %3301 = vmatpush1.xpose.msra.mxu0 0.0
  %3302 = vmatprep.subr.mxu0 0.0
  %3303 = vmatpush1.xpose.msra.mxu0 0.0
  %3304 = vmatprep.subr.mxu0 0.0
  %3305 = vmatpush1.xpose.msra.mxu0 0.0
  %3306 = vmatprep.subr.mxu0 0.0
  %3307 = vmatpush1.xpose.msra.mxu0 0.0
  %3308 = vmatprep.subr.mxu0 0.0
  %3309 = vmatpush1.xpose.msra.mxu0 0.0
  %3310 = vmatprep.subr.mxu0 0.0
  %3311 = vmatpush1.xpose.msra.mxu0 0.0
  %3312 = vmatprep.subr.mxu0 0.0
  %3313 = vmatpush1.xpose.msra.mxu0 0.0
  %3314 = vmatprep.subr.mxu0 0.0
  %3315 = vmatpush1.xpose.msra.mxu0 0.0
  %3316 = vmatprep.subr.mxu0 0.0
  %3317 = vmatpush1.xpose.msra.mxu0 0.0
  %3318 = vmatprep.subr.mxu0 0.0
  %3319 = vmatpush1.xpose.msra.mxu0 0.0
  %3320 = vmatprep.subr.mxu0 0.0
  %3321 = vmatpush1.xpose.msra.mxu0 0.0
  %3322 = vmatprep.subr.mxu0 0.0
  %3323 = vmatpush1.xpose.msra.mxu0 0.0
  %3324 = vmatprep.subr.mxu0 0.0
  %3325 = vmatpush1.xpose.msra.mxu0 0.0
  %3326 = vmatprep.subr.mxu0 0.0
  %3327 = vmatpush1.xpose.msra.mxu0 0.0
  %3328 = vmatprep.subr.mxu0 0.0
  %3329 = vmatpush1.xpose.msra.mxu0 0.0
  %3330 = vmatprep.subr.mxu0 0.0
  %3331 = vmatpush1.xpose.msra.mxu0 0.0
  %3332 = vmatprep.subr.mxu0 0.0
  %3333 = vmatpush1.xpose.msra.mxu0 0.0
  %3334 = vmatprep.subr.mxu0 0.0
  %3335 = vmatpush1.xpose.msra.mxu0 0.0
  %3336 = vmatprep.subr.mxu0 0.0
  %3337 = vmatpush1.xpose.msra.mxu0 0.0
  %3338 = vmatprep.subr.mxu0 0.0
  %3339 = vmatpush1.xpose.msra.mxu0 0.0
  %3340 = vmatprep.subr.mxu0 0.0
  %3341 = vmatpush1.xpose.msra.mxu0 0.0
  %3342 = vmatprep.subr.mxu0 0.0
  %3343 = vmatpush1.xpose.msra.mxu0 0.0
  %3344 = vmatprep.subr.mxu0 0.0
  %3345 = vmatpush1.xpose.msra.mxu0 0.0
  %3346 = vmatprep.subr.mxu0 0.0
  %3347 = vmatpush1.xpose.msra.mxu0 0.0
  %3348 = vmatprep.mubr.f32.mxu0 0.0
  %3349 = vmatmul.mubr.f32.gmra.mrb[0].mxu0 %v3279
  %v3350 = vpop.f32.mrb[0].mxu0
  %v3351 = vadd.f32 0.0, %v3350
  %v3352 = vpop.f32.mrb[0].mxu0
  %3353 = vdwg.mxu0
  %v3355 = vsel %vm2593, %v2571, 0
  %v3358 = vsel %vm2593, %v2587, 0
  %3360 = vmatprep.subr.mxu0 0.0
  %3361 = vmatpush1.xpose.msra.mxu0 %v3358
  %3362 = vmatprep.subr.mxu0 0.0
  %3363 = vmatpush1.xpose.msra.mxu0 0.0
  %3364 = vmatprep.subr.mxu0 0.0
  %3365 = vmatpush1.xpose.msra.mxu0 0.0
  %3366 = vmatprep.subr.mxu0 0.0
  %3367 = vmatpush1.xpose.msra.mxu0 0.0
  %3368 = vmatprep.subr.mxu0 0.0
  %3369 = vmatpush1.xpose.msra.mxu0 0.0
  %3370 = vmatprep.subr.mxu0 0.0
  %3371 = vmatpush1.xpose.msra.mxu0 0.0
  %3372 = vmatprep.subr.mxu0 0.0
  %3373 = vmatpush1.xpose.msra.mxu0 0.0
  %3374 = vmatprep.subr.mxu0 0.0
  %3375 = vmatpush1.xpose.msra.mxu0 0.0
  %3376 = vmatprep.subr.mxu0 0.0
  %3377 = vmatpush1.xpose.msra.mxu0 0.0
  %3378 = vmatprep.subr.mxu0 0.0
  %3379 = vmatpush1.xpose.msra.mxu0 0.0
  %3380 = vmatprep.subr.mxu0 0.0
  %3381 = vmatpush1.xpose.msra.mxu0 0.0
  %3382 = vmatprep.subr.mxu0 0.0
  %3383 = vmatpush1.xpose.msra.mxu0 0.0
  %3384 = vmatprep.subr.mxu0 0.0
  %3385 = vmatpush1.xpose.msra.mxu0 0.0
  %3386 = vmatprep.subr.mxu0 0.0
  %3387 = vmatpush1.xpose.msra.mxu0 0.0
  %3388 = vmatprep.subr.mxu0 0.0
  %3389 = vmatpush1.xpose.msra.mxu0 0.0
  %3390 = vmatprep.subr.mxu0 0.0
  %3391 = vmatpush1.xpose.msra.mxu0 0.0
  %3392 = vmatprep.subr.mxu0 0.0
  %3393 = vmatpush1.xpose.msra.mxu0 0.0
  %3394 = vmatprep.subr.mxu0 0.0
  %3395 = vmatpush1.xpose.msra.mxu0 0.0
  %3396 = vmatprep.subr.mxu0 0.0
  %3397 = vmatpush1.xpose.msra.mxu0 0.0
  %3398 = vmatprep.subr.mxu0 0.0
  %3399 = vmatpush1.xpose.msra.mxu0 0.0
  %3400 = vmatprep.subr.mxu0 0.0
  %3401 = vmatpush1.xpose.msra.mxu0 0.0
  %3402 = vmatprep.subr.mxu0 0.0
  %3403 = vmatpush1.xpose.msra.mxu0 0.0
  %3404 = vmatprep.subr.mxu0 0.0
  %3405 = vmatpush1.xpose.msra.mxu0 0.0
  %3406 = vmatprep.subr.mxu0 0.0
  %3407 = vmatpush1.xpose.msra.mxu0 0.0
  %3408 = vmatprep.subr.mxu0 0.0
  %3409 = vmatpush1.xpose.msra.mxu0 0.0
  %3410 = vmatprep.subr.mxu0 0.0
  %3411 = vmatpush1.xpose.msra.mxu0 0.0
  %3412 = vmatprep.subr.mxu0 0.0
  %3413 = vmatpush1.xpose.msra.mxu0 0.0
  %3414 = vmatprep.subr.mxu0 0.0
  %3415 = vmatpush1.xpose.msra.mxu0 0.0
  %3416 = vmatprep.subr.mxu0 0.0
  %3417 = vmatpush1.xpose.msra.mxu0 0.0
  %3418 = vmatprep.subr.mxu0 0.0
  %3419 = vmatpush1.xpose.msra.mxu0 0.0
  %3420 = vmatprep.subr.mxu0 0.0
  %3421 = vmatpush1.xpose.msra.mxu0 0.0
  %3422 = vmatprep.subr.mxu0 0.0
  %3423 = vmatpush1.xpose.msra.mxu0 0.0
  %3424 = vmatprep.mubr.f32.mxu0 0.0
  %3425 = vmatmul.mubr.f32.gmra.mrb[0].mxu0 %v3355
  %v3426 = vpop.f32.mrb[0].mxu0
  %v3427 = vadd.f32 0.0, %v3426
  %v3428 = vpop.f32.mrb[0].mxu0
  %3429 = vdwg.mxu0
  %v3431 = vsel %vm2593, %v2572, 0
  %v3434 = vsel %vm2593, %v2588, 0
  %3436 = vmatprep.subr.mxu0 0.0
  %3437 = vmatpush1.xpose.msra.mxu0 %v3434
  %3438 = vmatprep.subr.mxu0 0.0
  %3439 = vmatpush1.xpose.msra.mxu0 0.0
  %3440 = vmatprep.subr.mxu0 0.0
  %3441 = vmatpush1.xpose.msra.mxu0 0.0
  %3442 = vmatprep.subr.mxu0 0.0
  %3443 = vmatpush1.xpose.msra.mxu0 0.0
  %3444 = vmatprep.subr.mxu0 0.0
  %3445 = vmatpush1.xpose.msra.mxu0 0.0
  %3446 = vmatprep.subr.mxu0 0.0
  %3447 = vmatpush1.xpose.msra.mxu0 0.0
  %3448 = vmatprep.subr.mxu0 0.0
  %3449 = vmatpush1.xpose.msra.mxu0 0.0
  %3450 = vmatprep.subr.mxu0 0.0
  %3451 = vmatpush1.xpose.msra.mxu0 0.0
  %3452 = vmatprep.subr.mxu0 0.0
  %3453 = vmatpush1.xpose.msra.mxu0 0.0
  %3454 = vmatprep.subr.mxu0 0.0
  %3455 = vmatpush1.xpose.msra.mxu0 0.0
  %3456 = vmatprep.subr.mxu0 0.0
  %3457 = vmatpush1.xpose.msra.mxu0 0.0
  %3458 = vmatprep.subr.mxu0 0.0
  %3459 = vmatpush1.xpose.msra.mxu0 0.0
  %3460 = vmatprep.subr.mxu0 0.0
  %3461 = vmatpush1.xpose.msra.mxu0 0.0
  %3462 = vmatprep.subr.mxu0 0.0
  %3463 = vmatpush1.xpose.msra.mxu0 0.0
  %3464 = vmatprep.subr.mxu0 0.0
  %3465 = vmatpush1.xpose.msra.mxu0 0.0
  %3466 = vmatprep.subr.mxu0 0.0
  %3467 = vmatpush1.xpose.msra.mxu0 0.0
  %3468 = vmatprep.subr.mxu0 0.0
  %3469 = vmatpush1.xpose.msra.mxu0 0.0
  %3470 = vmatprep.subr.mxu0 0.0
  %3471 = vmatpush1.xpose.msra.mxu0 0.0
  %3472 = vmatprep.subr.mxu0 0.0
  %3473 = vmatpush1.xpose.msra.mxu0 0.0
  %3474 = vmatprep.subr.mxu0 0.0
  %3475 = vmatpush1.xpose.msra.mxu0 0.0
  %3476 = vmatprep.subr.mxu0 0.0
  %3477 = vmatpush1.xpose.msra.mxu0 0.0
  %3478 = vmatprep.subr.mxu0 0.0
  %3479 = vmatpush1.xpose.msra.mxu0 0.0
  %3480 = vmatprep.subr.mxu0 0.0
  %3481 = vmatpush1.xpose.msra.mxu0 0.0
  %3482 = vmatprep.subr.mxu0 0.0
  %3483 = vmatpush1.xpose.msra.mxu0 0.0
  %3484 = vmatprep.subr.mxu0 0.0
  %3485 = vmatpush1.xpose.msra.mxu0 0.0
  %3486 = vmatprep.subr.mxu0 0.0
  %3487 = vmatpush1.xpose.msra.mxu0 0.0
  %3488 = vmatprep.subr.mxu0 0.0
  %3489 = vmatpush1.xpose.msra.mxu0 0.0
  %3490 = vmatprep.subr.mxu0 0.0
  %3491 = vmatpush1.xpose.msra.mxu0 0.0
  %3492 = vmatprep.subr.mxu0 0.0
  %3493 = vmatpush1.xpose.msra.mxu0 0.0
  %3494 = vmatprep.subr.mxu0 0.0
  %3495 = vmatpush1.xpose.msra.mxu0 0.0
  %3496 = vmatprep.subr.mxu0 0.0
  %3497 = vmatpush1.xpose.msra.mxu0 0.0
  %3498 = vmatprep.subr.mxu0 0.0
  %3499 = vmatpush1.xpose.msra.mxu0 0.0
  %3500 = vmatprep.mubr.f32.mxu0 0.0
  %3501 = vmatmul.mubr.f32.gmra.mrb[0].mxu0 %v3431
  %v3502 = vpop.f32.mrb[0].mxu0
  %v3503 = vadd.f32 0.0, %v3502
  %v3504 = vpop.f32.mrb[0].mxu0
  %3505 = vdwg.mxu0
  %v3507 = vsel %vm2593, %v2573, 0
  %v3510 = vsel %vm2593, %v2589, 0
  %3512 = vmatprep.subr.mxu0 0.0
  %3513 = vmatpush1.xpose.msra.mxu0 %v3510
  %3514 = vmatprep.subr.mxu0 0.0
  %3515 = vmatpush1.xpose.msra.mxu0 0.0
  %3516 = vmatprep.subr.mxu0 0.0
  %3517 = vmatpush1.xpose.msra.mxu0 0.0
  %3518 = vmatprep.subr.mxu0 0.0
  %3519 = vmatpush1.xpose.msra.mxu0 0.0
  %3520 = vmatprep.subr.mxu0 0.0
  %3521 = vmatpush1.xpose.msra.mxu0 0.0
  %3522 = vmatprep.subr.mxu0 0.0
  %3523 = vmatpush1.xpose.msra.mxu0 0.0
  %3524 = vmatprep.subr.mxu0 0.0
  %3525 = vmatpush1.xpose.msra.mxu0 0.0
  %3526 = vmatprep.subr.mxu0 0.0
  %3527 = vmatpush1.xpose.msra.mxu0 0.0
  %3528 = vmatprep.subr.mxu0 0.0
  %3529 = vmatpush1.xpose.msra.mxu0 0.0
  %3530 = vmatprep.subr.mxu0 0.0
  %3531 = vmatpush1.xpose.msra.mxu0 0.0
  %3532 = vmatprep.subr.mxu0 0.0
  %3533 = vmatpush1.xpose.msra.mxu0 0.0
  %3534 = vmatprep.subr.mxu0 0.0
  %3535 = vmatpush1.xpose.msra.mxu0 0.0
  %3536 = vmatprep.subr.mxu0 0.0
  %3537 = vmatpush1.xpose.msra.mxu0 0.0
  %3538 = vmatprep.subr.mxu0 0.0
  %3539 = vmatpush1.xpose.msra.mxu0 0.0
  %3540 = vmatprep.subr.mxu0 0.0
  %3541 = vmatpush1.xpose.msra.mxu0 0.0
  %3542 = vmatprep.subr.mxu0 0.0
  %3543 = vmatpush1.xpose.msra.mxu0 0.0
  %3544 = vmatprep.subr.mxu0 0.0
  %3545 = vmatpush1.xpose.msra.mxu0 0.0
  %3546 = vmatprep.subr.mxu0 0.0
  %3547 = vmatpush1.xpose.msra.mxu0 0.0
  %3548 = vmatprep.subr.mxu0 0.0
  %3549 = vmatpush1.xpose.msra.mxu0 0.0
  %3550 = vmatprep.subr.mxu0 0.0
  %3551 = vmatpush1.xpose.msra.mxu0 0.0
  %3552 = vmatprep.subr.mxu0 0.0
  %3553 = vmatpush1.xpose.msra.mxu0 0.0
  %3554 = vmatprep.subr.mxu0 0.0
  %3555 = vmatpush1.xpose.msra.mxu0 0.0
  %3556 = vmatprep.subr.mxu0 0.0
  %3557 = vmatpush1.xpose.msra.mxu0 0.0
  %3558 = vmatprep.subr.mxu0 0.0
  %3559 = vmatpush1.xpose.msra.mxu0 0.0
  %3560 = vmatprep.subr.mxu0 0.0
  %3561 = vmatpush1.xpose.msra.mxu0 0.0
  %3562 = vmatprep.subr.mxu0 0.0
  %3563 = vmatpush1.xpose.msra.mxu0 0.0
  %3564 = vmatprep.subr.mxu0 0.0
  %3565 = vmatpush1.xpose.msra.mxu0 0.0
  %3566 = vmatprep.subr.mxu0 0.0
  %3567 = vmatpush1.xpose.msra.mxu0 0.0
  %3568 = vmatprep.subr.mxu0 0.0
  %3569 = vmatpush1.xpose.msra.mxu0 0.0
  %3570 = vmatprep.subr.mxu0 0.0
  %3571 = vmatpush1.xpose.msra.mxu0 0.0
  %3572 = vmatprep.subr.mxu0 0.0
  %3573 = vmatpush1.xpose.msra.mxu0 0.0
  %3574 = vmatprep.subr.mxu0 0.0
  %3575 = vmatpush1.xpose.msra.mxu0 0.0
  %3576 = vmatprep.mubr.f32.mxu0 0.0
  %3577 = vmatmul.mubr.f32.gmra.mrb[0].mxu0 %v3507
  %v3578 = vpop.f32.mrb[0].mxu0
  %v3579 = vadd.f32 0.0, %v3578
  %v3580 = vpop.f32.mrb[0].mxu0
  %3581 = vdwg.mxu0
  %v3583 = vsel %vm2593, %v2574, 0
  %v3586 = vsel %vm2593, %v2590, 0
  %3588 = vmatprep.subr.mxu0 0.0
  %3589 = vmatpush1.xpose.msra.mxu0 %v3586
  %3590 = vmatprep.subr.mxu0 0.0
  %3591 = vmatpush1.xpose.msra.mxu0 0.0
  %3592 = vmatprep.subr.mxu0 0.0
  %3593 = vmatpush1.xpose.msra.mxu0 0.0
  %3594 = vmatprep.subr.mxu0 0.0
  %3595 = vmatpush1.xpose.msra.mxu0 0.0
  %3596 = vmatprep.subr.mxu0 0.0
  %3597 = vmatpush1.xpose.msra.mxu0 0.0
  %3598 = vmatprep.subr.mxu0 0.0
  %3599 = vmatpush1.xpose.msra.mxu0 0.0
  %3600 = vmatprep.subr.mxu0 0.0
  %3601 = vmatpush1.xpose.msra.mxu0 0.0
  %3602 = vmatprep.subr.mxu0 0.0
  %3603 = vmatpush1.xpose.msra.mxu0 0.0
  %3604 = vmatprep.subr.mxu0 0.0
  %3605 = vmatpush1.xpose.msra.mxu0 0.0
  %3606 = vmatprep.subr.mxu0 0.0
  %3607 = vmatpush1.xpose.msra.mxu0 0.0
  %3608 = vmatprep.subr.mxu0 0.0
  %3609 = vmatpush1.xpose.msra.mxu0 0.0
  %3610 = vmatprep.subr.mxu0 0.0
  %3611 = vmatpush1.xpose.msra.mxu0 0.0
  %3612 = vmatprep.subr.mxu0 0.0
  %3613 = vmatpush1.xpose.msra.mxu0 0.0
  %3614 = vmatprep.subr.mxu0 0.0
  %3615 = vmatpush1.xpose.msra.mxu0 0.0
  %3616 = vmatprep.subr.mxu0 0.0
  %3617 = vmatpush1.xpose.msra.mxu0 0.0
  %3618 = vmatprep.subr.mxu0 0.0
  %3619 = vmatpush1.xpose.msra.mxu0 0.0
  %3620 = vmatprep.subr.mxu0 0.0
  %3621 = vmatpush1.xpose.msra.mxu0 0.0
  %3622 = vmatprep.subr.mxu0 0.0
  %3623 = vmatpush1.xpose.msra.mxu0 0.0
  %3624 = vmatprep.subr.mxu0 0.0
  %3625 = vmatpush1.xpose.msra.mxu0 0.0
  %3626 = vmatprep.subr.mxu0 0.0
  %3627 = vmatpush1.xpose.msra.mxu0 0.0
  %3628 = vmatprep.subr.mxu0 0.0
  %3629 = vmatpush1.xpose.msra.mxu0 0.0
  %3630 = vmatprep.subr.mxu0 0.0
  %3631 = vmatpush1.xpose.msra.mxu0 0.0
  %3632 = vmatprep.subr.mxu0 0.0
  %3633 = vmatpush1.xpose.msra.mxu0 0.0
  %3634 = vmatprep.subr.mxu0 0.0
  %3635 = vmatpush1.xpose.msra.mxu0 0.0
  %3636 = vmatprep.subr.mxu0 0.0
  %3637 = vmatpush1.xpose.msra.mxu0 0.0
  %3638 = vmatprep.subr.mxu0 0.0
  %3639 = vmatpush1.xpose.msra.mxu0 0.0
  %3640 = vmatprep.subr.mxu0 0.0
  %3641 = vmatpush1.xpose.msra.mxu0 0.0
  %3642 = vmatprep.subr.mxu0 0.0
  %3643 = vmatpush1.xpose.msra.mxu0 0.0
  %3644 = vmatprep.subr.mxu0 0.0
  %3645 = vmatpush1.xpose.msra.mxu0 0.0
  %3646 = vmatprep.subr.mxu0 0.0
  %3647 = vmatpush1.xpose.msra.mxu0 0.0
  %3648 = vmatprep.subr.mxu0 0.0
  %3649 = vmatpush1.xpose.msra.mxu0 0.0
  %3650 = vmatprep.subr.mxu0 0.0
  %3651 = vmatpush1.xpose.msra.mxu0 0.0
  %3652 = vmatprep.mubr.f32.mxu0 0.0
  %3653 = vmatmul.mubr.f32.gmra.mrb[0].mxu0 %v3583
  %v3654 = vpop.f32.mrb[0].mxu0
  %v3655 = vadd.f32 0.0, %v3654
  %v3656 = vpop.f32.mrb[0].mxu0
  %3657 = vdwg.mxu0
  %v3659 = vsel %vm2593, %v2575, 0
  %v3662 = vsel %vm2593, %v2591, 0
  %3664 = vmatprep.subr.mxu0 0.0
  %3665 = vmatpush1.xpose.msra.mxu0 %v3662
  %3666 = vmatprep.subr.mxu0 0.0
  %3667 = vmatpush1.xpose.msra.mxu0 0.0
  %3668 = vmatprep.subr.mxu0 0.0
  %3669 = vmatpush1.xpose.msra.mxu0 0.0
  %3670 = vmatprep.subr.mxu0 0.0
  %3671 = vmatpush1.xpose.msra.mxu0 0.0
  %3672 = vmatprep.subr.mxu0 0.0
  %3673 = vmatpush1.xpose.msra.mxu0 0.0
  %3674 = vmatprep.subr.mxu0 0.0
  %3675 = vmatpush1.xpose.msra.mxu0 0.0
  %3676 = vmatprep.subr.mxu0 0.0
  %3677 = vmatpush1.xpose.msra.mxu0 0.0
  %3678 = vmatprep.subr.mxu0 0.0
  %3679 = vmatpush1.xpose.msra.mxu0 0.0
  %3680 = vmatprep.subr.mxu0 0.0
  %3681 = vmatpush1.xpose.msra.mxu0 0.0
  %3682 = vmatprep.subr.mxu0 0.0
  %3683 = vmatpush1.xpose.msra.mxu0 0.0
  %3684 = vmatprep.subr.mxu0 0.0
  %3685 = vmatpush1.xpose.msra.mxu0 0.0
  %3686 = vmatprep.subr.mxu0 0.0
  %3687 = vmatpush1.xpose.msra.mxu0 0.0
  %3688 = vmatprep.subr.mxu0 0.0
  %3689 = vmatpush1.xpose.msra.mxu0 0.0
  %3690 = vmatprep.subr.mxu0 0.0
  %3691 = vmatpush1.xpose.msra.mxu0 0.0
  %3692 = vmatprep.subr.mxu0 0.0
  %3693 = vmatpush1.xpose.msra.mxu0 0.0
  %3694 = vmatprep.subr.mxu0 0.0
  %3695 = vmatpush1.xpose.msra.mxu0 0.0
  %3696 = vmatprep.subr.mxu0 0.0
  %3697 = vmatpush1.xpose.msra.mxu0 0.0
  %3698 = vmatprep.subr.mxu0 0.0
  %3699 = vmatpush1.xpose.msra.mxu0 0.0
  %3700 = vmatprep.subr.mxu0 0.0
  %3701 = vmatpush1.xpose.msra.mxu0 0.0
  %3702 = vmatprep.subr.mxu0 0.0
  %3703 = vmatpush1.xpose.msra.mxu0 0.0
  %3704 = vmatprep.subr.mxu0 0.0
  %3705 = vmatpush1.xpose.msra.mxu0 0.0
  %3706 = vmatprep.subr.mxu0 0.0
  %3707 = vmatpush1.xpose.msra.mxu0 0.0
  %3708 = vmatprep.subr.mxu0 0.0
  %3709 = vmatpush1.xpose.msra.mxu0 0.0
  %3710 = vmatprep.subr.mxu0 0.0
  %3711 = vmatpush1.xpose.msra.mxu0 0.0
  %3712 = vmatprep.subr.mxu0 0.0
  %3713 = vmatpush1.xpose.msra.mxu0 0.0
  %3714 = vmatprep.subr.mxu0 0.0
  %3715 = vmatpush1.xpose.msra.mxu0 0.0
  %3716 = vmatprep.subr.mxu0 0.0
  %3717 = vmatpush1.xpose.msra.mxu0 0.0
  %3718 = vmatprep.subr.mxu0 0.0
  %3719 = vmatpush1.xpose.msra.mxu0 0.0
  %3720 = vmatprep.subr.mxu0 0.0
  %3721 = vmatpush1.xpose.msra.mxu0 0.0
  %3722 = vmatprep.subr.mxu0 0.0
  %3723 = vmatpush1.xpose.msra.mxu0 0.0
  %3724 = vmatprep.subr.mxu0 0.0
  %3725 = vmatpush1.xpose.msra.mxu0 0.0
  %3726 = vmatprep.subr.mxu0 0.0
  %3727 = vmatpush1.xpose.msra.mxu0 0.0
  %3728 = vmatprep.mubr.f32.mxu0 0.0
  %3729 = vmatmul.mubr.f32.gmra.mrb[0].mxu0 %v3659
  %v3730 = vpop.f32.mrb[0].mxu0
  %v3731 = vadd.f32 0.0, %v3730
  %v3732 = vpop.f32.mrb[0].mxu0
  %3733 = vdwg.mxu0
  %v3735 = vsel %vm2593, %v2576, 0
  %v3738 = vsel %vm2593, %v2592, 0
  %3740 = vmatprep.subr.mxu0 0.0
  %3741 = vmatpush1.xpose.msra.mxu0 %v3738
  %3742 = vmatprep.subr.mxu0 0.0
  %3743 = vmatpush1.xpose.msra.mxu0 0.0
  %3744 = vmatprep.subr.mxu0 0.0
  %3745 = vmatpush1.xpose.msra.mxu0 0.0
  %3746 = vmatprep.subr.mxu0 0.0
  %3747 = vmatpush1.xpose.msra.mxu0 0.0
  %3748 = vmatprep.subr.mxu0 0.0
  %3749 = vmatpush1.xpose.msra.mxu0 0.0
  %3750 = vmatprep.subr.mxu0 0.0
  %3751 = vmatpush1.xpose.msra.mxu0 0.0
  %3752 = vmatprep.subr.mxu0 0.0
  %3753 = vmatpush1.xpose.msra.mxu0 0.0
  %3754 = vmatprep.subr.mxu0 0.0
  %3755 = vmatpush1.xpose.msra.mxu0 0.0
  %3756 = vmatprep.subr.mxu0 0.0
  %3757 = vmatpush1.xpose.msra.mxu0 0.0
  %3758 = vmatprep.subr.mxu0 0.0
  %3759 = vmatpush1.xpose.msra.mxu0 0.0
  %3760 = vmatprep.subr.mxu0 0.0
  %3761 = vmatpush1.xpose.msra.mxu0 0.0
  %3762 = vmatprep.subr.mxu0 0.0
  %3763 = vmatpush1.xpose.msra.mxu0 0.0
  %3764 = vmatprep.subr.mxu0 0.0
  %3765 = vmatpush1.xpose.msra.mxu0 0.0
  %3766 = vmatprep.subr.mxu0 0.0
  %3767 = vmatpush1.xpose.msra.mxu0 0.0
  %3768 = vmatprep.subr.mxu0 0.0
  %3769 = vmatpush1.xpose.msra.mxu0 0.0
  %3770 = vmatprep.subr.mxu0 0.0
  %3771 = vmatpush1.xpose.msra.mxu0 0.0
  %3772 = vmatprep.subr.mxu0 0.0
  %3773 = vmatpush1.xpose.msra.mxu0 0.0
  %3774 = vmatprep.subr.mxu0 0.0
  %3775 = vmatpush1.xpose.msra.mxu0 0.0
  %3776 = vmatprep.subr.mxu0 0.0
  %3777 = vmatpush1.xpose.msra.mxu0 0.0
  %3778 = vmatprep.subr.mxu0 0.0
  %3779 = vmatpush1.xpose.msra.mxu0 0.0
  %3780 = vmatprep.subr.mxu0 0.0
  %3781 = vmatpush1.xpose.msra.mxu0 0.0
  %3782 = vmatprep.subr.mxu0 0.0
  %3783 = vmatpush1.xpose.msra.mxu0 0.0
  %3784 = vmatprep.subr.mxu0 0.0
  %3785 = vmatpush1.xpose.msra.mxu0 0.0
  %3786 = vmatprep.subr.mxu0 0.0
  %3787 = vmatpush1.xpose.msra.mxu0 0.0
  %3788 = vmatprep.subr.mxu0 0.0
  %3789 = vmatpush1.xpose.msra.mxu0 0.0
  %3790 = vmatprep.subr.mxu0 0.0
  %3791 = vmatpush1.xpose.msra.mxu0 0.0
  %3792 = vmatprep.subr.mxu0 0.0
  %3793 = vmatpush1.xpose.msra.mxu0 0.0
  %3794 = vmatprep.subr.mxu0 0.0
  %3795 = vmatpush1.xpose.msra.mxu0 0.0
  %3796 = vmatprep.subr.mxu0 0.0
  %3797 = vmatpush1.xpose.msra.mxu0 0.0
  %3798 = vmatprep.subr.mxu0 0.0
  %3799 = vmatpush1.xpose.msra.mxu0 0.0
  %3800 = vmatprep.subr.mxu0 0.0
  %3801 = vmatpush1.xpose.msra.mxu0 0.0
  %3802 = vmatprep.subr.mxu0 0.0
  %3803 = vmatpush1.xpose.msra.mxu0 0.0
  %3804 = vmatprep.mubr.f32.mxu0 0.0
  %3805 = vmatmul.mubr.f32.gmra.mrb[0].mxu0 %v3735
  %v3806 = vpop.f32.mrb[0].mxu0
  %v3807 = vadd.f32 0.0, %v3806
  %v3808 = vpop.f32.mrb[0].mxu0
  %3809 = vdwg.mxu0
  %vm3810 = vcmask 64512
  %v3811 = vsel %vm3810, %v2667, -inf
  %3812 = vmax.xlane.f32.xlu0 %v3811
  %v3813 = vpop.xlane.xlu0 %3812
  %v3814 = vsel %vm3810, %v2743, -inf
  %3815 = vmax.xlane.f32.xlu0 %v3814
  %v3816 = vpop.xlane.xlu0 %3815
  %v3817 = vsel %vm3810, %v2819, -inf
  %3818 = vmax.xlane.f32.xlu0 %v3817
  %v3819 = vpop.xlane.xlu0 %3818
  %v3820 = vsel %vm3810, %v2895, -inf
  %3821 = vmax.xlane.f32.xlu0 %v3820
  %v3822 = vpop.xlane.xlu0 %3821
  %v3823 = vsel %vm3810, %v2971, -inf
  %3824 = vmax.xlane.f32.xlu0 %v3823
  %v3825 = vpop.xlane.xlu0 %3824
  %v3826 = vsel %vm3810, %v3047, -inf
  %3827 = vmax.xlane.f32.xlu0 %v3826
  %v3828 = vpop.xlane.xlu0 %3827
  %v3829 = vsel %vm3810, %v3123, -inf
  %3830 = vmax.xlane.f32.xlu0 %v3829
  %v3831 = vpop.xlane.xlu0 %3830
  %v3832 = vsel %vm3810, %v3199, -inf
  %3833 = vmax.xlane.f32.xlu0 %v3832
  %v3834 = vpop.xlane.xlu0 %3833
  %v3835 = vsel %vm3810, %v3275, -inf
  %3836 = vmax.xlane.f32.xlu0 %v3835
  %v3837 = vpop.xlane.xlu0 %3836
  %v3838 = vsel %vm3810, %v3351, -inf
  %3839 = vmax.xlane.f32.xlu0 %v3838
  %v3840 = vpop.xlane.xlu0 %3839
  %v3841 = vsel %vm3810, %v3427, -inf
  %3842 = vmax.xlane.f32.xlu0 %v3841
  %v3843 = vpop.xlane.xlu0 %3842
  %v3844 = vsel %vm3810, %v3503, -inf
  %3845 = vmax.xlane.f32.xlu0 %v3844
  %v3846 = vpop.xlane.xlu0 %3845
  %v3847 = vsel %vm3810, %v3579, -inf
  %3848 = vmax.xlane.f32.xlu0 %v3847
  %v3849 = vpop.xlane.xlu0 %3848
  %v3850 = vsel %vm3810, %v3655, -inf
  %3851 = vmax.xlane.f32.xlu0 %v3850
  %v3852 = vpop.xlane.xlu0 %3851
  %v3853 = vsel %vm3810, %v3731, -inf
  %3854 = vmax.xlane.f32.xlu0 %v3853
  %v3855 = vpop.xlane.xlu0 %3854
  %v3856 = vsel %vm3810, %v3807, -inf
  %3857 = vmax.xlane.f32.xlu0 %v3856
  %v3858 = vpop.xlane.xlu0 %3857
  %v3859 = vsub.f32 %v2667, %v3813
  %v3860 = vsub.f32 %v2743, %v3816
  %v3861 = vsub.f32 %v2819, %v3819
  %v3862 = vsub.f32 %v2895, %v3822
  %v3863 = vsub.f32 %v2971, %v3825
  %v3864 = vsub.f32 %v3047, %v3828
  %v3865 = vsub.f32 %v3123, %v3831
  %v3866 = vsub.f32 %v3199, %v3834
  %v3867 = vsub.f32 %v3275, %v3837
  %v3868 = vsub.f32 %v3351, %v3840
  %v3869 = vsub.f32 %v3427, %v3843
  %v3870 = vsub.f32 %v3503, %v3846
  %v3871 = vsub.f32 %v3579, %v3849
  %v3872 = vsub.f32 %v3655, %v3852
  %v3873 = vsub.f32 %v3731, %v3855
  %v3874 = vsub.f32 %v3807, %v3858
  %v3875 = vmul.f32 %v3859, 1.442695
  %v3876 = vpow.pop %v3875
  %v3877 = vmul.f32 %v3860, 1.442695
  %v3878 = vpow.pop %v3877
  %v3879 = vmul.f32 %v3861, 1.442695
  %v3880 = vpow.pop %v3879
  %v3881 = vmul.f32 %v3862, 1.442695
  %v3882 = vpow.pop %v3881
  %v3883 = vmul.f32 %v3863, 1.442695
  %v3884 = vpow.pop %v3883
  %v3885 = vmul.f32 %v3864, 1.442695
  %v3886 = vpow.pop %v3885
  %v3887 = vmul.f32 %v3865, 1.442695
  %v3888 = vpow.pop %v3887
  %v3889 = vmul.f32 %v3866, 1.442695
  %v3890 = vpow.pop %v3889
  %v3891 = vmul.f32 %v3867, 1.442695
  %v3892 = vpow.pop %v3891
  %v3893 = vmul.f32 %v3868, 1.442695
  %v3894 = vpow.pop %v3893
  %v3895 = vmul.f32 %v3869, 1.442695
  %v3896 = vpow.pop %v3895
  %v3897 = vmul.f32 %v3870, 1.442695
  %v3898 = vpow.pop %v3897
  %v3899 = vmul.f32 %v3871, 1.442695
  %v3900 = vpow.pop %v3899
  %v3901 = vmul.f32 %v3872, 1.442695
  %v3902 = vpow.pop %v3901
  %v3903 = vmul.f32 %v3873, 1.442695
  %v3904 = vpow.pop %v3903
  %v3905 = vmul.f32 %v3874, 1.442695
  %v3906 = vpow.pop %v3905
  %v3907 = vsel %vm3810, %v3876, 0.0
  %3908 = vadd.xlane.f32.xlu0 %v3907
  %v3909 = vpop.xlane.xlu0 %3908
  %v3910 = vsel %vm3810, %v3878, 0.0
  %3911 = vadd.xlane.f32.xlu0 %v3910
  %v3912 = vpop.xlane.xlu0 %3911
  %v3913 = vsel %vm3810, %v3880, 0.0
  %3914 = vadd.xlane.f32.xlu0 %v3913
  %v3915 = vpop.xlane.xlu0 %3914
  %v3916 = vsel %vm3810, %v3882, 0.0
  %3917 = vadd.xlane.f32.xlu0 %v3916
  %v3918 = vpop.xlane.xlu0 %3917
  %v3919 = vsel %vm3810, %v3884, 0.0
  %3920 = vadd.xlane.f32.xlu0 %v3919
  %v3921 = vpop.xlane.xlu0 %3920
  %v3922 = vsel %vm3810, %v3886, 0.0
  %3923 = vadd.xlane.f32.xlu0 %v3922
  %v3924 = vpop.xlane.xlu0 %3923
  %v3925 = vsel %vm3810, %v3888, 0.0
  %3926 = vadd.xlane.f32.xlu0 %v3925
  %v3927 = vpop.xlane.xlu0 %3926
  %v3928 = vsel %vm3810, %v3890, 0.0
  %3929 = vadd.xlane.f32.xlu0 %v3928
  %v3930 = vpop.xlane.xlu0 %3929
  %v3931 = vsel %vm3810, %v3892, 0.0
  %3932 = vadd.xlane.f32.xlu0 %v3931
  %v3933 = vpop.xlane.xlu0 %3932
  %v3934 = vsel %vm3810, %v3894, 0.0
  %3935 = vadd.xlane.f32.xlu0 %v3934
  %v3936 = vpop.xlane.xlu0 %3935
  %v3937 = vsel %vm3810, %v3896, 0.0
  %3938 = vadd.xlane.f32.xlu0 %v3937
  %v3939 = vpop.xlane.xlu0 %3938
  %v3940 = vsel %vm3810, %v3898, 0.0
  %3941 = vadd.xlane.f32.xlu0 %v3940
  %v3942 = vpop.xlane.xlu0 %3941
  %v3943 = vsel %vm3810, %v3900, 0.0
  %3944 = vadd.xlane.f32.xlu0 %v3943
  %v3945 = vpop.xlane.xlu0 %3944
  %v3946 = vsel %vm3810, %v3902, 0.0
  %3947 = vadd.xlane.f32.xlu0 %v3946
  %v3948 = vpop.xlane.xlu0 %3947
  %v3949 = vsel %vm3810, %v3904, 0.0
  %3950 = vadd.xlane.f32.xlu0 %v3949
  %v3951 = vpop.xlane.xlu0 %3950
  %v3952 = vsel %vm3810, %v3906, 0.0
  %3953 = vadd.xlane.f32.xlu0 %v3952
  %v3954 = vpop.xlane.xlu0 %3953
  %v3955 = vrcp.pop %v3909
  %v3956 = vmul.f32 %v3876, %v3955
  %v3957 = vrcp.pop %v3912
  %v3958 = vmul.f32 %v3878, %v3957
  %v3959 = vrcp.pop %v3915
  %v3960 = vmul.f32 %v3880, %v3959
  %v3961 = vrcp.pop %v3918
  %v3962 = vmul.f32 %v3882, %v3961
  %v3963 = vrcp.pop %v3921
  %v3964 = vmul.f32 %v3884, %v3963
  %v3965 = vrcp.pop %v3924
  %v3966 = vmul.f32 %v3886, %v3965
  %v3967 = vrcp.pop %v3927
  %v3968 = vmul.f32 %v3888, %v3967
  %v3969 = vrcp.pop %v3930
  %v3970 = vmul.f32 %v3890, %v3969
  %v3971 = vrcp.pop %v3933
  %v3972 = vmul.f32 %v3892, %v3971
  %v3973 = vrcp.pop %v3936
  %v3974 = vmul.f32 %v3894, %v3973
  %v3975 = vrcp.pop %v3939
  %v3976 = vmul.f32 %v3896, %v3975
  %v3977 = vrcp.pop %v3942
  %v3978 = vmul.f32 %v3898, %v3977
  %v3979 = vrcp.pop %v3945
  %v3980 = vmul.f32 %v3900, %v3979
  %v3981 = vrcp.pop %v3948
  %v3982 = vmul.f32 %v3902, %v3981
  %v3983 = vrcp.pop %v3951
  %v3984 = vmul.f32 %v3904, %v3983
  %v3985 = vrcp.pop %v3954
  %v3986 = vmul.f32 %v3906, %v3985
  %3987 = vst.msk [vmem:[%s5] sm:$0xff] %vm3810, %v3956
  %3988 = vst.msk [vmem:[%s5 + $0x8] sm:$0xff] %vm3810, %v3958
  %3989 = vst.msk [vmem:[%s5 + $0x10] sm:$0xff] %vm3810, %v3960
  %3990 = vst.msk [vmem:[%s5 + $0x18] sm:$0xff] %vm3810, %v3962
  %3991 = vst.msk [vmem:[%s5 + $0x20] sm:$0xff] %vm3810, %v3964
  %3992 = vst.msk [vmem:[%s5 + $0x28] sm:$0xff] %vm3810, %v3966
  %3993 = vst.msk [vmem:[%s5 + $0x30] sm:$0xff] %vm3810, %v3968
  %3994 = vst.msk [vmem:[%s5 + $0x38] sm:$0xff] %vm3810, %v3970
  %3995 = vst.msk [vmem:[%s5 + $0x40] sm:$0xff] %vm3810, %v3972
  %3996 = vst.msk [vmem:[%s5 + $0x48] sm:$0xff] %vm3810, %v3974
  %3997 = vst.msk [vmem:[%s5 + $0x50] sm:$0xff] %vm3810, %v3976
  %3998 = vst.msk [vmem:[%s5 + $0x58] sm:$0xff] %vm3810, %v3978
  %3999 = vst.msk [vmem:[%s5 + $0x60] sm:$0xff] %vm3810, %v3980
  %4000 = vst.msk [vmem:[%s5 + $0x68] sm:$0xff] %vm3810, %v3982
  %4001 = vst.msk [vmem:[%s5 + $0x70] sm:$0xff] %vm3810, %v3984
  %4002 = vst.msk [vmem:[%s5 + $0x78] sm:$0xff] %vm3810, %v3986
  // Predicated region
  $region22: #{tpu_custom_call.1} parent=0 // pred_check
    _
  $region23: #{tpu_custom_call.1} parent=0 // pred_check_branch
    %4004 = sbr.rel (0) target = $region25
  $region24: #{tpu_custom_call.1} parent=0 // pred_region
    _
  $region25: #{tpu_custom_call.1} parent=0 // pred_fallthru
    _
  // Predicated region
  $region26: #{tpu_custom_call.1} parent=0 // pred_check
    _
  $region27: #{tpu_custom_call.1} parent=0 // pred_check_branch
    %4006 = sbr.rel (0) target = $region29
  $region28: #{tpu_custom_call.1} parent=0 // pred_region
    _
  $region29: #{tpu_custom_call.1} parent=0 // pred_fallthru
    _

</llo_original>
